<compile_context>
chip_gen: v5e
topology: v5e:2x2
jax: 0.10.0
libtpu: 0.0.40
codegen_flags: <defaults>
</compile_context>

<pallas_src>
import functools

import jax
import jax.numpy as jnp
from jax import lax
from jax.experimental import pallas as pl
from jax.experimental.pallas import tpu as pltpu


def _round_up(x, m):
    return ((x + m - 1) // m) * m


def _vmem_limit(n_bytes):
    # resident set + double-buffered streams with headroom; never below the 32 MiB scoped
    # default and never above v7x's 64 MiB physical per-core VMEM.
    return int(min(64 << 20, max(2 * n_bytes + (2 << 20), 32 << 20)))


# ----------------------- encoder: conv-as-matmul + hoisted attention projection -----------------------
def _encoder_kernel(p_ref, wc_ref, bc_ref, wf_ref, feat_ref, projf_ref):
    # (tile_rows, C*K*K) @ (C*K*K, D_enc) + bias, ReLU; also proj_f = feat @ wf (hoisted).
    feat = jnp.maximum(
        jnp.dot(p_ref[...], wc_ref[...], preferred_element_type=jnp.float32) + bc_ref[...],
        0.0,
    )
    feat_ref[...] = feat.astype(feat_ref.dtype)
    projf_ref[...] = jnp.dot(feat.astype(jnp.bfloat16), wf_ref[...],
                             preferred_element_type=jnp.float32).astype(projf_ref.dtype)


def encoder_forward(imgs, w_conv, b_conv, wf, *, row_tile=512):
    B, C, H, W = imgs.shape
    K = 3
    # TODO(synk): this still materializes a K*K=9x-duplicated im2col stream in HBM; forming
    # patches in-kernel from image-row tiles (shifted loads / pltpu.roll) would remove that
    # round trip entirely.
    patches = lax.conv_general_dilated_patches(
        imgs, filter_shape=(K, K), window_strides=(1, 1), padding="SAME",
        dimension_numbers=("NCHW", "OIHW", "NHWC"),
    )
    cpatch = C * K * K
    n_rows = B * H * W
    # bf16 patch stream: halves the dominant (9x-duplicated) HBM read.
    patches = patches.reshape(n_rows, cpatch).astype(jnp.bfloat16)

    d_enc = w_conv.shape[1]
    a_dim = wf.shape[1]
    n_tiles = pl.cdiv(n_rows, row_tile)
    n_pad = n_tiles * row_tile
    if n_pad != n_rows:  # masked tail via padding (no divisibility assert)
        patches = jnp.pad(patches, ((0, n_pad - n_rows), (0, 0)))

    need = (2 * row_tile * cpatch * 2                       # patches, double-buffered
            + cpatch * d_enc * 2 + d_enc * 4 + d_enc * a_dim * 2   # resident weights (Buffered(1))
            + 2 * row_tile * d_enc * 2 + 2 * row_tile * a_dim * 2)  # outputs, double-buffered

    feat, projf = pl.pallas_call(
        _encoder_kernel,
        out_shape=(
            jax.ShapeDtypeStruct((n_pad, d_enc), jnp.bfloat16),
            jax.ShapeDtypeStruct((n_pad, a_dim), jnp.bfloat16),
        ),
        grid=(n_tiles,),
        in_specs=[
            pl.BlockSpec((row_tile, cpatch), lambda i: (i, 0)),
            pl.BlockSpec((cpatch, d_enc), lambda i: (0, 0), pipeline_mode=pl.Buffered(1)),
            pl.BlockSpec((1, d_enc), lambda i: (0, 0), pipeline_mode=pl.Buffered(1)),
            pl.BlockSpec((d_enc, a_dim), lambda i: (0, 0), pipeline_mode=pl.Buffered(1)),
        ],
        out_specs=[
            pl.BlockSpec((row_tile, d_enc), lambda i: (i, 0)),
            pl.BlockSpec((row_tile, a_dim), lambda i: (i, 0)),
        ],
        compiler_params=pltpu.CompilerParams(
            dimension_semantics=("parallel",),
            vmem_limit_bytes=_vmem_limit(need)),
    )(patches, w_conv, b_conv, wf)

    feat = feat[:n_rows].reshape(B, H * W, d_enc)
    projf = projf[:n_rows].reshape(B, H * W, a_dim)
    return feat, projf


# ----------------------- decoder.init_hiddens (P-tiled mean-pool + tanh linear) -----------------------
def _init_hidden_kernel(feat_ref, w_ref, b_ref, h0_ref, acc_ref, *, inv_p):
    j = pl.program_id(0)

    @pl.when(j == 0)
    def _():
        acc_ref[...] = jnp.zeros_like(acc_ref)

    acc_ref[...] += jnp.sum(feat_ref[...].astype(jnp.float32), axis=1)  # (B, D_enc)

    @pl.when(j == pl.num_programs(0) - 1)
    def _():
        fmean = acc_ref[...] * inv_p
        h0_ref[...] = jnp.tanh(
            jnp.dot(fmean.astype(jnp.bfloat16), w_ref[...],
                    preferred_element_type=jnp.float32) + b_ref[...])


def init_hiddens(features, w_init, b_init, *, p_tile=512):
    B, P, D = features.shape
    hd = w_init.shape[1]
    tp = P if P <= p_tile else p_tile
    n_p = pl.cdiv(P, tp)
    p_pad = n_p * tp
    feats = features
    if p_pad != P:
        feats = jnp.pad(features, ((0, 0), (0, p_pad - P), (0, 0)))  # zero rows don't change sum

    need = 2 * B * tp * D * 2 + D * hd * 2 + hd * 4 + 2 * B * hd * 4 + B * D * 4

    return pl.pallas_call(
        functools.partial(_init_hidden_kernel, inv_p=1.0 / P),
        out_shape=jax.ShapeDtypeStruct((B, hd), jnp.float32),
        grid=(n_p,),
        in_specs=[
            pl.BlockSpec((B, tp, D), lambda j: (0, j, 0)),
            pl.BlockSpec((D, hd), lambda j: (0, 0), pipeline_mode=pl.Buffered(1)),
            pl.BlockSpec((1, hd), lambda j: (0, 0), pipeline_mode=pl.Buffered(1)),
        ],
        out_specs=pl.BlockSpec((B, hd), lambda j: (0, 0)),
        scratch_shapes=[pltpu.VMEM((B, D), jnp.float32)],
        compiler_params=pltpu.CompilerParams(
            dimension_semantics=("arbitrary",),
            vmem_limit_bytes=_vmem_limit(need)),
    )(feats, w_init, b_init)


# ----------------------- fused decoder: whole teacher-forced time loop in one kernel -----------------
def _decoder_seq_kernel(
    gx_emb_ref,   # (1, bt, 3*hd)  f32  streamed per t (precomputed emb @ [wz|wr|wn])
    h0_ref,       # (bt, hd)       f32  resident
    feat_ref,     # (bt, P, D_enc) bf16 resident
    projf_ref,    # (bt, P, A)     bf16 resident (hoisted feat @ wf)
    wh_ref,       # (hd, A)        bf16
    vatt_ref,     # (1, A)         f32
    wc_ref,       # (D_enc, 3*hd)  bf16 fused [wz|wr|wn] context rows
    ug_ref,       # (hd, 3*hd)     bf16 fused [uz|ur|un]
    bg_ref,       # (1, 3*hd)      f32  fused [bz|br|bn]
    h_out_ref,    # (1, bt, hd)    bf16 output per t (vocab head applied later, batched)
    h_scr,        # (bt, hd)       f32  VMEM scratch carrying the hidden state
):
    t = pl.program_id(1)

    @pl.when(t == 0)
    def _():
        h_scr[...] = h0_ref[...]

    h = h_scr[...]                       # (bt, hd) f32
    h_b = h.astype(jnp.bfloat16)
    hd = h.shape[1]

    # --- Bahdanau attention (P stays on the lane axis of the scores) ---
    proj_h = jnp.dot(h_b, wh_ref[...], preferred_element_type=jnp.float32)        # (bt, A)
    # TODO(synk): on v6e/v7x this tanh + reduce can run in bf16 (bf16 VPU/EUP); kept f32 for v5e.
    e = jnp.tanh(projf_ref[...].astype(jnp.float32) + proj_h[:, None, :])          # (bt, P, A)
    scores = jnp.sum(e * vatt_ref[...], axis=-1)                                   # (bt, P)
    scores = scores - jnp.max(scores, axis=-1, keepdims=True)
    expo = jnp.exp(scores)
    alpha = expo * pl.reciprocal(jnp.sum(expo, axis=-1, keepdims=True), approx=True)
    context = jnp.einsum(
        "bqp,bpd->bqd", alpha[:, None, :].astype(jnp.bfloat16), feat_ref[...],
        preferred_element_type=jnp.float32,
    )[:, 0, :]                                                                      # (bt, D_enc)

    # --- GRU cell: fused gate matmuls; embedding gate term precomputed outside the kernel ---
    # TODO(synk): torch GRUCell has separate b_ih / b_hh (with b_hn inside r*(h@U_n + b_hn));
    # a single fused input-side bias is modelled here.
    gx = (gx_emb_ref[0]
          + jnp.dot(context.astype(jnp.bfloat16), wc_ref[...],
                    preferred_element_type=jnp.float32)
          + bg_ref[...])                                                            # (bt, 3*hd)
    gh = jnp.dot(h_b, ug_ref[...], preferred_element_type=jnp.float32)              # (bt, 3*hd)
    z = jax.nn.sigmoid(gx[:, :hd] + gh[:, :hd])
    r = jax.nn.sigmoid(gx[:, hd:2 * hd] + gh[:, hd:2 * hd])
    n = jnp.tanh(gx[:, 2 * hd:] + r * gh[:, 2 * hd:])
    h_new = (1.0 - z) * n + z * h
    h_scr[...] = h_new
    h_out_ref[0] = h_new.astype(h_out_ref.dtype)


def decoder_sequence(gx_emb, h0, features, proj_f, p):
    T, B, G3 = gx_emb.shape
    _, P, D = features.shape
    A = proj_f.shape[-1]
    hd = h0.shape[1]

    # Split the batch across TensorCores when it tiles cleanly (v7x has 2 TCs); neutral otherwise.
    bt = B // 2 if (B % 16 == 0) else B
    nb = B // bt

    resident = (bt * P * D * 2 + bt * P * A * 2 + hd * A * 2 + A * 4
                + D * G3 * 2 + hd * G3 * 2 + G3 * 4 + bt * hd * 4)
    streamed = 2 * bt * G3 * 4 + 2 * bt * hd * 2 + bt * hd * 4
    interm = bt * P * A * 4  # f32 attention intermediate headroom
    need = resident + streamed + interm

    const = dict(pipeline_mode=pl.Buffered(1))   # resident blocks: single buffer

    return pl.pallas_call(
        _decoder_seq_kernel,
        out_shape=jax.ShapeDtypeStruct((T, B, hd), jnp.bfloat16),
        grid=(nb, T),
        in_specs=[
            pl.BlockSpec((1, bt, G3), lambda b, t: (t, b, 0)),                 # streamed per step
            pl.BlockSpec((bt, hd), lambda b, t: (b, 0), **const),              # h0
            pl.BlockSpec((bt, P, D), lambda b, t: (b, 0, 0), **const),         # features
            pl.BlockSpec((bt, P, A), lambda b, t: (b, 0, 0), **const),         # proj_f
            pl.BlockSpec((hd, A), lambda b, t: (0, 0), **const),               # wh
            pl.BlockSpec((1, A), lambda b, t: (0, 0), **const),                # v_att
            pl.BlockSpec((D, G3), lambda b, t: (0, 0), **const),               # w_c
            pl.BlockSpec((hd, G3), lambda b, t: (0, 0), **const),              # u_g
            pl.BlockSpec((1, G3), lambda b, t: (0, 0), **const),               # b_g
        ],
        out_specs=pl.BlockSpec((1, bt, hd), lambda b, t: (t, b, 0)),
        scratch_shapes=[pltpu.VMEM((bt, hd), jnp.float32)],
        compiler_params=pltpu.CompilerParams(
            dimension_semantics=("parallel", "arbitrary"),
            vmem_limit_bytes=_vmem_limit(need)),
    )(gx_emb, h0, features, proj_f,
      p["wh"], p["v_att"], p["w_c"], p["u_g"], p["b_g"])


# ----------------------- deferred vocab head: batched (T*B, hd) @ (hd, V) -----------------------
def _head_kernel(h_ref, wo_ref, bo_ref, out_ref):
    out_ref[...] = (jnp.dot(h_ref[...], wo_ref[...], preferred_element_type=jnp.float32)
                    + bo_ref[...])


def vocab_head(h_seq, wo, bo):
    T, B, hd = h_seq.shape
    V = wo.shape[1]
    rows = T * B
    h2 = h_seq.reshape(rows, hd)

    rt = min(512, _round_up(rows, 8))
    n_r = pl.cdiv(rows, rt)
    rows_pad = n_r * rt
    if rows_pad != rows:
        h2 = jnp.pad(h2, ((0, rows_pad - rows), (0, 0)))

    if V <= 512:
        vt, v_pad = V, V
        wo_p, bo_p = wo, bo
    else:
        vt = 512
        v_pad = _round_up(V, vt)
        wo_p = jnp.pad(wo, ((0, 0), (0, v_pad - V)))
        bo_p = jnp.pad(bo, ((0, 0), (0, v_pad - V)))
    n_v = v_pad // vt

    need = 2 * rt * hd * 2 + 2 * hd * vt * 2 + 2 * vt * 4 + 2 * rt * vt * 4

    logits = pl.pallas_call(
        _head_kernel,
        out_shape=jax.ShapeDtypeStruct((rows_pad, v_pad), jnp.float32),
        grid=(n_r, n_v),
        in_specs=[
            pl.BlockSpec((rt, hd), lambda i, j: (i, 0)),
            pl.BlockSpec((hd, vt), lambda i, j: (0, j)),
            pl.BlockSpec((1, vt), lambda i, j: (0, j)),
        ],
        out_specs=pl.BlockSpec((rt, vt), lambda i, j: (i, j)),
        compiler_params=pltpu.CompilerParams(
            dimension_semantics=("parallel", "parallel"),
            vmem_limit_bytes=_vmem_limit(need)),
    )(h2, wo_p, bo_p)

    return logits[:rows, :V].reshape(T, B, V)


# ----------------------- CNNtoRNN.forward -----------------------
def cnn_to_rnn_forward(imgs, captions, params, vocab_size):
    B, L = captions.shape
    T = L - 1
    features, proj_f = encoder_forward(imgs, params["w_conv"], params["b_conv"], params["wf"])
    h0 = init_hiddens(features, params["w_init"], params["b_init"])
    hd = h0.shape[1]

    # TODO(synk): host-side random() teacher-forcing coin flip has no in-graph equivalent;
    # with default teacher_force_ratio=1.0 the ground-truth token is always fed (implemented here).
    emb_seq = jnp.transpose(params["emb"][captions[:, :T]], (1, 0, 2))        # (T, B, E) bf16
    E = emb_seq.shape[-1]
    # One MXU-saturating matmul for the embedding gate term instead of T tiny M=B matmuls.
    gx_emb = jnp.dot(emb_seq.reshape(T * B, E), params["w_e"],
                     preferred_element_type=jnp.float32).reshape(T, B, 3 * hd)

    h_seq = decoder_sequence(gx_emb, h0, features, proj_f, params)            # (T, B, hd)
    logits_seq = vocab_head(h_seq, params["wo"], params["bo"])                # (T, B, V)

    outputs = jnp.concatenate(
        [jnp.zeros((1, B, vocab_size), jnp.float32), logits_seq], axis=0
    )  # outputs[0] stays zero, like the torch module
    return outputs


# ----------------------- deterministic parameter init -----------------------
def init_params(key, *, c_in, k, d_enc, e, hd, a, v):
    ks = jax.random.split(key, 10)

    def rnd(kk, shape, scale=0.1, dtype=jnp.bfloat16):
        return (scale * jax.random.normal(kk, shape)).astype(dtype)

    return dict(
        w_conv=rnd(ks[0], (c_in * k * k, d_enc)),
        b_conv=jnp.zeros((1, d_enc), jnp.float32),
        w_init=rnd(ks[1], (d_enc, hd)),
        b_init=jnp.zeros((1, hd), jnp.float32),
        emb=rnd(ks[2], (v, e)),
        wf=rnd(ks[3], (d_enc, a)),
        wh=rnd(ks[4], (hd, a)),
        v_att=rnd(ks[5], (1, a), dtype=jnp.float32),
        w_e=rnd(ks[6], (e, 3 * hd)),       # fused [wz|wr|wn], embedding-input rows
        w_c=rnd(ks[7], (d_enc, 3 * hd)),   # fused [wz|wr|wn], context-input rows
        u_g=rnd(ks[8], (hd, 3 * hd)),      # fused [uz|ur|un]
        b_g=jnp.zeros((1, 3 * hd), jnp.float32),
        wo=rnd(ks[9], (hd, v)),
        bo=jnp.zeros((1, v), jnp.float32),
    )


if __name__ == "__main__":
    key = jax.random.PRNGKey(0)
    k_params, k_img, k_cap = jax.random.split(key, 3)

    B, C, H, W = 2, 4, 16, 16
    L, V = 8, 64
    D_ENC, E, HD, A = 32, 32, 32, 32

    params = init_params(k_params, c_in=C, k=3, d_enc=D_ENC, e=E, hd=HD, a=A, v=V)
    imgs = jax.random.normal(k_img, (B, C, H, W), dtype=jnp.float32)
    captions = jax.random.randint(k_cap, (B, L), 0, V, dtype=jnp.int32)

    fwd = jax.jit(functools.partial(cnn_to_rnn_forward, vocab_size=V))
    outputs = fwd(imgs, captions, params)
    jax.block_until_ready(outputs)
    assert outputs.shape == (L, B, V), outputs.shape
    print("KERNEL_OK")
</pallas_src>

<mosaic_0001>
module attributes {stable_mosaic.version = 11 : i64} {
  func.func @_encoder_kernel(%arg0: i32, %arg1: memref<512x36xbf16, #tpu.memory_space<vmem>>, %arg2: memref<36x32xbf16, #tpu.memory_space<vmem>>, %arg3: memref<1x32xf32, #tpu.memory_space<vmem>>, %arg4: memref<32x32xbf16, #tpu.memory_space<vmem>>, %arg5: memref<512x32xbf16, #tpu.memory_space<vmem>>, %arg6: memref<512x32xbf16, #tpu.memory_space<vmem>>) attributes {dimension_semantics = [#tpu.dimension_semantics<parallel>], iteration_bounds = array<i64: 1>, scalar_prefetch = 0 : i64, scratch_operands = 0 : i64, tpu.core_type = #tpu.core_type<tc>, window_params = [{transform_indices = @transform_0, window_bounds = array<i64: 512, 36>}, {pipeline_mode = #tpu.pipeline_mode<synchronous>, transform_indices = @transform_1, window_bounds = array<i64: 36, 32>}, {pipeline_mode = #tpu.pipeline_mode<synchronous>, transform_indices = @transform_2, window_bounds = array<i64: 1, 32>}, {pipeline_mode = #tpu.pipeline_mode<synchronous>, transform_indices = @transform_3, window_bounds = array<i64: 32, 32>}, {transform_indices = @transform_4, window_bounds = array<i64: 512, 32>}, {transform_indices = @transform_5, window_bounds = array<i64: 512, 32>}]} {
    %c0 = arith.constant 0 : index
    %c0_0 = arith.constant 0 : index
    %0 = vector.load %arg1[%c0, %c0_0] : memref<512x36xbf16, #tpu.memory_space<vmem>>, vector<512x36xbf16>
    %c0_1 = arith.constant 0 : index
    %c0_2 = arith.constant 0 : index
    %1 = vector.load %arg2[%c0_1, %c0_2] : memref<36x32xbf16, #tpu.memory_space<vmem>>, vector<36x32xbf16>
    %cst = arith.constant dense<0.000000e+00> : vector<512x32xf32>
    %2 = tpu.matmul %0, %1, %cst {dimension_numbers = #tpu.dot_dimension_numbers<[1], [0], [0], [1], [0, 0, 1, 1], [], []>} : vector<512x36xbf16>, vector<36x32xbf16>, vector<512x32xf32> -> vector<512x32xf32>
    %c0_3 = arith.constant 0 : index
    %c0_4 = arith.constant 0 : index
    %3 = vector.load %arg3[%c0_3, %c0_4] : memref<1x32xf32, #tpu.memory_space<vmem>>, vector<1x32xf32>
    %4 = vector.broadcast %3 : vector<1x32xf32> to vector<512x32xf32>
    %5 = arith.addf %2, %4 : vector<512x32xf32>
    %cst_5 = arith.constant 0.000000e+00 : f32
    %6 = vector.broadcast %cst_5 : f32 to vector<512x32xf32>
    %7 = arith.maximumf %5, %6 : vector<512x32xf32>
    %8 = arith.truncf %7 : vector<512x32xf32> to vector<512x32xbf16>
    %c0_6 = arith.constant 0 : index
    %c0_7 = arith.constant 0 : index
    %9 = vector.load %arg5[%c0_6, %c0_7] : memref<512x32xbf16, #tpu.memory_space<vmem>>, vector<512x32xbf16>
    tpu.vector_store %arg5[%c0_6, %c0_7], %8 {strides = array<i32>} : memref<512x32xbf16, #tpu.memory_space<vmem>>, vector<512x32xbf16>,
    %10 = arith.truncf %7 : vector<512x32xf32> to vector<512x32xbf16>
    %c0_8 = arith.constant 0 : index
    %c0_9 = arith.constant 0 : index
    %11 = vector.load %arg4[%c0_8, %c0_9] : memref<32x32xbf16, #tpu.memory_space<vmem>>, vector<32x32xbf16>
    %cst_10 = arith.constant dense<0.000000e+00> : vector<512x32xf32>
    %12 = tpu.matmul %10, %11, %cst_10 {dimension_numbers = #tpu.dot_dimension_numbers<[1], [0], [0], [1], [0, 0, 1, 1], [], []>} : vector<512x32xbf16>, vector<32x32xbf16>, vector<512x32xf32> -> vector<512x32xf32>
    %13 = arith.truncf %12 : vector<512x32xf32> to vector<512x32xbf16>
    %c0_11 = arith.constant 0 : index
    %c0_12 = arith.constant 0 : index
    %14 = vector.load %arg6[%c0_11, %c0_12] : memref<512x32xbf16, #tpu.memory_space<vmem>>, vector<512x32xbf16>
    tpu.vector_store %arg6[%c0_11, %c0_12], %13 {strides = array<i32>} : memref<512x32xbf16, #tpu.memory_space<vmem>>, vector<512x32xbf16>,
    return
  }
  func.func @transform_0(%arg0: i32) -> (i32, i32) {
    %c0_i32 = arith.constant 0 : i32
    %c0_i32_0 = arith.constant 0 : i32
    return %arg0, %c0_i32 : i32, i32
  }
  func.func @transform_1(%arg0: i32) -> (i32, i32) {
    %c0_i32 = arith.constant 0 : i32
    %c0_i32_0 = arith.constant 0 : i32
    %c0_i32_1 = arith.constant 0 : i32
    return %c0_i32, %c0_i32_0 : i32, i32
  }
  func.func @transform_2(%arg0: i32) -> (i32, i32) {
    %c0_i32 = arith.constant 0 : i32
    %c0_i32_0 = arith.constant 0 : i32
    %c0_i32_1 = arith.constant 0 : i32
    return %c0_i32, %c0_i32_0 : i32, i32
  }
  func.func @transform_3(%arg0: i32) -> (i32, i32) {
    %c0_i32 = arith.constant 0 : i32
    %c0_i32_0 = arith.constant 0 : i32
    %c0_i32_1 = arith.constant 0 : i32
    return %c0_i32, %c0_i32_0 : i32, i32
  }
  func.func @transform_4(%arg0: i32) -> (i32, i32) {
    %c0_i32 = arith.constant 0 : i32
    %c0_i32_0 = arith.constant 0 : i32
    return %arg0, %c0_i32 : i32, i32
  }
  func.func @transform_5(%arg0: i32) -> (i32, i32) {
    %c0_i32 = arith.constant 0 : i32
    %c0_i32_0 = arith.constant 0 : i32
    return %arg0, %c0_i32 : i32, i32
  }
}

module attributes {stable_mosaic.version = 11 : i64} {
  func.func @_init_hidden_kernel(%arg0: i32, %arg1: memref<2x256x32xbf16, #tpu.memory_space<vmem>>, %arg2: memref<32x32xbf16, #tpu.memory_space<vmem>>, %arg3: memref<1x32xf32, #tpu.memory_space<vmem>>, %arg4: memref<2x32xf32, #tpu.memory_space<vmem>>, %arg5: memref<2x32xf32, #tpu.memory_space<vmem>>) attributes {dimension_semantics = [#tpu.dimension_semantics<arbitrary>], iteration_bounds = array<i64: 1>, scalar_prefetch = 0 : i64, scratch_operands = 1 : i64, tpu.core_type = #tpu.core_type<tc>, window_params = [{transform_indices = @transform_0, window_bounds = array<i64: 2, 256, 32>}, {pipeline_mode = #tpu.pipeline_mode<synchronous>, transform_indices = @transform_1, window_bounds = array<i64: 32, 32>}, {pipeline_mode = #tpu.pipeline_mode<synchronous>, transform_indices = @transform_2, window_bounds = array<i64: 1, 32>}, {pipeline_mode = #tpu.pipeline_mode<synchronous>, transform_indices = @transform_3, window_bounds = array<i64: 2, 32>}]} {
    %c0_i32 = arith.constant 0 : i32
    %0 = arith.cmpi eq, %arg0, %c0_i32 : i32
    %1 = arith.extui %0 : i1 to i32
    %c0_i32_0 = arith.constant 0 : i32
    %2 = arith.cmpi ne, %1, %c0_i32_0 : i32
    scf.if %2 {
      %cst_9 = arith.constant 0.000000e+00 : f32
      %12 = vector.broadcast %cst_9 : f32 to vector<2x32xf32>
      %c0_10 = arith.constant 0 : index
      %c0_11 = arith.constant 0 : index
      %13 = vector.load %arg5[%c0_10, %c0_11] : memref<2x32xf32, #tpu.memory_space<vmem>>, vector<2x32xf32>
      tpu.vector_store %arg5[%c0_10, %c0_11], %12 {strides = array<i32>} : memref<2x32xf32, #tpu.memory_space<vmem>>, vector<2x32xf32>,
    } else {
    }
    %c0 = arith.constant 0 : index
    %c0_1 = arith.constant 0 : index
    %3 = vector.load %arg5[%c0, %c0_1] : memref<2x32xf32, #tpu.memory_space<vmem>>, vector<2x32xf32>
    %c0_2 = arith.constant 0 : index
    %c0_3 = arith.constant 0 : index
    %c0_4 = arith.constant 0 : index
    %4 = vector.load %arg1[%c0_2, %c0_3, %c0_4] : memref<2x256x32xbf16, #tpu.memory_space<vmem>>, vector<2x256x32xbf16>
    %5 = arith.extf %4 : vector<2x256x32xbf16> to vector<2x256x32xf32>
    %cst = arith.constant dense<0.000000e+00> : vector<2x32xf32>
    %6 = vector.multi_reduction <add>, %5, %cst [1] : vector<2x256x32xf32> to vector<2x32xf32>
    %7 = arith.addf %3, %6 : vector<2x32xf32>
    %c0_5 = arith.constant 0 : index
    %c0_6 = arith.constant 0 : index
    %8 = vector.load %arg5[%c0_5, %c0_6] : memref<2x32xf32, #tpu.memory_space<vmem>>, vector<2x32xf32>
    tpu.vector_store %arg5[%c0_5, %c0_6], %7 {strides = array<i32>} : memref<2x32xf32, #tpu.memory_space<vmem>>, vector<2x32xf32>,
    %c0_i32_7 = arith.constant 0 : i32
    %9 = arith.cmpi eq, %arg0, %c0_i32_7 : i32
    %10 = arith.extui %9 : i1 to i32
    %c0_i32_8 = arith.constant 0 : i32
    %11 = arith.cmpi ne, %10, %c0_i32_8 : i32
    scf.if %11 {
      %c0_9 = arith.constant 0 : index
      %c0_10 = arith.constant 0 : index
      %12 = vector.load %arg5[%c0_9, %c0_10] : memref<2x32xf32, #tpu.memory_space<vmem>>, vector<2x32xf32>
      %cst_11 = arith.constant 3.906250e-03 : f32
      %13 = vector.broadcast %cst_11 : f32 to vector<2x32xf32>
      %14 = arith.mulf %12, %13 : vector<2x32xf32>
      %15 = arith.truncf %14 : vector<2x32xf32> to vector<2x32xbf16>
      %c0_12 = arith.constant 0 : index
      %c0_13 = arith.constant 0 : index
      %16 = vector.load %arg2[%c0_12, %c0_13] : memref<32x32xbf16, #tpu.memory_space<vmem>>, vector<32x32xbf16>
      %cst_14 = arith.constant dense<0.000000e+00> : vector<2x32xf32>
      %17 = tpu.matmul %15, %16, %cst_14 {dimension_numbers = #tpu.dot_dimension_numbers<[1], [0], [0], [1], [0, 0, 1, 1], [], []>} : vector<2x32xbf16>, vector<32x32xbf16>, vector<2x32xf32> -> vector<2x32xf32>
      %c0_15 = arith.constant 0 : index
      %c0_16 = arith.constant 0 : index
      %18 = vector.load %arg3[%c0_15, %c0_16] : memref<1x32xf32, #tpu.memory_space<vmem>>, vector<1x32xf32>
      %19 = vector.broadcast %18 : vector<1x32xf32> to vector<2x32xf32>
      %20 = arith.addf %17, %19 : vector<2x32xf32>
      %21 = math.tanh %20 : vector<2x32xf32>
      %c0_17 = arith.constant 0 : index
      %c0_18 = arith.constant 0 : index
      %22 = vector.load %arg4[%c0_17, %c0_18] : memref<2x32xf32, #tpu.memory_space<vmem>>, vector<2x32xf32>
      tpu.vector_store %arg4[%c0_17, %c0_18], %21 {strides = array<i32>} : memref<2x32xf32, #tpu.memory_space<vmem>>, vector<2x32xf32>,
    } else {
    }
    return
  }
  func.func @transform_0(%arg0: i32) -> (i32, i32, i32) {
    %c0_i32 = arith.constant 0 : i32
    %c0_i32_0 = arith.constant 0 : i32
    %c0_i32_1 = arith.constant 0 : i32
    return %c0_i32, %arg0, %c0_i32_0 : i32, i32, i32
  }
  func.func @transform_1(%arg0: i32) -> (i32, i32) {
    %c0_i32 = arith.constant 0 : i32
    %c0_i32_0 = arith.constant 0 : i32
    %c0_i32_1 = arith.constant 0 : i32
    return %c0_i32, %c0_i32_0 : i32, i32
  }
  func.func @transform_2(%arg0: i32) -> (i32, i32) {
    %c0_i32 = arith.constant 0 : i32
    %c0_i32_0 = arith.constant 0 : i32
    %c0_i32_1 = arith.constant 0 : i32
    return %c0_i32, %c0_i32_0 : i32, i32
  }
  func.func @transform_3(%arg0: i32) -> (i32, i32) {
    %c0_i32 = arith.constant 0 : i32
    %c0_i32_0 = arith.constant 0 : i32
    %c0_i32_1 = arith.constant 0 : i32
    return %c0_i32, %c0_i32_0 : i32, i32
  }
}

module attributes {stable_mosaic.version = 11 : i64} {
  func.func @_decoder_seq_kernel(%arg0: i32, %arg1: i32, %arg2: memref<1x2x96xf32, #tpu.memory_space<vmem>>, %arg3: memref<2x32xf32, #tpu.memory_space<vmem>>, %arg4: memref<2x256x32xbf16, #tpu.memory_space<vmem>>, %arg5: memref<2x256x32xbf16, #tpu.memory_space<vmem>>, %arg6: memref<32x32xbf16, #tpu.memory_space<vmem>>, %arg7: memref<1x32xf32, #tpu.memory_space<vmem>>, %arg8: memref<32x96xbf16, #tpu.memory_space<vmem>>, %arg9: memref<32x96xbf16, #tpu.memory_space<vmem>>, %arg10: memref<1x96xf32, #tpu.memory_space<vmem>>, %arg11: memref<1x2x32xbf16, #tpu.memory_space<vmem>>, %arg12: memref<2x32xf32, #tpu.memory_space<vmem>>) attributes {dimension_semantics = [#tpu.dimension_semantics<parallel>, #tpu.dimension_semantics<arbitrary>], iteration_bounds = array<i64: 1, 7>, scalar_prefetch = 0 : i64, scratch_operands = 1 : i64, tpu.core_type = #tpu.core_type<tc>, window_params = [{transform_indices = @transform_0, window_bounds = array<i64: 1, 2, 96>}, {pipeline_mode = #tpu.pipeline_mode<synchronous>, transform_indices = @transform_1, window_bounds = array<i64: 2, 32>}, {pipeline_mode = #tpu.pipeline_mode<synchronous>, transform_indices = @transform_2, window_bounds = array<i64: 2, 256, 32>}, {pipeline_mode = #tpu.pipeline_mode<synchronous>, transform_indices = @transform_3, window_bounds = array<i64: 2, 256, 32>}, {pipeline_mode = #tpu.pipeline_mode<synchronous>, transform_indices = @transform_4, window_bounds = array<i64: 32, 32>}, {pipeline_mode = #tpu.pipeline_mode<synchronous>, transform_indices = @transform_5, window_bounds = array<i64: 1, 32>}, {pipeline_mode = #tpu.pipeline_mode<synchronous>, transform_indices = @transform_6, window_bounds = array<i64: 32, 96>}, {pipeline_mode = #tpu.pipeline_mode<synchronous>, transform_indices = @transform_7, window_bounds = array<i64: 32, 96>}, {pipeline_mode = #tpu.pipeline_mode<synchronous>, transform_indices = @transform_8, window_bounds = array<i64: 1, 96>}, {transform_indices = @transform_9, window_bounds = array<i64: 1, 2, 32>}]} {
    %c0_i32 = arith.constant 0 : i32
    %0 = arith.cmpi eq, %arg1, %c0_i32 : i32
    %1 = arith.extui %0 : i1 to i32
    %c0_i32_0 = arith.constant 0 : i32
    %2 = arith.cmpi ne, %1, %c0_i32_0 : i32
    scf.if %2 {
      %c0_35 = arith.constant 0 : index
      %c0_36 = arith.constant 0 : index
      %75 = vector.load %arg3[%c0_35, %c0_36] : memref<2x32xf32, #tpu.memory_space<vmem>>, vector<2x32xf32>
      %c0_37 = arith.constant 0 : index
      %c0_38 = arith.constant 0 : index
      %76 = vector.load %arg12[%c0_37, %c0_38] : memref<2x32xf32, #tpu.memory_space<vmem>>, vector<2x32xf32>
      tpu.vector_store %arg12[%c0_37, %c0_38], %75 {strides = array<i32>} : memref<2x32xf32, #tpu.memory_space<vmem>>, vector<2x32xf32>,
    } else {
    }
    %c0 = arith.constant 0 : index
    %c0_1 = arith.constant 0 : index
    %3 = vector.load %arg12[%c0, %c0_1] : memref<2x32xf32, #tpu.memory_space<vmem>>, vector<2x32xf32>
    %4 = arith.truncf %3 : vector<2x32xf32> to vector<2x32xbf16>
    %c0_2 = arith.constant 0 : index
    %c0_3 = arith.constant 0 : index
    %5 = vector.load %arg6[%c0_2, %c0_3] : memref<32x32xbf16, #tpu.memory_space<vmem>>, vector<32x32xbf16>
    %cst = arith.constant dense<0.000000e+00> : vector<2x32xf32>
    %6 = tpu.matmul %4, %5, %cst {dimension_numbers = #tpu.dot_dimension_numbers<[1], [0], [0], [1], [0, 0, 1, 1], [], []>} : vector<2x32xbf16>, vector<32x32xbf16>, vector<2x32xf32> -> vector<2x32xf32>
    %c0_4 = arith.constant 0 : index
    %c0_5 = arith.constant 0 : index
    %c0_6 = arith.constant 0 : index
    %7 = vector.load %arg5[%c0_4, %c0_5, %c0_6] : memref<2x256x32xbf16, #tpu.memory_space<vmem>>, vector<2x256x32xbf16>
    %8 = arith.extf %7 : vector<2x256x32xbf16> to vector<2x256x32xf32>
    %9 = vector.shape_cast %6 : vector<2x32xf32> to vector<2x1x32xf32>
    %10 = vector.broadcast %9 : vector<2x1x32xf32> to vector<2x256x32xf32>
    %11 = arith.addf %8, %10 : vector<2x256x32xf32>
    %12 = math.tanh %11 : vector<2x256x32xf32>
    %c0_7 = arith.constant 0 : index
    %c0_8 = arith.constant 0 : index
    %13 = vector.load %arg7[%c0_7, %c0_8] : memref<1x32xf32, #tpu.memory_space<vmem>>, vector<1x32xf32>
    %14 = vector.shape_cast %13 : vector<1x32xf32> to vector<1x1x32xf32>
    %15 = vector.broadcast %14 : vector<1x1x32xf32> to vector<2x256x32xf32>
    %16 = arith.mulf %12, %15 : vector<2x256x32xf32>
    %cst_9 = arith.constant dense<0.000000e+00> : vector<2x256xf32>
    %17 = vector.multi_reduction <add>, %16, %cst_9 [2] : vector<2x256x32xf32> to vector<2x256xf32>
    %cst_10 = arith.constant dense<0xFF800000> : vector<2xf32>
    %18 = vector.multi_reduction <maximumf>, %17, %cst_10 [1] : vector<2x256xf32> to vector<2xf32>
    %19 = vector.shape_cast %18 : vector<2xf32> to vector<2x1xf32>
    %20 = vector.broadcast %19 : vector<2x1xf32> to vector<2x256xf32>
    %21 = arith.subf %17, %20 : vector<2x256xf32>
    %22 = math.exp %21 : vector<2x256xf32>
    %cst_11 = arith.constant dense<0.000000e+00> : vector<2xf32>
    %23 = vector.multi_reduction <add>, %22, %cst_11 [1] : vector<2x256xf32> to vector<2xf32>
    %24 = vector.shape_cast %23 : vector<2xf32> to vector<2x1xf32>
    %25 = tpu.reciprocal %24 {approx = true} : vector<2x1xf32> -> vector<2x1xf32>
    %26 = vector.broadcast %25 : vector<2x1xf32> to vector<2x256xf32>
    %27 = arith.mulf %22, %26 : vector<2x256xf32>
    %28 = vector.shape_cast %27 : vector<2x256xf32> to vector<2x1x256xf32>
    %29 = arith.truncf %28 : vector<2x1x256xf32> to vector<2x1x256xbf16>
    %c0_12 = arith.constant 0 : index
    %c0_13 = arith.constant 0 : index
    %c0_14 = arith.constant 0 : index
    %30 = vector.load %arg4[%c0_12, %c0_13, %c0_14] : memref<2x256x32xbf16, #tpu.memory_space<vmem>>, vector<2x256x32xbf16>
    "tpu.trace_start"() <{level = 10 : i32, message = "bqp,bpd->bqd"}> : () -> ()
    %cst_15 = arith.constant dense<0.000000e+00> : vector<2x1x32xf32>
    %31 = tpu.matmul %29, %30, %cst_15 {dimension_numbers = #tpu.dot_dimension_numbers<[2], [1], [1], [2], [0, 0, 0, 1, 1, 2], [0], [0]>} : vector<2x1x256xbf16>, vector<2x256x32xbf16>, vector<2x1x32xf32> -> vector<2x1x32xf32>
    "tpu.trace_stop"() : () -> ()
    %32 = vector.shape_cast %31 : vector<2x1x32xf32> to vector<2x32xf32>
    %c0_16 = arith.constant 0 : index
    %c0_17 = arith.constant 0 : index
    %c0_18 = arith.constant 0 : index
    %33 = vector.load %arg2[%c0_16, %c0_17, %c0_18] : memref<1x2x96xf32, #tpu.memory_space<vmem>>, vector<1x2x96xf32>
    %34 = vector.shape_cast %33 : vector<1x2x96xf32> to vector<2x96xf32>
    %35 = arith.truncf %32 : vector<2x32xf32> to vector<2x32xbf16>
    %c0_19 = arith.constant 0 : index
    %c0_20 = arith.constant 0 : index
    %36 = vector.load %arg8[%c0_19, %c0_20] : memref<32x96xbf16, #tpu.memory_space<vmem>>, vector<32x96xbf16>
    %cst_21 = arith.constant dense<0.000000e+00> : vector<2x96xf32>
    %37 = tpu.matmul %35, %36, %cst_21 {dimension_numbers = #tpu.dot_dimension_numbers<[1], [0], [0], [1], [0, 0, 1, 1], [], []>} : vector<2x32xbf16>, vector<32x96xbf16>, vector<2x96xf32> -> vector<2x96xf32>
    %38 = arith.addf %34, %37 : vector<2x96xf32>
    %c0_22 = arith.constant 0 : index
    %c0_23 = arith.constant 0 : index
    %39 = vector.load %arg10[%c0_22, %c0_23] : memref<1x96xf32, #tpu.memory_space<vmem>>, vector<1x96xf32>
    %40 = vector.broadcast %39 : vector<1x96xf32> to vector<2x96xf32>
    %41 = arith.addf %38, %40 : vector<2x96xf32>
    %c0_24 = arith.constant 0 : index
    %c0_25 = arith.constant 0 : index
    %42 = vector.load %arg9[%c0_24, %c0_25] : memref<32x96xbf16, #tpu.memory_space<vmem>>, vector<32x96xbf16>
    %cst_26 = arith.constant dense<0.000000e+00> : vector<2x96xf32>
    %43 = tpu.matmul %4, %42, %cst_26 {dimension_numbers = #tpu.dot_dimension_numbers<[1], [0], [0], [1], [0, 0, 1, 1], [], []>} : vector<2x32xbf16>, vector<32x96xbf16>, vector<2x96xf32> -> vector<2x96xf32>
    %44 = vector.extract_strided_slice %41 {offsets = [0, 0], sizes = [2, 32], strides = [1, 1]} : vector<2x96xf32> to vector<2x32xf32>
    %45 = vector.extract_strided_slice %43 {offsets = [0, 0], sizes = [2, 32], strides = [1, 1]} : vector<2x96xf32> to vector<2x32xf32>
    %46 = arith.addf %44, %45 : vector<2x32xf32>
    %47 = arith.negf %46 : vector<2x32xf32>
    %48 = math.exp %47 : vector<2x32xf32>
    %cst_27 = arith.constant 1.000000e+00 : f32
    %49 = vector.broadcast %cst_27 : f32 to vector<2x32xf32>
    %50 = arith.addf %49, %48 : vector<2x32xf32>
    %51 = arith.divf %49, %50 : vector<2x32xf32>
    %52 = vector.extract_strided_slice %41 {offsets = [0, 32], sizes = [2, 32], strides = [1, 1]} : vector<2x96xf32> to vector<2x32xf32>
    %53 = vector.extract_strided_slice %43 {offsets = [0, 32], sizes = [2, 32], strides = [1, 1]} : vector<2x96xf32> to vector<2x32xf32>
    %54 = arith.addf %52, %53 : vector<2x32xf32>
    %55 = arith.negf %54 : vector<2x32xf32>
    %56 = math.exp %55 : vector<2x32xf32>
    %cst_28 = arith.constant 1.000000e+00 : f32
    %57 = vector.broadcast %cst_28 : f32 to vector<2x32xf32>
    %58 = arith.addf %57, %56 : vector<2x32xf32>
    %59 = arith.divf %57, %58 : vector<2x32xf32>
    %60 = vector.extract_strided_slice %41 {offsets = [0, 64], sizes = [2, 32], strides = [1, 1]} : vector<2x96xf32> to vector<2x32xf32>
    %61 = vector.extract_strided_slice %43 {offsets = [0, 64], sizes = [2, 32], strides = [1, 1]} : vector<2x96xf32> to vector<2x32xf32>
    %62 = arith.mulf %59, %61 : vector<2x32xf32>
    %63 = arith.addf %60, %62 : vector<2x32xf32>
    %64 = math.tanh %63 : vector<2x32xf32>
    %cst_29 = arith.constant 1.000000e+00 : f32
    %65 = vector.broadcast %cst_29 : f32 to vector<2x32xf32>
    %66 = arith.subf %65, %51 : vector<2x32xf32>
    %67 = arith.mulf %66, %64 : vector<2x32xf32>
    %68 = arith.mulf %51, %3 : vector<2x32xf32>
    %69 = arith.addf %67, %68 : vector<2x32xf32>
    %c0_30 = arith.constant 0 : index
    %c0_31 = arith.constant 0 : index
    %70 = vector.load %arg12[%c0_30, %c0_31] : memref<2x32xf32, #tpu.memory_space<vmem>>, vector<2x32xf32>
    tpu.vector_store %arg12[%c0_30, %c0_31], %69 {strides = array<i32>} : memref<2x32xf32, #tpu.memory_space<vmem>>, vector<2x32xf32>,
    %71 = arith.truncf %69 : vector<2x32xf32> to vector<2x32xbf16>
    %c0_32 = arith.constant 0 : index
    %c0_33 = arith.constant 0 : index
    %c0_34 = arith.constant 0 : index
    %72 = vector.load %arg11[%c0_32, %c0_33, %c0_34] : memref<1x2x32xbf16, #tpu.memory_space<vmem>>, vector<1x2x32xbf16>
    %73 = vector.shape_cast %72 : vector<1x2x32xbf16> to vector<2x32xbf16>
    %74 = vector.shape_cast %71 : vector<2x32xbf16> to vector<1x2x32xbf16>
    tpu.vector_store %arg11[%c0_32, %c0_33, %c0_34], %74 {strides = array<i32>} : memref<1x2x32xbf16, #tpu.memory_space<vmem>>, vector<1x2x32xbf16>,
    return
  }
  func.func @transform_0(%arg0: i32, %arg1: i32) -> (i32, i32, i32) {
    %c0_i32 = arith.constant 0 : i32
    %c0_i32_0 = arith.constant 0 : i32
    return %arg1, %arg0, %c0_i32 : i32, i32, i32
  }
  func.func @transform_1(%arg0: i32, %arg1: i32) -> (i32, i32) {
    %c0_i32 = arith.constant 0 : i32
    %c0_i32_0 = arith.constant 0 : i32
    return %arg0, %c0_i32 : i32, i32
  }
  func.func @transform_2(%arg0: i32, %arg1: i32) -> (i32, i32, i32) {
    %c0_i32 = arith.constant 0 : i32
    %c0_i32_0 = arith.constant 0 : i32
    %c0_i32_1 = arith.constant 0 : i32
    return %arg0, %c0_i32, %c0_i32_0 : i32, i32, i32
  }
  func.func @transform_3(%arg0: i32, %arg1: i32) -> (i32, i32, i32) {
    %c0_i32 = arith.constant 0 : i32
    %c0_i32_0 = arith.constant 0 : i32
    %c0_i32_1 = arith.constant 0 : i32
    return %arg0, %c0_i32, %c0_i32_0 : i32, i32, i32
  }
  func.func @transform_4(%arg0: i32, %arg1: i32) -> (i32, i32) {
    %c0_i32 = arith.constant 0 : i32
    %c0_i32_0 = arith.constant 0 : i32
    %c0_i32_1 = arith.constant 0 : i32
    return %c0_i32, %c0_i32_0 : i32, i32
  }
  func.func @transform_5(%arg0: i32, %arg1: i32) -> (i32, i32) {
    %c0_i32 = arith.constant 0 : i32
    %c0_i32_0 = arith.constant 0 : i32
    %c0_i32_1 = arith.constant 0 : i32
    return %c0_i32, %c0_i32_0 : i32, i32
  }
  func.func @transform_6(%arg0: i32, %arg1: i32) -> (i32, i32) {
    %c0_i32 = arith.constant 0 : i32
    %c0_i32_0 = arith.constant 0 : i32
    %c0_i32_1 = arith.constant 0 : i32
    return %c0_i32, %c0_i32_0 : i32, i32
  }
  func.func @transform_7(%arg0: i32, %arg1: i32) -> (i32, i32) {
    %c0_i32 = arith.constant 0 : i32
    %c0_i32_0 = arith.constant 0 : i32
    %c0_i32_1 = arith.constant 0 : i32
    return %c0_i32, %c0_i32_0 : i32, i32
  }
  func.func @transform_8(%arg0: i32, %arg1: i32) -> (i32, i32) {
    %c0_i32 = arith.constant 0 : i32
    %c0_i32_0 = arith.constant 0 : i32
    %c0_i32_1 = arith.constant 0 : i32
    return %c0_i32, %c0_i32_0 : i32, i32
  }
  func.func @transform_9(%arg0: i32, %arg1: i32) -> (i32, i32, i32) {
    %c0_i32 = arith.constant 0 : i32
    %c0_i32_0 = arith.constant 0 : i32
    return %arg1, %arg0, %c0_i32 : i32, i32, i32
  }
}

module attributes {stable_mosaic.version = 11 : i64} {
  func.func @_head_kernel(%arg0: i32, %arg1: i32, %arg2: memref<16x32xbf16, #tpu.memory_space<vmem>>, %arg3: memref<32x64xbf16, #tpu.memory_space<vmem>>, %arg4: memref<1x64xf32, #tpu.memory_space<vmem>>, %arg5: memref<16x64xf32, #tpu.memory_space<vmem>>) attributes {dimension_semantics = [#tpu.dimension_semantics<parallel>, #tpu.dimension_semantics<parallel>], iteration_bounds = array<i64: 1, 1>, scalar_prefetch = 0 : i64, scratch_operands = 0 : i64, tpu.core_type = #tpu.core_type<tc>, window_params = [{transform_indices = @transform_0, window_bounds = array<i64: 16, 32>}, {transform_indices = @transform_1, window_bounds = array<i64: 32, 64>}, {transform_indices = @transform_2, window_bounds = array<i64: 1, 64>}, {transform_indices = @transform_3, window_bounds = array<i64: 16, 64>}]} {
    %c0 = arith.constant 0 : index
    %c0_0 = arith.constant 0 : index
    %0 = vector.load %arg2[%c0, %c0_0] : memref<16x32xbf16, #tpu.memory_space<vmem>>, vector<16x32xbf16>
    %c0_1 = arith.constant 0 : index
    %c0_2 = arith.constant 0 : index
    %1 = vector.load %arg3[%c0_1, %c0_2] : memref<32x64xbf16, #tpu.memory_space<vmem>>, vector<32x64xbf16>
    %cst = arith.constant dense<0.000000e+00> : vector<16x64xf32>
    %2 = tpu.matmul %0, %1, %cst {dimension_numbers = #tpu.dot_dimension_numbers<[1], [0], [0], [1], [0, 0, 1, 1], [], []>} : vector<16x32xbf16>, vector<32x64xbf16>, vector<16x64xf32> -> vector<16x64xf32>
    %c0_3 = arith.constant 0 : index
    %c0_4 = arith.constant 0 : index
    %3 = vector.load %arg4[%c0_3, %c0_4] : memref<1x64xf32, #tpu.memory_space<vmem>>, vector<1x64xf32>
    %4 = vector.broadcast %3 : vector<1x64xf32> to vector<16x64xf32>
    %5 = arith.addf %2, %4 : vector<16x64xf32>
    %c0_5 = arith.constant 0 : index
    %c0_6 = arith.constant 0 : index
    %6 = vector.load %arg5[%c0_5, %c0_6] : memref<16x64xf32, #tpu.memory_space<vmem>>, vector<16x64xf32>
    tpu.vector_store %arg5[%c0_5, %c0_6], %5 {strides = array<i32>} : memref<16x64xf32, #tpu.memory_space<vmem>>, vector<16x64xf32>,
    return
  }
  func.func @transform_0(%arg0: i32, %arg1: i32) -> (i32, i32) {
    %c0_i32 = arith.constant 0 : i32
    %c0_i32_0 = arith.constant 0 : i32
    return %arg0, %c0_i32 : i32, i32
  }
  func.func @transform_1(%arg0: i32, %arg1: i32) -> (i32, i32) {
    %c0_i32 = arith.constant 0 : i32
    %c0_i32_0 = arith.constant 0 : i32
    return %c0_i32, %arg1 : i32, i32
  }
  func.func @transform_2(%arg0: i32, %arg1: i32) -> (i32, i32) {
    %c0_i32 = arith.constant 0 : i32
    %c0_i32_0 = arith.constant 0 : i32
    return %c0_i32, %arg1 : i32, i32
  }
  func.func @transform_3(%arg0: i32, %arg1: i32) -> (i32, i32) {
    %c0_i32 = arith.constant 0 : i32
    return %arg0, %arg1 : i32, i32
  }
}

</mosaic_0001>

<llo_original>
// kernel: cnn_to_rnn_forward.5
$region0: #{cnn_to_rnn_forward.5}
  #allocation0 [shape = 'u32[]', space=smem, size = 0x4, offset = 0x4, fixed_abs, tag = 'smem constant byte address 0x4 - core index']
  #allocation1 [shape = 'u32[72,128]{1,0:T(1,128)}', space=vmem, size = 0x9000, scoped, tag = 'internal scratch']
  #allocation2 [shape = 'f32[2,32]{1,0:T(2,128)}', space=vmem, size = 0x400, scoped, tag = 'scratch operand']
  %s0 = inlined_call_operand.vmem [shape: bf16[2,256,32], index: 0, kind: input, shape index: {}]
  %s1 = inlined_call_operand.vmem [shape: bf16[32,32], index: 1, kind: input, shape index: {}]
  %s2 = inlined_call_operand.vmem [shape: f32[1,32], index: 2, kind: input, shape index: {}]
  %s3 = inlined_call_operand.vmem [shape: f32[2,32], index: 3, kind: output, shape index: {}]
  %s4 = sld [smem:[#allocation0]]
  $region30: #{cnn_to_rnn_forward.5} parent=0
    _
  %s6 = ssub.s32 1, %s4
  %s7 = scalar_select 0, %s6, %s4
  // Predicated region
  $region2: #{cnn_to_rnn_forward.5} parent=0 // pred_check
    _
  $region3: #{cnn_to_rnn_forward.5} parent=0 // pred_check_branch
    %9 = sbr.rel (0) target = $region5
  $region4: #{cnn_to_rnn_forward.5} parent=0 // pred_region
    _
  $region5: #{cnn_to_rnn_forward.5} parent=0 // pred_fallthru
    _
  // Predicated region
  $region6: #{cnn_to_rnn_forward.5} parent=0 // pred_check
    _
  $region7: #{cnn_to_rnn_forward.5} parent=0 // pred_check_branch
    %11 = sbr.rel (0) target = $region9
  $region8: #{cnn_to_rnn_forward.5} parent=0 // pred_region
    _
  $region9: #{cnn_to_rnn_forward.5} parent=0 // pred_fallthru
    _
  // Predicated region
  $region10: #{cnn_to_rnn_forward.5} parent=0 // pred_check
    _
  $region11: #{cnn_to_rnn_forward.5} parent=0 // pred_check_branch
    %13 = sbr.rel (0) target = $region13
  $region12: #{cnn_to_rnn_forward.5} parent=0 // pred_region
    _
  $region13: #{cnn_to_rnn_forward.5} parent=0 // pred_fallthru
    _
  %p15 = scmp.eq.s32.totalorder 0, 0
  // Predicated region
  $region14: #{cnn_to_rnn_forward.5} parent=0 // pred_check
    %p16 = pneg %p15
  $region15: #{cnn_to_rnn_forward.5} parent=0 // pred_check_branch
    %18 = sbr.rel (%p16) target = $region17
  $region16: #{cnn_to_rnn_forward.5} parent=0 // pred_region
    %vm19 = vcmask 254976
    %20 = vst.msk [vmem:[#allocation2] sm:$0x3] %vm19, 0.0
  $region17: #{cnn_to_rnn_forward.5} parent=0 // pred_fallthru
    _
  %v21 = vld [vmem:[#allocation2] sm:$0x3]
  %v22 = vld [vmem:[%s0] sm:$0xf]
  %v23 = vld [vmem:[%s0 + $0x4] sm:$0xf]
  %v24 = vld [vmem:[%s0 + $0x8] sm:$0xf]
  %v25 = vld [vmem:[%s0 + $0xc] sm:$0xf]
  %v26 = vld [vmem:[%s0 + $0x10] sm:$0xf]
  %v27 = vld [vmem:[%s0 + $0x14] sm:$0xf]
  %v28 = vld [vmem:[%s0 + $0x18] sm:$0xf]
  %v29 = vld [vmem:[%s0 + $0x1c] sm:$0xf]
  %v30 = vld [vmem:[%s0 + $0x20] sm:$0xf]
  %v31 = vld [vmem:[%s0 + $0x24] sm:$0xf]
  %v32 = vld [vmem:[%s0 + $0x28] sm:$0xf]
  %v33 = vld [vmem:[%s0 + $0x2c] sm:$0xf]
  %v34 = vld [vmem:[%s0 + $0x30] sm:$0xf]
  %v35 = vld [vmem:[%s0 + $0x34] sm:$0xf]
  %v36 = vld [vmem:[%s0 + $0x38] sm:$0xf]
  %v37 = vld [vmem:[%s0 + $0x3c] sm:$0xf]
  %v38 = vld [vmem:[%s0 + $0x40] sm:$0xf]
  %v39 = vld [vmem:[%s0 + $0x44] sm:$0xf]
  %v40 = vld [vmem:[%s0 + $0x48] sm:$0xf]
  %v41 = vld [vmem:[%s0 + $0x4c] sm:$0xf]
  %v42 = vld [vmem:[%s0 + $0x50] sm:$0xf]
  %v43 = vld [vmem:[%s0 + $0x54] sm:$0xf]
  %v44 = vld [vmem:[%s0 + $0x58] sm:$0xf]
  %v45 = vld [vmem:[%s0 + $0x5c] sm:$0xf]
  %v46 = vld [vmem:[%s0 + $0x60] sm:$0xf]
  %v47 = vld [vmem:[%s0 + $0x64] sm:$0xf]
  %v48 = vld [vmem:[%s0 + $0x68] sm:$0xf]
  %v49 = vld [vmem:[%s0 + $0x6c] sm:$0xf]
  %v50 = vld [vmem:[%s0 + $0x70] sm:$0xf]
  %v51 = vld [vmem:[%s0 + $0x74] sm:$0xf]
  %v52 = vld [vmem:[%s0 + $0x78] sm:$0xf]
  %v53 = vld [vmem:[%s0 + $0x7c] sm:$0xf]
  %v54 = vld [vmem:[%s0 + $0x80] sm:$0xf]
  %v55 = vld [vmem:[%s0 + $0x84] sm:$0xf]
  %v56 = vld [vmem:[%s0 + $0x88] sm:$0xf]
  %v57 = vld [vmem:[%s0 + $0x8c] sm:$0xf]
  %v58 = vld [vmem:[%s0 + $0x90] sm:$0xf]
  %v59 = vld [vmem:[%s0 + $0x94] sm:$0xf]
  %v60 = vld [vmem:[%s0 + $0x98] sm:$0xf]
  %v61 = vld [vmem:[%s0 + $0x9c] sm:$0xf]
  %v62 = vld [vmem:[%s0 + $0xa0] sm:$0xf]
  %v63 = vld [vmem:[%s0 + $0xa4] sm:$0xf]
  %v64 = vld [vmem:[%s0 + $0xa8] sm:$0xf]
  %v65 = vld [vmem:[%s0 + $0xac] sm:$0xf]
  %v66 = vld [vmem:[%s0 + $0xb0] sm:$0xf]
  %v67 = vld [vmem:[%s0 + $0xb4] sm:$0xf]
  %v68 = vld [vmem:[%s0 + $0xb8] sm:$0xf]
  %v69 = vld [vmem:[%s0 + $0xbc] sm:$0xf]
  %v70 = vld [vmem:[%s0 + $0xc0] sm:$0xf]
  %v71 = vld [vmem:[%s0 + $0xc4] sm:$0xf]
  %v72 = vld [vmem:[%s0 + $0xc8] sm:$0xf]
  %v73 = vld [vmem:[%s0 + $0xcc] sm:$0xf]
  %v74 = vld [vmem:[%s0 + $0xd0] sm:$0xf]
  %v75 = vld [vmem:[%s0 + $0xd4] sm:$0xf]
  %v76 = vld [vmem:[%s0 + $0xd8] sm:$0xf]
  %v77 = vld [vmem:[%s0 + $0xdc] sm:$0xf]
  %v78 = vld [vmem:[%s0 + $0xe0] sm:$0xf]
  %v79 = vld [vmem:[%s0 + $0xe4] sm:$0xf]
  %v80 = vld [vmem:[%s0 + $0xe8] sm:$0xf]
  %v81 = vld [vmem:[%s0 + $0xec] sm:$0xf]
  %v82 = vld [vmem:[%s0 + $0xf0] sm:$0xf]
  %v83 = vld [vmem:[%s0 + $0xf4] sm:$0xf]
  %v84 = vld [vmem:[%s0 + $0xf8] sm:$0xf]
  %v85 = vld [vmem:[%s0 + $0xfc] sm:$0xf]
  %v86 = vunpack.c.l.bf16 %v22
  %v87 = vunpack.c.l.bf16 %v23
  %v88 = vunpack.c.l.bf16 %v24
  %v89 = vunpack.c.l.bf16 %v25
  %v90 = vunpack.c.l.bf16 %v26
  %v91 = vunpack.c.l.bf16 %v27
  %v92 = vunpack.c.l.bf16 %v28
  %v93 = vunpack.c.l.bf16 %v29
  %v94 = vunpack.c.l.bf16 %v30
  %v95 = vunpack.c.l.bf16 %v31
  %v96 = vunpack.c.l.bf16 %v32
  %v97 = vunpack.c.l.bf16 %v33
  %v98 = vunpack.c.l.bf16 %v34
  %v99 = vunpack.c.l.bf16 %v35
  %v100 = vunpack.c.l.bf16 %v36
  %v101 = vunpack.c.l.bf16 %v37
  %v102 = vunpack.c.l.bf16 %v38
  %v103 = vunpack.c.l.bf16 %v39
  %v104 = vunpack.c.l.bf16 %v40
  %v105 = vunpack.c.l.bf16 %v41
  %v106 = vunpack.c.l.bf16 %v42
  %v107 = vunpack.c.l.bf16 %v43
  %v108 = vunpack.c.l.bf16 %v44
  %v109 = vunpack.c.l.bf16 %v45
  %v110 = vunpack.c.l.bf16 %v46
  %v111 = vunpack.c.l.bf16 %v47
  %v112 = vunpack.c.l.bf16 %v48
  %v113 = vunpack.c.l.bf16 %v49
  %v114 = vunpack.c.l.bf16 %v50
  %v115 = vunpack.c.l.bf16 %v51
  %v116 = vunpack.c.l.bf16 %v52
  %v117 = vunpack.c.l.bf16 %v53
  %v118 = vunpack.c.l.bf16 %v54
  %v119 = vunpack.c.l.bf16 %v55
  %v120 = vunpack.c.l.bf16 %v56
  %v121 = vunpack.c.l.bf16 %v57
  %v122 = vunpack.c.l.bf16 %v58
  %v123 = vunpack.c.l.bf16 %v59
  %v124 = vunpack.c.l.bf16 %v60
  %v125 = vunpack.c.l.bf16 %v61
  %v126 = vunpack.c.l.bf16 %v62
  %v127 = vunpack.c.l.bf16 %v63
  %v128 = vunpack.c.l.bf16 %v64
  %v129 = vunpack.c.l.bf16 %v65
  %v130 = vunpack.c.l.bf16 %v66
  %v131 = vunpack.c.l.bf16 %v67
  %v132 = vunpack.c.l.bf16 %v68
  %v133 = vunpack.c.l.bf16 %v69
  %v134 = vunpack.c.l.bf16 %v70
  %v135 = vunpack.c.l.bf16 %v71
  %v136 = vunpack.c.l.bf16 %v72
  %v137 = vunpack.c.l.bf16 %v73
  %v138 = vunpack.c.l.bf16 %v74
  %v139 = vunpack.c.l.bf16 %v75
  %v140 = vunpack.c.l.bf16 %v76
  %v141 = vunpack.c.l.bf16 %v77
  %v142 = vunpack.c.l.bf16 %v78
  %v143 = vunpack.c.l.bf16 %v79
  %v144 = vunpack.c.l.bf16 %v80
  %v145 = vunpack.c.l.bf16 %v81
  %v146 = vunpack.c.l.bf16 %v82
  %v147 = vunpack.c.l.bf16 %v83
  %v148 = vunpack.c.l.bf16 %v84
  %v149 = vunpack.c.l.bf16 %v85
  %vm150 = vcmask 261120
  %v151 = vsel %vm150, %v86, 0.0
  %v152 = vsel %vm150, %v87, 0.0
  %v153 = vadd.f32 %v151, %v152
  %v154 = vsel %vm150, %v88, 0.0
  %v155 = vadd.f32 %v153, %v154
  %v156 = vsel %vm150, %v89, 0.0
  %v157 = vadd.f32 %v155, %v156
  %v158 = vsel %vm150, %v90, 0.0
  %v159 = vadd.f32 %v157, %v158
  %v160 = vsel %vm150, %v91, 0.0
  %v161 = vadd.f32 %v159, %v160
  %v162 = vsel %vm150, %v92, 0.0
  %v163 = vadd.f32 %v161, %v162
  %v164 = vsel %vm150, %v93, 0.0
  %v165 = vadd.f32 %v163, %v164
  %v166 = vsel %vm150, %v94, 0.0
  %v167 = vadd.f32 %v165, %v166
  %v168 = vsel %vm150, %v95, 0.0
  %v169 = vadd.f32 %v167, %v168
  %v170 = vsel %vm150, %v96, 0.0
  %v171 = vadd.f32 %v169, %v170
  %v172 = vsel %vm150, %v97, 0.0
  %v173 = vadd.f32 %v171, %v172
  %v174 = vsel %vm150, %v98, 0.0
  %v175 = vadd.f32 %v173, %v174
  %v176 = vsel %vm150, %v99, 0.0
  %v177 = vadd.f32 %v175, %v176
  %v178 = vsel %vm150, %v100, 0.0
  %v179 = vadd.f32 %v177, %v178
  %v180 = vsel %vm150, %v101, 0.0
  %v181 = vadd.f32 %v179, %v180
  %v182 = vsel %vm150, %v102, 0.0
  %v183 = vadd.f32 %v181, %v182
  %v184 = vsel %vm150, %v103, 0.0
  %v185 = vadd.f32 %v183, %v184
  %v186 = vsel %vm150, %v104, 0.0
  %v187 = vadd.f32 %v185, %v186
  %v188 = vsel %vm150, %v105, 0.0
  %v189 = vadd.f32 %v187, %v188
  %v190 = vsel %vm150, %v106, 0.0
  %v191 = vadd.f32 %v189, %v190
  %v192 = vsel %vm150, %v107, 0.0
  %v193 = vadd.f32 %v191, %v192
  %v194 = vsel %vm150, %v108, 0.0
  %v195 = vadd.f32 %v193, %v194
  %v196 = vsel %vm150, %v109, 0.0
  %v197 = vadd.f32 %v195, %v196
  %v198 = vsel %vm150, %v110, 0.0
  %v199 = vadd.f32 %v197, %v198
  %v200 = vsel %vm150, %v111, 0.0
  %v201 = vadd.f32 %v199, %v200
  %v202 = vsel %vm150, %v112, 0.0
  %v203 = vadd.f32 %v201, %v202
  %v204 = vsel %vm150, %v113, 0.0
  %v205 = vadd.f32 %v203, %v204
  %v206 = vsel %vm150, %v114, 0.0
  %v207 = vadd.f32 %v205, %v206
  %v208 = vsel %vm150, %v115, 0.0
  %v209 = vadd.f32 %v207, %v208
  %v210 = vsel %vm150, %v116, 0.0
  %v211 = vadd.f32 %v209, %v210
  %v212 = vsel %vm150, %v117, 0.0
  %v213 = vadd.f32 %v211, %v212
  %v214 = vrot.slane %v213, 4
  %v215 = vadd.f32 %v213, %v214
  %v216 = vrot.slane %v215, 2
  %v217 = vadd.f32 %v215, %v216
  %v218 = vrot.slane %v217, 1
  %v219 = vadd.f32 %v217, %v218
  %v220 = vsel %vm150, %v118, 0.0
  %v221 = vsel %vm150, %v119, 0.0
  %v222 = vadd.f32 %v220, %v221
  %v223 = vsel %vm150, %v120, 0.0
  %v224 = vadd.f32 %v222, %v223
  %v225 = vsel %vm150, %v121, 0.0
  %v226 = vadd.f32 %v224, %v225
  %v227 = vsel %vm150, %v122, 0.0
  %v228 = vadd.f32 %v226, %v227
  %v229 = vsel %vm150, %v123, 0.0
  %v230 = vadd.f32 %v228, %v229
  %v231 = vsel %vm150, %v124, 0.0
  %v232 = vadd.f32 %v230, %v231
  %v233 = vsel %vm150, %v125, 0.0
  %v234 = vadd.f32 %v232, %v233
  %v235 = vsel %vm150, %v126, 0.0
  %v236 = vadd.f32 %v234, %v235
  %v237 = vsel %vm150, %v127, 0.0
  %v238 = vadd.f32 %v236, %v237
  %v239 = vsel %vm150, %v128, 0.0
  %v240 = vadd.f32 %v238, %v239
  %v241 = vsel %vm150, %v129, 0.0
  %v242 = vadd.f32 %v240, %v241
  %v243 = vsel %vm150, %v130, 0.0
  %v244 = vadd.f32 %v242, %v243
  %v245 = vsel %vm150, %v131, 0.0
  %v246 = vadd.f32 %v244, %v245
  %v247 = vsel %vm150, %v132, 0.0
  %v248 = vadd.f32 %v246, %v247
  %v249 = vsel %vm150, %v133, 0.0
  %v250 = vadd.f32 %v248, %v249
  %v251 = vsel %vm150, %v134, 0.0
  %v252 = vadd.f32 %v250, %v251
  %v253 = vsel %vm150, %v135, 0.0
  %v254 = vadd.f32 %v252, %v253
  %v255 = vsel %vm150, %v136, 0.0
  %v256 = vadd.f32 %v254, %v255
  %v257 = vsel %vm150, %v137, 0.0
  %v258 = vadd.f32 %v256, %v257
  %v259 = vsel %vm150, %v138, 0.0
  %v260 = vadd.f32 %v258, %v259
  %v261 = vsel %vm150, %v139, 0.0
  %v262 = vadd.f32 %v260, %v261
  %v263 = vsel %vm150, %v140, 0.0
  %v264 = vadd.f32 %v262, %v263
  %v265 = vsel %vm150, %v141, 0.0
  %v266 = vadd.f32 %v264, %v265
  %v267 = vsel %vm150, %v142, 0.0
  %v268 = vadd.f32 %v266, %v267
  %v269 = vsel %vm150, %v143, 0.0
  %v270 = vadd.f32 %v268, %v269
  %v271 = vsel %vm150, %v144, 0.0
  %v272 = vadd.f32 %v270, %v271
  %v273 = vsel %vm150, %v145, 0.0
  %v274 = vadd.f32 %v272, %v273
  %v275 = vsel %vm150, %v146, 0.0
  %v276 = vadd.f32 %v274, %v275
  %v277 = vsel %vm150, %v147, 0.0
  %v278 = vadd.f32 %v276, %v277
  %v279 = vsel %vm150, %v148, 0.0
  %v280 = vadd.f32 %v278, %v279
  %v281 = vsel %vm150, %v149, 0.0
  %v282 = vadd.f32 %v280, %v281
  %v283 = vrot.slane %v282, 4
  %v284 = vadd.f32 %v282, %v283
  %v285 = vrot.slane %v284, 2
  %v286 = vadd.f32 %v284, %v285
  %v287 = vrot.slane %v286, 1
  %v288 = vadd.f32 %v286, %v287
  %vm291 = vcmask 1041409
  %v292 = vsel %vm291, %v288, %v219
  %v294 = vadd.f32 %v21, %v292
  %vm295 = vcmask 254976
  %296 = vst.msk [vmem:[#allocation2] sm:$0x3] %vm295, %v294
  // Predicated region
  $region18: #{cnn_to_rnn_forward.5} parent=0 // pred_check
    %p297 = pneg %p15
  $region19: #{cnn_to_rnn_forward.5} parent=0 // pred_check_branch
    %299 = sbr.rel (%p297) target = $region21
  $region20: #{cnn_to_rnn_forward.5} parent=0 // pred_region
    %v300 = vld [vmem:[#allocation2] sm:$0x3]
    %v301 = vmul.f32 %v300, 0.00390625
    %v302 = vpack.c.bf16 %v301, %v301
    %v303 = vld [vmem:[%s1] sm:$0xf]
    %v304 = vld [vmem:[%s1 + $0x4] sm:$0xf]
    %v305 = vld [vmem:[%s1 + $0x8] sm:$0xf]
    %v306 = vld [vmem:[%s1 + $0xc] sm:$0xf]
    %v307 = vld [vmem:[%s2] sm:$0x1]
    %v309 = vperm.slane %v307, 0
    %v315 = vunpack.c.l.b16 %v303
    %v316 = vunpack.c.l.b16 %v304
    %v317 = vunpack.c.l.b16 %v305
    %v318 = vunpack.c.l.b16 %v306
    %v319 = vpack.c.b16 %v316, %v315
    %v320 = vpack.c.b16 %v318, %v317
    %v324 = vsel %vm150, %v302, 0
    %326 = vmatpush.bf16.msra.mxu0 0
    %327 = vmatpush.bf16.msra.mxu0 0
    %328 = vmatpush.bf16.msra.mxu0 0
    %329 = vmatpush.bf16.msra.mxu0 0
    %330 = vmatpush.bf16.msra.mxu0 0
    %331 = vmatpush.bf16.msra.mxu0 0
    %332 = vmatpush.bf16.msra.mxu0 %v320
    %333 = vmatpush.bf16.msra.mxu0 %v319
    %334 = vmatmul.bf16.gmra.mxu0 %v324
    %v335 = vpop.f32.mrf.mxu0
    %v336 = vadd.f32 %v309, %v335
    %v337 = vpop.f32.mrf.mxu0
    %338 = vdwg.mxu0
    %v339 = vtanh.pop %v336
    %340 = vst.msk [vmem:[%s3] sm:$0x3] %vm295, %v339
  $region21: #{cnn_to_rnn_forward.5} parent=0 // pred_fallthru
    _
  // Predicated region
  $region22: #{cnn_to_rnn_forward.5} parent=0 // pred_check
    _
  $region23: #{cnn_to_rnn_forward.5} parent=0 // pred_check_branch
    %342 = sbr.rel (0) target = $region25
  $region24: #{cnn_to_rnn_forward.5} parent=0 // pred_region
    _
  $region25: #{cnn_to_rnn_forward.5} parent=0 // pred_fallthru
    _
  // Predicated region
  $region26: #{cnn_to_rnn_forward.5} parent=0 // pred_check
    _
  $region27: #{cnn_to_rnn_forward.5} parent=0 // pred_check_branch
    %344 = sbr.rel (0) target = $region29
  $region28: #{cnn_to_rnn_forward.5} parent=0 // pred_region
    _
  $region29: #{cnn_to_rnn_forward.5} parent=0 // pred_fallthru
    _

// kernel: cnn_to_rnn_forward.4
$region0: #{cnn_to_rnn_forward.4}
  #allocation0 [shape = 'u32[]', space=smem, size = 0x4, offset = 0x4, fixed_abs, tag = 'smem constant byte address 0x4 - core index']
  #allocation1 [shape = 'u32[72,128]{1,0:T(1,128)}', space=vmem, size = 0x9000, scoped, tag = 'internal scratch']
  %s0 = inlined_call_operand.vmem [shape: bf16[512,36], index: 0, kind: input, shape index: {}]
  %s1 = inlined_call_operand.vmem [shape: bf16[36,32], index: 1, kind: input, shape index: {}]
  %s2 = inlined_call_operand.vmem [shape: f32[1,32], index: 2, kind: input, shape index: {}]
  %s3 = inlined_call_operand.vmem [shape: bf16[32,32], index: 3, kind: input, shape index: {}]
  %s4 = inlined_call_operand.vmem [shape: bf16[512,32], index: 4, kind: output, shape index: {0}]
  %s5 = inlined_call_operand.vmem [shape: bf16[512,32], index: 5, kind: output, shape index: {1}]
  %6 = xla_tuple %s4, %s5
  %s7 = sld [smem:[#allocation0]]
  $region34: #{cnn_to_rnn_forward.4} parent=0
    _
  %s9 = ssub.s32 1, %s7
  %s10 = scalar_select 0, %s9, %s7
  // Predicated region
  $region2: #{cnn_to_rnn_forward.4} parent=0 // pred_check
    _
  $region3: #{cnn_to_rnn_forward.4} parent=0 // pred_check_branch
    %12 = sbr.rel (0) target = $region5
  $region4: #{cnn_to_rnn_forward.4} parent=0 // pred_region
    _
  $region5: #{cnn_to_rnn_forward.4} parent=0 // pred_fallthru
    _
  // Predicated region
  $region6: #{cnn_to_rnn_forward.4} parent=0 // pred_check
    _
  $region7: #{cnn_to_rnn_forward.4} parent=0 // pred_check_branch
    %14 = sbr.rel (0) target = $region9
  $region8: #{cnn_to_rnn_forward.4} parent=0 // pred_region
    _
  $region9: #{cnn_to_rnn_forward.4} parent=0 // pred_fallthru
    _
  // Predicated region
  $region10: #{cnn_to_rnn_forward.4} parent=0 // pred_check
    _
  $region11: #{cnn_to_rnn_forward.4} parent=0 // pred_check_branch
    %16 = sbr.rel (0) target = $region13
  $region12: #{cnn_to_rnn_forward.4} parent=0 // pred_region
    _
  $region13: #{cnn_to_rnn_forward.4} parent=0 // pred_fallthru
    _
  // Predicated region
  $region14: #{cnn_to_rnn_forward.4} parent=0 // pred_check
    _
  $region15: #{cnn_to_rnn_forward.4} parent=0 // pred_check_branch
    %18 = sbr.rel (0) target = $region17
  $region16: #{cnn_to_rnn_forward.4} parent=0 // pred_region
    _
  $region17: #{cnn_to_rnn_forward.4} parent=0 // pred_fallthru
    _
  %v20 = vld [vmem:[%s0] sm:$0xf]
  %v21 = vld [vmem:[%s0 + $0x4] sm:$0xf]
  %v22 = vld [vmem:[%s0 + $0x8] sm:$0xf]
  %v23 = vld [vmem:[%s0 + $0xc] sm:$0xf]
  %v24 = vld [vmem:[%s0 + $0x10] sm:$0xf]
  %v25 = vld [vmem:[%s0 + $0x14] sm:$0xf]
  %v26 = vld [vmem:[%s0 + $0x18] sm:$0xf]
  %v27 = vld [vmem:[%s0 + $0x1c] sm:$0xf]
  %v28 = vld [vmem:[%s0 + $0x20] sm:$0xf]
  %v29 = vld [vmem:[%s0 + $0x24] sm:$0xf]
  %v30 = vld [vmem:[%s0 + $0x28] sm:$0xf]
  %v31 = vld [vmem:[%s0 + $0x2c] sm:$0xf]
  %v32 = vld [vmem:[%s0 + $0x30] sm:$0xf]
  %v33 = vld [vmem:[%s0 + $0x34] sm:$0xf]
  %v34 = vld [vmem:[%s0 + $0x38] sm:$0xf]
  %v35 = vld [vmem:[%s0 + $0x3c] sm:$0xf]
  %v36 = vld [vmem:[%s0 + $0x40] sm:$0xf]
  %v37 = vld [vmem:[%s0 + $0x44] sm:$0xf]
  %v38 = vld [vmem:[%s0 + $0x48] sm:$0xf]
  %v39 = vld [vmem:[%s0 + $0x4c] sm:$0xf]
  %v40 = vld [vmem:[%s0 + $0x50] sm:$0xf]
  %v41 = vld [vmem:[%s0 + $0x54] sm:$0xf]
  %v42 = vld [vmem:[%s0 + $0x58] sm:$0xf]
  %v43 = vld [vmem:[%s0 + $0x5c] sm:$0xf]
  %v44 = vld [vmem:[%s0 + $0x60] sm:$0xf]
  %v45 = vld [vmem:[%s0 + $0x64] sm:$0xf]
  %v46 = vld [vmem:[%s0 + $0x68] sm:$0xf]
  %v47 = vld [vmem:[%s0 + $0x6c] sm:$0xf]
  %v48 = vld [vmem:[%s0 + $0x70] sm:$0xf]
  %v49 = vld [vmem:[%s0 + $0x74] sm:$0xf]
  %v50 = vld [vmem:[%s0 + $0x78] sm:$0xf]
  %v51 = vld [vmem:[%s0 + $0x7c] sm:$0xf]
  %v52 = vld [vmem:[%s0 + $0x80] sm:$0xf]
  %v53 = vld [vmem:[%s0 + $0x84] sm:$0xf]
  %v54 = vld [vmem:[%s0 + $0x88] sm:$0xf]
  %v55 = vld [vmem:[%s0 + $0x8c] sm:$0xf]
  %v56 = vld [vmem:[%s0 + $0x90] sm:$0xf]
  %v57 = vld [vmem:[%s0 + $0x94] sm:$0xf]
  %v58 = vld [vmem:[%s0 + $0x98] sm:$0xf]
  %v59 = vld [vmem:[%s0 + $0x9c] sm:$0xf]
  %v60 = vld [vmem:[%s0 + $0xa0] sm:$0xf]
  %v61 = vld [vmem:[%s0 + $0xa4] sm:$0xf]
  %v62 = vld [vmem:[%s0 + $0xa8] sm:$0xf]
  %v63 = vld [vmem:[%s0 + $0xac] sm:$0xf]
  %v64 = vld [vmem:[%s0 + $0xb0] sm:$0xf]
  %v65 = vld [vmem:[%s0 + $0xb4] sm:$0xf]
  %v66 = vld [vmem:[%s0 + $0xb8] sm:$0xf]
  %v67 = vld [vmem:[%s0 + $0xbc] sm:$0xf]
  %v68 = vld [vmem:[%s0 + $0xc0] sm:$0xf]
  %v69 = vld [vmem:[%s0 + $0xc4] sm:$0xf]
  %v70 = vld [vmem:[%s0 + $0xc8] sm:$0xf]
  %v71 = vld [vmem:[%s0 + $0xcc] sm:$0xf]
  %v72 = vld [vmem:[%s0 + $0xd0] sm:$0xf]
  %v73 = vld [vmem:[%s0 + $0xd4] sm:$0xf]
  %v74 = vld [vmem:[%s0 + $0xd8] sm:$0xf]
  %v75 = vld [vmem:[%s0 + $0xdc] sm:$0xf]
  %v76 = vld [vmem:[%s0 + $0xe0] sm:$0xf]
  %v77 = vld [vmem:[%s0 + $0xe4] sm:$0xf]
  %v78 = vld [vmem:[%s0 + $0xe8] sm:$0xf]
  %v79 = vld [vmem:[%s0 + $0xec] sm:$0xf]
  %v80 = vld [vmem:[%s0 + $0xf0] sm:$0xf]
  %v81 = vld [vmem:[%s0 + $0xf4] sm:$0xf]
  %v82 = vld [vmem:[%s0 + $0xf8] sm:$0xf]
  %v83 = vld [vmem:[%s0 + $0xfc] sm:$0xf]
  %v84 = vld [vmem:[%s1] sm:$0xf]
  %v85 = vld [vmem:[%s1 + $0x4] sm:$0xf]
  %v86 = vld [vmem:[%s1 + $0x8] sm:$0xf]
  %v87 = vld [vmem:[%s1 + $0xc] sm:$0xf]
  %v88 = vld [vmem:[%s1 + $0x10] sm:$0x3]
  %v89 = vld [vmem:[%s2] sm:$0x1]
  %v91 = vperm.slane %v89, 0
  %v157 = vunpack.c.l.b16 %v20
  %v158 = vunpack.c.l.b16 %v21
  %v159 = vunpack.c.l.b16 %v22
  %v160 = vunpack.c.l.b16 %v23
  %v161 = vunpack.c.l.b16 %v24
  %v162 = vunpack.c.l.b16 %v25
  %v163 = vunpack.c.l.b16 %v26
  %v164 = vunpack.c.l.b16 %v27
  %v165 = vunpack.c.l.b16 %v28
  %v166 = vunpack.c.l.b16 %v29
  %v167 = vunpack.c.l.b16 %v30
  %v168 = vunpack.c.l.b16 %v31
  %v169 = vunpack.c.l.b16 %v32
  %v170 = vunpack.c.l.b16 %v33
  %v171 = vunpack.c.l.b16 %v34
  %v172 = vunpack.c.l.b16 %v35
  %v173 = vunpack.c.l.b16 %v36
  %v174 = vunpack.c.l.b16 %v37
  %v175 = vunpack.c.l.b16 %v38
  %v176 = vunpack.c.l.b16 %v39
  %v177 = vunpack.c.l.b16 %v40
  %v178 = vunpack.c.l.b16 %v41
  %v179 = vunpack.c.l.b16 %v42
  %v180 = vunpack.c.l.b16 %v43
  %v181 = vunpack.c.l.b16 %v44
  %v182 = vunpack.c.l.b16 %v45
  %v183 = vunpack.c.l.b16 %v46
  %v184 = vunpack.c.l.b16 %v47
  %v185 = vunpack.c.l.b16 %v48
  %v186 = vunpack.c.l.b16 %v49
  %v187 = vunpack.c.l.b16 %v50
  %v188 = vunpack.c.l.b16 %v51
  %v189 = vunpack.c.l.b16 %v52
  %v190 = vunpack.c.l.b16 %v53
  %v191 = vunpack.c.l.b16 %v54
  %v192 = vunpack.c.l.b16 %v55
  %v193 = vunpack.c.l.b16 %v56
  %v194 = vunpack.c.l.b16 %v57
  %v195 = vunpack.c.l.b16 %v58
  %v196 = vunpack.c.l.b16 %v59
  %v197 = vunpack.c.l.b16 %v60
  %v198 = vunpack.c.l.b16 %v61
  %v199 = vunpack.c.l.b16 %v62
  %v200 = vunpack.c.l.b16 %v63
  %v201 = vunpack.c.l.b16 %v64
  %v202 = vunpack.c.l.b16 %v65
  %v203 = vunpack.c.l.b16 %v66
  %v204 = vunpack.c.l.b16 %v67
  %v205 = vunpack.c.l.b16 %v68
  %v206 = vunpack.c.l.b16 %v69
  %v207 = vunpack.c.l.b16 %v70
  %v208 = vunpack.c.l.b16 %v71
  %v209 = vunpack.c.l.b16 %v72
  %v210 = vunpack.c.l.b16 %v73
  %v211 = vunpack.c.l.b16 %v74
  %v212 = vunpack.c.l.b16 %v75
  %v213 = vunpack.c.l.b16 %v76
  %v214 = vunpack.c.l.b16 %v77
  %v215 = vunpack.c.l.b16 %v78
  %v216 = vunpack.c.l.b16 %v79
  %v217 = vunpack.c.l.b16 %v80
  %v218 = vunpack.c.l.b16 %v81
  %v219 = vunpack.c.l.b16 %v82
  %v220 = vunpack.c.l.b16 %v83
  %v221 = vpack.c.b16 %v158, %v157
  %v222 = vpack.c.b16 %v160, %v159
  %v223 = vpack.c.b16 %v162, %v161
  %v224 = vpack.c.b16 %v164, %v163
  %v225 = vpack.c.b16 %v166, %v165
  %v226 = vpack.c.b16 %v168, %v167
  %v227 = vpack.c.b16 %v170, %v169
  %v228 = vpack.c.b16 %v172, %v171
  %v229 = vpack.c.b16 %v174, %v173
  %v230 = vpack.c.b16 %v176, %v175
  %v231 = vpack.c.b16 %v178, %v177
  %v232 = vpack.c.b16 %v180, %v179
  %v233 = vpack.c.b16 %v182, %v181
  %v234 = vpack.c.b16 %v184, %v183
  %v235 = vpack.c.b16 %v186, %v185
  %v236 = vpack.c.b16 %v188, %v187
  %v237 = vpack.c.b16 %v190, %v189
  %v238 = vpack.c.b16 %v192, %v191
  %v239 = vpack.c.b16 %v194, %v193
  %v240 = vpack.c.b16 %v196, %v195
  %v241 = vpack.c.b16 %v198, %v197
  %v242 = vpack.c.b16 %v200, %v199
  %v243 = vpack.c.b16 %v202, %v201
  %v244 = vpack.c.b16 %v204, %v203
  %v245 = vpack.c.b16 %v206, %v205
  %v246 = vpack.c.b16 %v208, %v207
  %v247 = vpack.c.b16 %v210, %v209
  %v248 = vpack.c.b16 %v212, %v211
  %v249 = vpack.c.b16 %v214, %v213
  %v250 = vpack.c.b16 %v216, %v215
  %v251 = vpack.c.b16 %v218, %v217
  %v252 = vpack.c.b16 %v220, %v219
  %v258 = vunpack.c.l.b16 %v84
  %v259 = vunpack.c.l.b16 %v85
  %v260 = vunpack.c.l.b16 %v86
  %v261 = vunpack.c.l.b16 %v87
  %v262 = vunpack.c.l.b16 %v88
  %v263 = vpack.c.b16 %v259, %v258
  %v264 = vpack.c.b16 %v261, %v260
  %v265 = vpack.c.b16 %v262, %v262
  %vm268 = vcmask 293888
  %v270 = vsel %vm268, %v221, 0
  %v273 = vsel %vm268, %v222, 0
  %v276 = vsel %vm268, %v223, 0
  %v279 = vsel %vm268, %v224, 0
  %v282 = vsel %vm268, %v225, 0
  %v285 = vsel %vm268, %v226, 0
  %v288 = vsel %vm268, %v227, 0
  %v291 = vsel %vm268, %v228, 0
  %v294 = vsel %vm268, %v229, 0
  %v297 = vsel %vm268, %v230, 0
  %v300 = vsel %vm268, %v231, 0
  %v303 = vsel %vm268, %v232, 0
  %v306 = vsel %vm268, %v233, 0
  %v309 = vsel %vm268, %v234, 0
  %v312 = vsel %vm268, %v235, 0
  %v315 = vsel %vm268, %v236, 0
  %v318 = vsel %vm268, %v237, 0
  %v321 = vsel %vm268, %v238, 0
  %v324 = vsel %vm268, %v239, 0
  %v327 = vsel %vm268, %v240, 0
  %v330 = vsel %vm268, %v241, 0
  %v333 = vsel %vm268, %v242, 0
  %v336 = vsel %vm268, %v243, 0
  %v339 = vsel %vm268, %v244, 0
  %v342 = vsel %vm268, %v245, 0
  %v345 = vsel %vm268, %v246, 0
  %v348 = vsel %vm268, %v247, 0
  %v351 = vsel %vm268, %v248, 0
  %v354 = vsel %vm268, %v249, 0
  %v357 = vsel %vm268, %v250, 0
  %v360 = vsel %vm268, %v251, 0
  %v363 = vsel %vm268, %v252, 0
  %vm365 = vcmask 1041408
  %v367 = vsel %vm365, %v265, 0
  %369 = vmatpush.bf16.msra.mxu0 0
  %370 = vmatpush.bf16.msra.mxu0 0
  %371 = vmatpush.bf16.msra.mxu0 0
  %372 = vmatpush.bf16.msra.mxu0 0
  %373 = vmatpush.bf16.msra.mxu0 0
  %374 = vmatpush.bf16.msra.mxu0 %v367
  %375 = vmatpush.bf16.msra.mxu0 %v264
  %376 = vmatpush.bf16.msra.mxu0 %v263
  %377 = vmatmul.bf16.gmra.mxu0 %v270
  %v378 = vpop.f32.mrf.mxu0
  %v379 = vadd.f32 %v91, %v378
  %v380 = vpop.f32.mrf.mxu0
  %v381 = vadd.f32 %v91, %v380
  %382 = vmatmul.bf16.gmra.mxu0 %v273
  %v383 = vpop.f32.mrf.mxu0
  %v384 = vadd.f32 %v91, %v383
  %v385 = vpop.f32.mrf.mxu0
  %v386 = vadd.f32 %v91, %v385
  %387 = vmatmul.bf16.gmra.mxu0 %v276
  %v388 = vpop.f32.mrf.mxu0
  %v389 = vadd.f32 %v91, %v388
  %v390 = vpop.f32.mrf.mxu0
  %v391 = vadd.f32 %v91, %v390
  %392 = vmatmul.bf16.gmra.mxu0 %v279
  %v393 = vpop.f32.mrf.mxu0
  %v394 = vadd.f32 %v91, %v393
  %v395 = vpop.f32.mrf.mxu0
  %v396 = vadd.f32 %v91, %v395
  %397 = vmatmul.bf16.gmra.mxu0 %v282
  %v398 = vpop.f32.mrf.mxu0
  %v399 = vadd.f32 %v91, %v398
  %v400 = vpop.f32.mrf.mxu0
  %v401 = vadd.f32 %v91, %v400
  %402 = vmatmul.bf16.gmra.mxu0 %v285
  %v403 = vpop.f32.mrf.mxu0
  %v404 = vadd.f32 %v91, %v403
  %v405 = vpop.f32.mrf.mxu0
  %v406 = vadd.f32 %v91, %v405
  %407 = vmatmul.bf16.gmra.mxu0 %v288
  %v408 = vpop.f32.mrf.mxu0
  %v409 = vadd.f32 %v91, %v408
  %v410 = vpop.f32.mrf.mxu0
  %v411 = vadd.f32 %v91, %v410
  %412 = vmatmul.bf16.gmra.mxu0 %v291
  %v413 = vpop.f32.mrf.mxu0
  %v414 = vadd.f32 %v91, %v413
  %v415 = vpop.f32.mrf.mxu0
  %v416 = vadd.f32 %v91, %v415
  %417 = vmatmul.bf16.gmra.mxu0 %v294
  %v418 = vpop.f32.mrf.mxu0
  %v419 = vadd.f32 %v91, %v418
  %v420 = vpop.f32.mrf.mxu0
  %v421 = vadd.f32 %v91, %v420
  %422 = vmatmul.bf16.gmra.mxu0 %v297
  %v423 = vpop.f32.mrf.mxu0
  %v424 = vadd.f32 %v91, %v423
  %v425 = vpop.f32.mrf.mxu0
  %v426 = vadd.f32 %v91, %v425
  %427 = vmatmul.bf16.gmra.mxu0 %v300
  %v428 = vpop.f32.mrf.mxu0
  %v429 = vadd.f32 %v91, %v428
  %v430 = vpop.f32.mrf.mxu0
  %v431 = vadd.f32 %v91, %v430
  %432 = vmatmul.bf16.gmra.mxu0 %v303
  %v433 = vpop.f32.mrf.mxu0
  %v434 = vadd.f32 %v91, %v433
  %v435 = vpop.f32.mrf.mxu0
  %v436 = vadd.f32 %v91, %v435
  %437 = vmatmul.bf16.gmra.mxu0 %v306
  %v438 = vpop.f32.mrf.mxu0
  %v439 = vadd.f32 %v91, %v438
  %v440 = vpop.f32.mrf.mxu0
  %v441 = vadd.f32 %v91, %v440
  %442 = vmatmul.bf16.gmra.mxu0 %v309
  %v443 = vpop.f32.mrf.mxu0
  %v444 = vadd.f32 %v91, %v443
  %v445 = vpop.f32.mrf.mxu0
  %v446 = vadd.f32 %v91, %v445
  %447 = vmatmul.bf16.gmra.mxu0 %v312
  %v448 = vpop.f32.mrf.mxu0
  %v449 = vadd.f32 %v91, %v448
  %v450 = vpop.f32.mrf.mxu0
  %v451 = vadd.f32 %v91, %v450
  %452 = vmatmul.bf16.gmra.mxu0 %v315
  %v453 = vpop.f32.mrf.mxu0
  %v454 = vadd.f32 %v91, %v453
  %v455 = vpop.f32.mrf.mxu0
  %v456 = vadd.f32 %v91, %v455
  %457 = vmatmul.bf16.gmra.mxu0 %v318
  %v458 = vpop.f32.mrf.mxu0
  %v459 = vadd.f32 %v91, %v458
  %v460 = vpop.f32.mrf.mxu0
  %v461 = vadd.f32 %v91, %v460
  %462 = vmatmul.bf16.gmra.mxu0 %v321
  %v463 = vpop.f32.mrf.mxu0
  %v464 = vadd.f32 %v91, %v463
  %v465 = vpop.f32.mrf.mxu0
  %v466 = vadd.f32 %v91, %v465
  %467 = vmatmul.bf16.gmra.mxu0 %v324
  %v468 = vpop.f32.mrf.mxu0
  %v469 = vadd.f32 %v91, %v468
  %v470 = vpop.f32.mrf.mxu0
  %v471 = vadd.f32 %v91, %v470
  %472 = vmatmul.bf16.gmra.mxu0 %v327
  %v473 = vpop.f32.mrf.mxu0
  %v474 = vadd.f32 %v91, %v473
  %v475 = vpop.f32.mrf.mxu0
  %v476 = vadd.f32 %v91, %v475
  %477 = vmatmul.bf16.gmra.mxu0 %v330
  %v478 = vpop.f32.mrf.mxu0
  %v479 = vadd.f32 %v91, %v478
  %v480 = vpop.f32.mrf.mxu0
  %v481 = vadd.f32 %v91, %v480
  %482 = vmatmul.bf16.gmra.mxu0 %v333
  %v483 = vpop.f32.mrf.mxu0
  %v484 = vadd.f32 %v91, %v483
  %v485 = vpop.f32.mrf.mxu0
  %v486 = vadd.f32 %v91, %v485
  %487 = vmatmul.bf16.gmra.mxu0 %v336
  %v488 = vpop.f32.mrf.mxu0
  %v489 = vadd.f32 %v91, %v488
  %v490 = vpop.f32.mrf.mxu0
  %v491 = vadd.f32 %v91, %v490
  %492 = vmatmul.bf16.gmra.mxu0 %v339
  %v493 = vpop.f32.mrf.mxu0
  %v494 = vadd.f32 %v91, %v493
  %v495 = vpop.f32.mrf.mxu0
  %v496 = vadd.f32 %v91, %v495
  %497 = vmatmul.bf16.gmra.mxu0 %v342
  %v498 = vpop.f32.mrf.mxu0
  %v499 = vadd.f32 %v91, %v498
  %v500 = vpop.f32.mrf.mxu0
  %v501 = vadd.f32 %v91, %v500
  %502 = vmatmul.bf16.gmra.mxu0 %v345
  %v503 = vpop.f32.mrf.mxu0
  %v504 = vadd.f32 %v91, %v503
  %v505 = vpop.f32.mrf.mxu0
  %v506 = vadd.f32 %v91, %v505
  %507 = vmatmul.bf16.gmra.mxu0 %v348
  %v508 = vpop.f32.mrf.mxu0
  %v509 = vadd.f32 %v91, %v508
  %v510 = vpop.f32.mrf.mxu0
  %v511 = vadd.f32 %v91, %v510
  %512 = vmatmul.bf16.gmra.mxu0 %v351
  %v513 = vpop.f32.mrf.mxu0
  %v514 = vadd.f32 %v91, %v513
  %v515 = vpop.f32.mrf.mxu0
  %v516 = vadd.f32 %v91, %v515
  %517 = vmatmul.bf16.gmra.mxu0 %v354
  %v518 = vpop.f32.mrf.mxu0
  %v519 = vadd.f32 %v91, %v518
  %v520 = vpop.f32.mrf.mxu0
  %v521 = vadd.f32 %v91, %v520
  %522 = vmatmul.bf16.gmra.mxu0 %v357
  %v523 = vpop.f32.mrf.mxu0
  %v524 = vadd.f32 %v91, %v523
  %v525 = vpop.f32.mrf.mxu0
  %v526 = vadd.f32 %v91, %v525
  %527 = vmatmul.bf16.gmra.mxu0 %v360
  %v528 = vpop.f32.mrf.mxu0
  %v529 = vadd.f32 %v91, %v528
  %v530 = vpop.f32.mrf.mxu0
  %v531 = vadd.f32 %v91, %v530
  %532 = vmatmul.bf16.gmra.mxu0 %v363
  %v533 = vpop.f32.mrf.mxu0
  %v534 = vadd.f32 %v91, %v533
  %v535 = vpop.f32.mrf.mxu0
  %v536 = vadd.f32 %v91, %v535
  %537 = vdwg.mxu0
  %v538 = vmax.f32 %v379, 0.0
  %v539 = vmax.f32 %v381, 0.0
  %v540 = vmax.f32 %v384, 0.0
  %v541 = vmax.f32 %v386, 0.0
  %v542 = vmax.f32 %v389, 0.0
  %v543 = vmax.f32 %v391, 0.0
  %v544 = vmax.f32 %v394, 0.0
  %v545 = vmax.f32 %v396, 0.0
  %v546 = vmax.f32 %v399, 0.0
  %v547 = vmax.f32 %v401, 0.0
  %v548 = vmax.f32 %v404, 0.0
  %v549 = vmax.f32 %v406, 0.0
  %v550 = vmax.f32 %v409, 0.0
  %v551 = vmax.f32 %v411, 0.0
  %v552 = vmax.f32 %v414, 0.0
  %v553 = vmax.f32 %v416, 0.0
  %v554 = vmax.f32 %v419, 0.0
  %v555 = vmax.f32 %v421, 0.0
  %v556 = vmax.f32 %v424, 0.0
  %v557 = vmax.f32 %v426, 0.0
  %v558 = vmax.f32 %v429, 0.0
  %v559 = vmax.f32 %v431, 0.0
  %v560 = vmax.f32 %v434, 0.0
  %v561 = vmax.f32 %v436, 0.0
  %v562 = vmax.f32 %v439, 0.0
  %v563 = vmax.f32 %v441, 0.0
  %v564 = vmax.f32 %v444, 0.0
  %v565 = vmax.f32 %v446, 0.0
  %v566 = vmax.f32 %v449, 0.0
  %v567 = vmax.f32 %v451, 0.0
  %v568 = vmax.f32 %v454, 0.0
  %v569 = vmax.f32 %v456, 0.0
  %v570 = vmax.f32 %v459, 0.0
  %v571 = vmax.f32 %v461, 0.0
  %v572 = vmax.f32 %v464, 0.0
  %v573 = vmax.f32 %v466, 0.0
  %v574 = vmax.f32 %v469, 0.0
  %v575 = vmax.f32 %v471, 0.0
  %v576 = vmax.f32 %v474, 0.0
  %v577 = vmax.f32 %v476, 0.0
  %v578 = vmax.f32 %v479, 0.0
  %v579 = vmax.f32 %v481, 0.0
  %v580 = vmax.f32 %v484, 0.0
  %v581 = vmax.f32 %v486, 0.0
  %v582 = vmax.f32 %v489, 0.0
  %v583 = vmax.f32 %v491, 0.0
  %v584 = vmax.f32 %v494, 0.0
  %v585 = vmax.f32 %v496, 0.0
  %v586 = vmax.f32 %v499, 0.0
  %v587 = vmax.f32 %v501, 0.0
  %v588 = vmax.f32 %v504, 0.0
  %v589 = vmax.f32 %v506, 0.0
  %v590 = vmax.f32 %v509, 0.0
  %v591 = vmax.f32 %v511, 0.0
  %v592 = vmax.f32 %v514, 0.0
  %v593 = vmax.f32 %v516, 0.0
  %v594 = vmax.f32 %v519, 0.0
  %v595 = vmax.f32 %v521, 0.0
  %v596 = vmax.f32 %v524, 0.0
  %v597 = vmax.f32 %v526, 0.0
  %v598 = vmax.f32 %v529, 0.0
  %v599 = vmax.f32 %v531, 0.0
  %v600 = vmax.f32 %v534, 0.0
  %v601 = vmax.f32 %v536, 0.0
  %v602 = vpack.c.bf16 %v538, %v538
  %v603 = vpack.c.bf16 %v539, %v539
  %v604 = vpack.c.bf16 %v540, %v540
  %v605 = vpack.c.bf16 %v541, %v541
  %v606 = vpack.c.bf16 %v542, %v542
  %v607 = vpack.c.bf16 %v543, %v543
  %v608 = vpack.c.bf16 %v544, %v544
  %v609 = vpack.c.bf16 %v545, %v545
  %v610 = vpack.c.bf16 %v546, %v546
  %v611 = vpack.c.bf16 %v547, %v547
  %v612 = vpack.c.bf16 %v548, %v548
  %v613 = vpack.c.bf16 %v549, %v549
  %v614 = vpack.c.bf16 %v550, %v550
  %v615 = vpack.c.bf16 %v551, %v551
  %v616 = vpack.c.bf16 %v552, %v552
  %v617 = vpack.c.bf16 %v553, %v553
  %v618 = vpack.c.bf16 %v554, %v554
  %v619 = vpack.c.bf16 %v555, %v555
  %v620 = vpack.c.bf16 %v556, %v556
  %v621 = vpack.c.bf16 %v557, %v557
  %v622 = vpack.c.bf16 %v558, %v558
  %v623 = vpack.c.bf16 %v559, %v559
  %v624 = vpack.c.bf16 %v560, %v560
  %v625 = vpack.c.bf16 %v561, %v561
  %v626 = vpack.c.bf16 %v562, %v562
  %v627 = vpack.c.bf16 %v563, %v563
  %v628 = vpack.c.bf16 %v564, %v564
  %v629 = vpack.c.bf16 %v565, %v565
  %v630 = vpack.c.bf16 %v566, %v566
  %v631 = vpack.c.bf16 %v567, %v567
  %v632 = vpack.c.bf16 %v568, %v568
  %v633 = vpack.c.bf16 %v569, %v569
  %v634 = vpack.c.bf16 %v570, %v570
  %v635 = vpack.c.bf16 %v571, %v571
  %v636 = vpack.c.bf16 %v572, %v572
  %v637 = vpack.c.bf16 %v573, %v573
  %v638 = vpack.c.bf16 %v574, %v574
  %v639 = vpack.c.bf16 %v575, %v575
  %v640 = vpack.c.bf16 %v576, %v576
  %v641 = vpack.c.bf16 %v577, %v577
  %v642 = vpack.c.bf16 %v578, %v578
  %v643 = vpack.c.bf16 %v579, %v579
  %v644 = vpack.c.bf16 %v580, %v580
  %v645 = vpack.c.bf16 %v581, %v581
  %v646 = vpack.c.bf16 %v582, %v582
  %v647 = vpack.c.bf16 %v583, %v583
  %v648 = vpack.c.bf16 %v584, %v584
  %v649 = vpack.c.bf16 %v585, %v585
  %v650 = vpack.c.bf16 %v586, %v586
  %v651 = vpack.c.bf16 %v587, %v587
  %v652 = vpack.c.bf16 %v588, %v588
  %v653 = vpack.c.bf16 %v589, %v589
  %v654 = vpack.c.bf16 %v590, %v590
  %v655 = vpack.c.bf16 %v591, %v591
  %v656 = vpack.c.bf16 %v592, %v592
  %v657 = vpack.c.bf16 %v593, %v593
  %v658 = vpack.c.bf16 %v594, %v594
  %v659 = vpack.c.bf16 %v595, %v595
  %v660 = vpack.c.bf16 %v596, %v596
  %v661 = vpack.c.bf16 %v597, %v597
  %v662 = vpack.c.bf16 %v598, %v598
  %v663 = vpack.c.bf16 %v599, %v599
  %v664 = vpack.c.bf16 %v600, %v600
  %v665 = vpack.c.bf16 %v601, %v601
  %vm666 = vcmask 257024
  %667 = vst.msk [vmem:[%s4] sm:$0xf] %vm666, %v602
  %668 = vst.msk [vmem:[%s4 + $0x4] sm:$0xf] %vm666, %v603
  %669 = vst.msk [vmem:[%s4 + $0x8] sm:$0xf] %vm666, %v604
  %670 = vst.msk [vmem:[%s4 + $0xc] sm:$0xf] %vm666, %v605
  %671 = vst.msk [vmem:[%s4 + $0x10] sm:$0xf] %vm666, %v606
  %672 = vst.msk [vmem:[%s4 + $0x14] sm:$0xf] %vm666, %v607
  %673 = vst.msk [vmem:[%s4 + $0x18] sm:$0xf] %vm666, %v608
  %674 = vst.msk [vmem:[%s4 + $0x1c] sm:$0xf] %vm666, %v609
  %675 = vst.msk [vmem:[%s4 + $0x20] sm:$0xf] %vm666, %v610
  %676 = vst.msk [vmem:[%s4 + $0x24] sm:$0xf] %vm666, %v611
  %677 = vst.msk [vmem:[%s4 + $0x28] sm:$0xf] %vm666, %v612
  %678 = vst.msk [vmem:[%s4 + $0x2c] sm:$0xf] %vm666, %v613
  %679 = vst.msk [vmem:[%s4 + $0x30] sm:$0xf] %vm666, %v614
  %680 = vst.msk [vmem:[%s4 + $0x34] sm:$0xf] %vm666, %v615
  %681 = vst.msk [vmem:[%s4 + $0x38] sm:$0xf] %vm666, %v616
  %682 = vst.msk [vmem:[%s4 + $0x3c] sm:$0xf] %vm666, %v617
  %683 = vst.msk [vmem:[%s4 + $0x40] sm:$0xf] %vm666, %v618
  %684 = vst.msk [vmem:[%s4 + $0x44] sm:$0xf] %vm666, %v619
  %685 = vst.msk [vmem:[%s4 + $0x48] sm:$0xf] %vm666, %v620
  %686 = vst.msk [vmem:[%s4 + $0x4c] sm:$0xf] %vm666, %v621
  %687 = vst.msk [vmem:[%s4 + $0x50] sm:$0xf] %vm666, %v622
  %688 = vst.msk [vmem:[%s4 + $0x54] sm:$0xf] %vm666, %v623
  %689 = vst.msk [vmem:[%s4 + $0x58] sm:$0xf] %vm666, %v624
  %690 = vst.msk [vmem:[%s4 + $0x5c] sm:$0xf] %vm666, %v625
  %691 = vst.msk [vmem:[%s4 + $0x60] sm:$0xf] %vm666, %v626
  %692 = vst.msk [vmem:[%s4 + $0x64] sm:$0xf] %vm666, %v627
  %693 = vst.msk [vmem:[%s4 + $0x68] sm:$0xf] %vm666, %v628
  %694 = vst.msk [vmem:[%s4 + $0x6c] sm:$0xf] %vm666, %v629
  %695 = vst.msk [vmem:[%s4 + $0x70] sm:$0xf] %vm666, %v630
  %696 = vst.msk [vmem:[%s4 + $0x74] sm:$0xf] %vm666, %v631
  %697 = vst.msk [vmem:[%s4 + $0x78] sm:$0xf] %vm666, %v632
  %698 = vst.msk [vmem:[%s4 + $0x7c] sm:$0xf] %vm666, %v633
  %699 = vst.msk [vmem:[%s4 + $0x80] sm:$0xf] %vm666, %v634
  %700 = vst.msk [vmem:[%s4 + $0x84] sm:$0xf] %vm666, %v635
  %701 = vst.msk [vmem:[%s4 + $0x88] sm:$0xf] %vm666, %v636
  %702 = vst.msk [vmem:[%s4 + $0x8c] sm:$0xf] %vm666, %v637
  %703 = vst.msk [vmem:[%s4 + $0x90] sm:$0xf] %vm666, %v638
  %704 = vst.msk [vmem:[%s4 + $0x94] sm:$0xf] %vm666, %v639
  %705 = vst.msk [vmem:[%s4 + $0x98] sm:$0xf] %vm666, %v640
  %706 = vst.msk [vmem:[%s4 + $0x9c] sm:$0xf] %vm666, %v641
  %707 = vst.msk [vmem:[%s4 + $0xa0] sm:$0xf] %vm666, %v642
  %708 = vst.msk [vmem:[%s4 + $0xa4] sm:$0xf] %vm666, %v643
  %709 = vst.msk [vmem:[%s4 + $0xa8] sm:$0xf] %vm666, %v644
  %710 = vst.msk [vmem:[%s4 + $0xac] sm:$0xf] %vm666, %v645
  %711 = vst.msk [vmem:[%s4 + $0xb0] sm:$0xf] %vm666, %v646
  %712 = vst.msk [vmem:[%s4 + $0xb4] sm:$0xf] %vm666, %v647
  %713 = vst.msk [vmem:[%s4 + $0xb8] sm:$0xf] %vm666, %v648
  %714 = vst.msk [vmem:[%s4 + $0xbc] sm:$0xf] %vm666, %v649
  %715 = vst.msk [vmem:[%s4 + $0xc0] sm:$0xf] %vm666, %v650
  %716 = vst.msk [vmem:[%s4 + $0xc4] sm:$0xf] %vm666, %v651
  %717 = vst.msk [vmem:[%s4 + $0xc8] sm:$0xf] %vm666, %v652
  %718 = vst.msk [vmem:[%s4 + $0xcc] sm:$0xf] %vm666, %v653
  %719 = vst.msk [vmem:[%s4 + $0xd0] sm:$0xf] %vm666, %v654
  %720 = vst.msk [vmem:[%s4 + $0xd4] sm:$0xf] %vm666, %v655
  %721 = vst.msk [vmem:[%s4 + $0xd8] sm:$0xf] %vm666, %v656
  %722 = vst.msk [vmem:[%s4 + $0xdc] sm:$0xf] %vm666, %v657
  %723 = vst.msk [vmem:[%s4 + $0xe0] sm:$0xf] %vm666, %v658
  %724 = vst.msk [vmem:[%s4 + $0xe4] sm:$0xf] %vm666, %v659
  %725 = vst.msk [vmem:[%s4 + $0xe8] sm:$0xf] %vm666, %v660
  %726 = vst.msk [vmem:[%s4 + $0xec] sm:$0xf] %vm666, %v661
  %727 = vst.msk [vmem:[%s4 + $0xf0] sm:$0xf] %vm666, %v662
  %728 = vst.msk [vmem:[%s4 + $0xf4] sm:$0xf] %vm666, %v663
  %729 = vst.msk [vmem:[%s4 + $0xf8] sm:$0xf] %vm666, %v664
  %730 = vst.msk [vmem:[%s4 + $0xfc] sm:$0xf] %vm666, %v665
  %v731 = vld [vmem:[%s3] sm:$0xf]
  %v732 = vld [vmem:[%s3 + $0x4] sm:$0xf]
  %v733 = vld [vmem:[%s3 + $0x8] sm:$0xf]
  %v734 = vld [vmem:[%s3 + $0xc] sm:$0xf]
  %v799 = vunpack.c.l.b16 %v602
  %v800 = vunpack.c.l.b16 %v603
  %v801 = vunpack.c.l.b16 %v604
  %v802 = vunpack.c.l.b16 %v605
  %v803 = vunpack.c.l.b16 %v606
  %v804 = vunpack.c.l.b16 %v607
  %v805 = vunpack.c.l.b16 %v608
  %v806 = vunpack.c.l.b16 %v609
  %v807 = vunpack.c.l.b16 %v610
  %v808 = vunpack.c.l.b16 %v611
  %v809 = vunpack.c.l.b16 %v612
  %v810 = vunpack.c.l.b16 %v613
  %v811 = vunpack.c.l.b16 %v614
  %v812 = vunpack.c.l.b16 %v615
  %v813 = vunpack.c.l.b16 %v616
  %v814 = vunpack.c.l.b16 %v617
  %v815 = vunpack.c.l.b16 %v618
  %v816 = vunpack.c.l.b16 %v619
  %v817 = vunpack.c.l.b16 %v620
  %v818 = vunpack.c.l.b16 %v621
  %v819 = vunpack.c.l.b16 %v622
  %v820 = vunpack.c.l.b16 %v623
  %v821 = vunpack.c.l.b16 %v624
  %v822 = vunpack.c.l.b16 %v625
  %v823 = vunpack.c.l.b16 %v626
  %v824 = vunpack.c.l.b16 %v627
  %v825 = vunpack.c.l.b16 %v628
  %v826 = vunpack.c.l.b16 %v629
  %v827 = vunpack.c.l.b16 %v630
  %v828 = vunpack.c.l.b16 %v631
  %v829 = vunpack.c.l.b16 %v632
  %v830 = vunpack.c.l.b16 %v633
  %v831 = vunpack.c.l.b16 %v634
  %v832 = vunpack.c.l.b16 %v635
  %v833 = vunpack.c.l.b16 %v636
  %v834 = vunpack.c.l.b16 %v637
  %v835 = vunpack.c.l.b16 %v638
  %v836 = vunpack.c.l.b16 %v639
  %v837 = vunpack.c.l.b16 %v640
  %v838 = vunpack.c.l.b16 %v641
  %v839 = vunpack.c.l.b16 %v642
  %v840 = vunpack.c.l.b16 %v643
  %v841 = vunpack.c.l.b16 %v644
  %v842 = vunpack.c.l.b16 %v645
  %v843 = vunpack.c.l.b16 %v646
  %v844 = vunpack.c.l.b16 %v647
  %v845 = vunpack.c.l.b16 %v648
  %v846 = vunpack.c.l.b16 %v649
  %v847 = vunpack.c.l.b16 %v650
  %v848 = vunpack.c.l.b16 %v651
  %v849 = vunpack.c.l.b16 %v652
  %v850 = vunpack.c.l.b16 %v653
  %v851 = vunpack.c.l.b16 %v654
  %v852 = vunpack.c.l.b16 %v655
  %v853 = vunpack.c.l.b16 %v656
  %v854 = vunpack.c.l.b16 %v657
  %v855 = vunpack.c.l.b16 %v658
  %v856 = vunpack.c.l.b16 %v659
  %v857 = vunpack.c.l.b16 %v660
  %v858 = vunpack.c.l.b16 %v661
  %v859 = vunpack.c.l.b16 %v662
  %v860 = vunpack.c.l.b16 %v663
  %v861 = vunpack.c.l.b16 %v664
  %v862 = vunpack.c.l.b16 %v665
  %v863 = vpack.c.b16 %v800, %v799
  %v864 = vpack.c.b16 %v802, %v801
  %v865 = vpack.c.b16 %v804, %v803
  %v866 = vpack.c.b16 %v806, %v805
  %v867 = vpack.c.b16 %v808, %v807
  %v868 = vpack.c.b16 %v810, %v809
  %v869 = vpack.c.b16 %v812, %v811
  %v870 = vpack.c.b16 %v814, %v813
  %v871 = vpack.c.b16 %v816, %v815
  %v872 = vpack.c.b16 %v818, %v817
  %v873 = vpack.c.b16 %v820, %v819
  %v874 = vpack.c.b16 %v822, %v821
  %v875 = vpack.c.b16 %v824, %v823
  %v876 = vpack.c.b16 %v826, %v825
  %v877 = vpack.c.b16 %v828, %v827
  %v878 = vpack.c.b16 %v830, %v829
  %v879 = vpack.c.b16 %v832, %v831
  %v880 = vpack.c.b16 %v834, %v833
  %v881 = vpack.c.b16 %v836, %v835
  %v882 = vpack.c.b16 %v838, %v837
  %v883 = vpack.c.b16 %v840, %v839
  %v884 = vpack.c.b16 %v842, %v841
  %v885 = vpack.c.b16 %v844, %v843
  %v886 = vpack.c.b16 %v846, %v845
  %v887 = vpack.c.b16 %v848, %v847
  %v888 = vpack.c.b16 %v850, %v849
  %v889 = vpack.c.b16 %v852, %v851
  %v890 = vpack.c.b16 %v854, %v853
  %v891 = vpack.c.b16 %v856, %v855
  %v892 = vpack.c.b16 %v858, %v857
  %v893 = vpack.c.b16 %v860, %v859
  %v894 = vpack.c.b16 %v862, %v861
  %v899 = vunpack.c.l.b16 %v731
  %v900 = vunpack.c.l.b16 %v732
  %v901 = vunpack.c.l.b16 %v733
  %v902 = vunpack.c.l.b16 %v734
  %v903 = vpack.c.b16 %v900, %v899
  %v904 = vpack.c.b16 %v902, %v901
  %vm907 = vcmask 261120
  %v909 = vsel %vm907, %v863, 0
  %v912 = vsel %vm907, %v864, 0
  %v915 = vsel %vm907, %v865, 0
  %v918 = vsel %vm907, %v866, 0
  %v921 = vsel %vm907, %v867, 0
  %v924 = vsel %vm907, %v868, 0
  %v927 = vsel %vm907, %v869, 0
  %v930 = vsel %vm907, %v870, 0
  %v933 = vsel %vm907, %v871, 0
  %v936 = vsel %vm907, %v872, 0
  %v939 = vsel %vm907, %v873, 0
  %v942 = vsel %vm907, %v874, 0
  %v945 = vsel %vm907, %v875, 0
  %v948 = vsel %vm907, %v876, 0
  %v951 = vsel %vm907, %v877, 0
  %v954 = vsel %vm907, %v878, 0
  %v957 = vsel %vm907, %v879, 0
  %v960 = vsel %vm907, %v880, 0
  %v963 = vsel %vm907, %v881, 0
  %v966 = vsel %vm907, %v882, 0
  %v969 = vsel %vm907, %v883, 0
  %v972 = vsel %vm907, %v884, 0
  %v975 = vsel %vm907, %v885, 0
  %v978 = vsel %vm907, %v886, 0
  %v981 = vsel %vm907, %v887, 0
  %v984 = vsel %vm907, %v888, 0
  %v987 = vsel %vm907, %v889, 0
  %v990 = vsel %vm907, %v890, 0
  %v993 = vsel %vm907, %v891, 0
  %v996 = vsel %vm907, %v892, 0
  %v999 = vsel %vm907, %v893, 0
  %v1002 = vsel %vm907, %v894, 0
  %1004 = vmatpush.bf16.msra.mxu0 0
  %1005 = vmatpush.bf16.msra.mxu0 0
  %1006 = vmatpush.bf16.msra.mxu0 0
  %1007 = vmatpush.bf16.msra.mxu0 0
  %1008 = vmatpush.bf16.msra.mxu0 0
  %1009 = vmatpush.bf16.msra.mxu0 0
  %1010 = vmatpush.bf16.msra.mxu0 %v904
  %1011 = vmatpush.bf16.msra.mxu0 %v903
  %1012 = vmatmul.bf16.gmra.mxu0 %v909
  %v1013 = vpop.f32.mrf.mxu0
  %v1014 = vadd.f32 0.0, %v1013
  %v1015 = vpop.f32.mrf.mxu0
  %v1016 = vadd.f32 0.0, %v1015
  %1017 = vmatmul.bf16.gmra.mxu0 %v912
  %v1018 = vpop.f32.mrf.mxu0
  %v1019 = vadd.f32 0.0, %v1018
  %v1020 = vpop.f32.mrf.mxu0
  %v1021 = vadd.f32 0.0, %v1020
  %1022 = vmatmul.bf16.gmra.mxu0 %v915
  %v1023 = vpop.f32.mrf.mxu0
  %v1024 = vadd.f32 0.0, %v1023
  %v1025 = vpop.f32.mrf.mxu0
  %v1026 = vadd.f32 0.0, %v1025
  %1027 = vmatmul.bf16.gmra.mxu0 %v918
  %v1028 = vpop.f32.mrf.mxu0
  %v1029 = vadd.f32 0.0, %v1028
  %v1030 = vpop.f32.mrf.mxu0
  %v1031 = vadd.f32 0.0, %v1030
  %1032 = vmatmul.bf16.gmra.mxu0 %v921
  %v1033 = vpop.f32.mrf.mxu0
  %v1034 = vadd.f32 0.0, %v1033
  %v1035 = vpop.f32.mrf.mxu0
  %v1036 = vadd.f32 0.0, %v1035
  %1037 = vmatmul.bf16.gmra.mxu0 %v924
  %v1038 = vpop.f32.mrf.mxu0
  %v1039 = vadd.f32 0.0, %v1038
  %v1040 = vpop.f32.mrf.mxu0
  %v1041 = vadd.f32 0.0, %v1040
  %1042 = vmatmul.bf16.gmra.mxu0 %v927
  %v1043 = vpop.f32.mrf.mxu0
  %v1044 = vadd.f32 0.0, %v1043
  %v1045 = vpop.f32.mrf.mxu0
  %v1046 = vadd.f32 0.0, %v1045
  %1047 = vmatmul.bf16.gmra.mxu0 %v930
  %v1048 = vpop.f32.mrf.mxu0
  %v1049 = vadd.f32 0.0, %v1048
  %v1050 = vpop.f32.mrf.mxu0
  %v1051 = vadd.f32 0.0, %v1050
  %1052 = vmatmul.bf16.gmra.mxu0 %v933
  %v1053 = vpop.f32.mrf.mxu0
  %v1054 = vadd.f32 0.0, %v1053
  %v1055 = vpop.f32.mrf.mxu0
  %v1056 = vadd.f32 0.0, %v1055
  %1057 = vmatmul.bf16.gmra.mxu0 %v936
  %v1058 = vpop.f32.mrf.mxu0
  %v1059 = vadd.f32 0.0, %v1058
  %v1060 = vpop.f32.mrf.mxu0
  %v1061 = vadd.f32 0.0, %v1060
  %1062 = vmatmul.bf16.gmra.mxu0 %v939
  %v1063 = vpop.f32.mrf.mxu0
  %v1064 = vadd.f32 0.0, %v1063
  %v1065 = vpop.f32.mrf.mxu0
  %v1066 = vadd.f32 0.0, %v1065
  %1067 = vmatmul.bf16.gmra.mxu0 %v942
  %v1068 = vpop.f32.mrf.mxu0
  %v1069 = vadd.f32 0.0, %v1068
  %v1070 = vpop.f32.mrf.mxu0
  %v1071 = vadd.f32 0.0, %v1070
  %1072 = vmatmul.bf16.gmra.mxu0 %v945
  %v1073 = vpop.f32.mrf.mxu0
  %v1074 = vadd.f32 0.0, %v1073
  %v1075 = vpop.f32.mrf.mxu0
  %v1076 = vadd.f32 0.0, %v1075
  %1077 = vmatmul.bf16.gmra.mxu0 %v948
  %v1078 = vpop.f32.mrf.mxu0
  %v1079 = vadd.f32 0.0, %v1078
  %v1080 = vpop.f32.mrf.mxu0
  %v1081 = vadd.f32 0.0, %v1080
  %1082 = vmatmul.bf16.gmra.mxu0 %v951
  %v1083 = vpop.f32.mrf.mxu0
  %v1084 = vadd.f32 0.0, %v1083
  %v1085 = vpop.f32.mrf.mxu0
  %v1086 = vadd.f32 0.0, %v1085
  %1087 = vmatmul.bf16.gmra.mxu0 %v954
  %v1088 = vpop.f32.mrf.mxu0
  %v1089 = vadd.f32 0.0, %v1088
  %v1090 = vpop.f32.mrf.mxu0
  %v1091 = vadd.f32 0.0, %v1090
  %1092 = vmatmul.bf16.gmra.mxu0 %v957
  %v1093 = vpop.f32.mrf.mxu0
  %v1094 = vadd.f32 0.0, %v1093
  %v1095 = vpop.f32.mrf.mxu0
  %v1096 = vadd.f32 0.0, %v1095
  %1097 = vmatmul.bf16.gmra.mxu0 %v960
  %v1098 = vpop.f32.mrf.mxu0
  %v1099 = vadd.f32 0.0, %v1098
  %v1100 = vpop.f32.mrf.mxu0
  %v1101 = vadd.f32 0.0, %v1100
  %1102 = vmatmul.bf16.gmra.mxu0 %v963
  %v1103 = vpop.f32.mrf.mxu0
  %v1104 = vadd.f32 0.0, %v1103
  %v1105 = vpop.f32.mrf.mxu0
  %v1106 = vadd.f32 0.0, %v1105
  %1107 = vmatmul.bf16.gmra.mxu0 %v966
  %v1108 = vpop.f32.mrf.mxu0
  %v1109 = vadd.f32 0.0, %v1108
  %v1110 = vpop.f32.mrf.mxu0
  %v1111 = vadd.f32 0.0, %v1110
  %1112 = vmatmul.bf16.gmra.mxu0 %v969
  %v1113 = vpop.f32.mrf.mxu0
  %v1114 = vadd.f32 0.0, %v1113
  %v1115 = vpop.f32.mrf.mxu0
  %v1116 = vadd.f32 0.0, %v1115
  %1117 = vmatmul.bf16.gmra.mxu0 %v972
  %v1118 = vpop.f32.mrf.mxu0
  %v1119 = vadd.f32 0.0, %v1118
  %v1120 = vpop.f32.mrf.mxu0
  %v1121 = vadd.f32 0.0, %v1120
  %1122 = vmatmul.bf16.gmra.mxu0 %v975
  %v1123 = vpop.f32.mrf.mxu0
  %v1124 = vadd.f32 0.0, %v1123
  %v1125 = vpop.f32.mrf.mxu0
  %v1126 = vadd.f32 0.0, %v1125
  %1127 = vmatmul.bf16.gmra.mxu0 %v978
  %v1128 = vpop.f32.mrf.mxu0
  %v1129 = vadd.f32 0.0, %v1128
  %v1130 = vpop.f32.mrf.mxu0
  %v1131 = vadd.f32 0.0, %v1130
  %1132 = vmatmul.bf16.gmra.mxu0 %v981
  %v1133 = vpop.f32.mrf.mxu0
  %v1134 = vadd.f32 0.0, %v1133
  %v1135 = vpop.f32.mrf.mxu0
  %v1136 = vadd.f32 0.0, %v1135
  %1137 = vmatmul.bf16.gmra.mxu0 %v984
  %v1138 = vpop.f32.mrf.mxu0
  %v1139 = vadd.f32 0.0, %v1138
  %v1140 = vpop.f32.mrf.mxu0
  %v1141 = vadd.f32 0.0, %v1140
  %1142 = vmatmul.bf16.gmra.mxu0 %v987
  %v1143 = vpop.f32.mrf.mxu0
  %v1144 = vadd.f32 0.0, %v1143
  %v1145 = vpop.f32.mrf.mxu0
  %v1146 = vadd.f32 0.0, %v1145
  %1147 = vmatmul.bf16.gmra.mxu0 %v990
  %v1148 = vpop.f32.mrf.mxu0
  %v1149 = vadd.f32 0.0, %v1148
  %v1150 = vpop.f32.mrf.mxu0
  %v1151 = vadd.f32 0.0, %v1150
  %1152 = vmatmul.bf16.gmra.mxu0 %v993
  %v1153 = vpop.f32.mrf.mxu0
  %v1154 = vadd.f32 0.0, %v1153
  %v1155 = vpop.f32.mrf.mxu0
  %v1156 = vadd.f32 0.0, %v1155
  %1157 = vmatmul.bf16.gmra.mxu0 %v996
  %v1158 = vpop.f32.mrf.mxu0
  %v1159 = vadd.f32 0.0, %v1158
  %v1160 = vpop.f32.mrf.mxu0
  %v1161 = vadd.f32 0.0, %v1160
  %1162 = vmatmul.bf16.gmra.mxu0 %v999
  %v1163 = vpop.f32.mrf.mxu0
  %v1164 = vadd.f32 0.0, %v1163
  %v1165 = vpop.f32.mrf.mxu0
  %v1166 = vadd.f32 0.0, %v1165
  %1167 = vmatmul.bf16.gmra.mxu0 %v1002
  %v1168 = vpop.f32.mrf.mxu0
  %v1169 = vadd.f32 0.0, %v1168
  %v1170 = vpop.f32.mrf.mxu0
  %v1171 = vadd.f32 0.0, %v1170
  %1172 = vdwg.mxu0
  %v1173 = vpack.c.bf16 %v1014, %v1014
  %v1174 = vpack.c.bf16 %v1016, %v1016
  %v1175 = vpack.c.bf16 %v1019, %v1019
  %v1176 = vpack.c.bf16 %v1021, %v1021
  %v1177 = vpack.c.bf16 %v1024, %v1024
  %v1178 = vpack.c.bf16 %v1026, %v1026
  %v1179 = vpack.c.bf16 %v1029, %v1029
  %v1180 = vpack.c.bf16 %v1031, %v1031
  %v1181 = vpack.c.bf16 %v1034, %v1034
  %v1182 = vpack.c.bf16 %v1036, %v1036
  %v1183 = vpack.c.bf16 %v1039, %v1039
  %v1184 = vpack.c.bf16 %v1041, %v1041
  %v1185 = vpack.c.bf16 %v1044, %v1044
  %v1186 = vpack.c.bf16 %v1046, %v1046
  %v1187 = vpack.c.bf16 %v1049, %v1049
  %v1188 = vpack.c.bf16 %v1051, %v1051
  %v1189 = vpack.c.bf16 %v1054, %v1054
  %v1190 = vpack.c.bf16 %v1056, %v1056
  %v1191 = vpack.c.bf16 %v1059, %v1059
  %v1192 = vpack.c.bf16 %v1061, %v1061
  %v1193 = vpack.c.bf16 %v1064, %v1064
  %v1194 = vpack.c.bf16 %v1066, %v1066
  %v1195 = vpack.c.bf16 %v1069, %v1069
  %v1196 = vpack.c.bf16 %v1071, %v1071
  %v1197 = vpack.c.bf16 %v1074, %v1074
  %v1198 = vpack.c.bf16 %v1076, %v1076
  %v1199 = vpack.c.bf16 %v1079, %v1079
  %v1200 = vpack.c.bf16 %v1081, %v1081
  %v1201 = vpack.c.bf16 %v1084, %v1084
  %v1202 = vpack.c.bf16 %v1086, %v1086
  %v1203 = vpack.c.bf16 %v1089, %v1089
  %v1204 = vpack.c.bf16 %v1091, %v1091
  %v1205 = vpack.c.bf16 %v1094, %v1094
  %v1206 = vpack.c.bf16 %v1096, %v1096
  %v1207 = vpack.c.bf16 %v1099, %v1099
  %v1208 = vpack.c.bf16 %v1101, %v1101
  %v1209 = vpack.c.bf16 %v1104, %v1104
  %v1210 = vpack.c.bf16 %v1106, %v1106
  %v1211 = vpack.c.bf16 %v1109, %v1109
  %v1212 = vpack.c.bf16 %v1111, %v1111
  %v1213 = vpack.c.bf16 %v1114, %v1114
  %v1214 = vpack.c.bf16 %v1116, %v1116
  %v1215 = vpack.c.bf16 %v1119, %v1119
  %v1216 = vpack.c.bf16 %v1121, %v1121
  %v1217 = vpack.c.bf16 %v1124, %v1124
  %v1218 = vpack.c.bf16 %v1126, %v1126
  %v1219 = vpack.c.bf16 %v1129, %v1129
  %v1220 = vpack.c.bf16 %v1131, %v1131
  %v1221 = vpack.c.bf16 %v1134, %v1134
  %v1222 = vpack.c.bf16 %v1136, %v1136
  %v1223 = vpack.c.bf16 %v1139, %v1139
  %v1224 = vpack.c.bf16 %v1141, %v1141
  %v1225 = vpack.c.bf16 %v1144, %v1144
  %v1226 = vpack.c.bf16 %v1146, %v1146
  %v1227 = vpack.c.bf16 %v1149, %v1149
  %v1228 = vpack.c.bf16 %v1151, %v1151
  %v1229 = vpack.c.bf16 %v1154, %v1154
  %v1230 = vpack.c.bf16 %v1156, %v1156
  %v1231 = vpack.c.bf16 %v1159, %v1159
  %v1232 = vpack.c.bf16 %v1161, %v1161
  %v1233 = vpack.c.bf16 %v1164, %v1164
  %v1234 = vpack.c.bf16 %v1166, %v1166
  %v1235 = vpack.c.bf16 %v1169, %v1169
  %v1236 = vpack.c.bf16 %v1171, %v1171
  %1237 = vst.msk [vmem:[%s5] sm:$0xf] %vm666, %v1173
  %1238 = vst.msk [vmem:[%s5 + $0x4] sm:$0xf] %vm666, %v1174
  %1239 = vst.msk [vmem:[%s5 + $0x8] sm:$0xf] %vm666, %v1175
  %1240 = vst.msk [vmem:[%s5 + $0xc] sm:$0xf] %vm666, %v1176
  %1241 = vst.msk [vmem:[%s5 + $0x10] sm:$0xf] %vm666, %v1177
  %1242 = vst.msk [vmem:[%s5 + $0x14] sm:$0xf] %vm666, %v1178
  %1243 = vst.msk [vmem:[%s5 + $0x18] sm:$0xf] %vm666, %v1179
  %1244 = vst.msk [vmem:[%s5 + $0x1c] sm:$0xf] %vm666, %v1180
  %1245 = vst.msk [vmem:[%s5 + $0x20] sm:$0xf] %vm666, %v1181
  %1246 = vst.msk [vmem:[%s5 + $0x24] sm:$0xf] %vm666, %v1182
  %1247 = vst.msk [vmem:[%s5 + $0x28] sm:$0xf] %vm666, %v1183
  %1248 = vst.msk [vmem:[%s5 + $0x2c] sm:$0xf] %vm666, %v1184
  %1249 = vst.msk [vmem:[%s5 + $0x30] sm:$0xf] %vm666, %v1185
  %1250 = vst.msk [vmem:[%s5 + $0x34] sm:$0xf] %vm666, %v1186
  %1251 = vst.msk [vmem:[%s5 + $0x38] sm:$0xf] %vm666, %v1187
  %1252 = vst.msk [vmem:[%s5 + $0x3c] sm:$0xf] %vm666, %v1188
  %1253 = vst.msk [vmem:[%s5 + $0x40] sm:$0xf] %vm666, %v1189
  %1254 = vst.msk [vmem:[%s5 + $0x44] sm:$0xf] %vm666, %v1190
  %1255 = vst.msk [vmem:[%s5 + $0x48] sm:$0xf] %vm666, %v1191
  %1256 = vst.msk [vmem:[%s5 + $0x4c] sm:$0xf] %vm666, %v1192
  %1257 = vst.msk [vmem:[%s5 + $0x50] sm:$0xf] %vm666, %v1193
  %1258 = vst.msk [vmem:[%s5 + $0x54] sm:$0xf] %vm666, %v1194
  %1259 = vst.msk [vmem:[%s5 + $0x58] sm:$0xf] %vm666, %v1195
  %1260 = vst.msk [vmem:[%s5 + $0x5c] sm:$0xf] %vm666, %v1196
  %1261 = vst.msk [vmem:[%s5 + $0x60] sm:$0xf] %vm666, %v1197
  %1262 = vst.msk [vmem:[%s5 + $0x64] sm:$0xf] %vm666, %v1198
  %1263 = vst.msk [vmem:[%s5 + $0x68] sm:$0xf] %vm666, %v1199
  %1264 = vst.msk [vmem:[%s5 + $0x6c] sm:$0xf] %vm666, %v1200
  %1265 = vst.msk [vmem:[%s5 + $0x70] sm:$0xf] %vm666, %v1201
  %1266 = vst.msk [vmem:[%s5 + $0x74] sm:$0xf] %vm666, %v1202
  %1267 = vst.msk [vmem:[%s5 + $0x78] sm:$0xf] %vm666, %v1203
  %1268 = vst.msk [vmem:[%s5 + $0x7c] sm:$0xf] %vm666, %v1204
  %1269 = vst.msk [vmem:[%s5 + $0x80] sm:$0xf] %vm666, %v1205
  %1270 = vst.msk [vmem:[%s5 + $0x84] sm:$0xf] %vm666, %v1206
  %1271 = vst.msk [vmem:[%s5 + $0x88] sm:$0xf] %vm666, %v1207
  %1272 = vst.msk [vmem:[%s5 + $0x8c] sm:$0xf] %vm666, %v1208
  %1273 = vst.msk [vmem:[%s5 + $0x90] sm:$0xf] %vm666, %v1209
  %1274 = vst.msk [vmem:[%s5 + $0x94] sm:$0xf] %vm666, %v1210
  %1275 = vst.msk [vmem:[%s5 + $0x98] sm:$0xf] %vm666, %v1211
  %1276 = vst.msk [vmem:[%s5 + $0x9c] sm:$0xf] %vm666, %v1212
  %1277 = vst.msk [vmem:[%s5 + $0xa0] sm:$0xf] %vm666, %v1213
  %1278 = vst.msk [vmem:[%s5 + $0xa4] sm:$0xf] %vm666, %v1214
  %1279 = vst.msk [vmem:[%s5 + $0xa8] sm:$0xf] %vm666, %v1215
  %1280 = vst.msk [vmem:[%s5 + $0xac] sm:$0xf] %vm666, %v1216
  %1281 = vst.msk [vmem:[%s5 + $0xb0] sm:$0xf] %vm666, %v1217
  %1282 = vst.msk [vmem:[%s5 + $0xb4] sm:$0xf] %vm666, %v1218
  %1283 = vst.msk [vmem:[%s5 + $0xb8] sm:$0xf] %vm666, %v1219
  %1284 = vst.msk [vmem:[%s5 + $0xbc] sm:$0xf] %vm666, %v1220
  %1285 = vst.msk [vmem:[%s5 + $0xc0] sm:$0xf] %vm666, %v1221
  %1286 = vst.msk [vmem:[%s5 + $0xc4] sm:$0xf] %vm666, %v1222
  %1287 = vst.msk [vmem:[%s5 + $0xc8] sm:$0xf] %vm666, %v1223
  %1288 = vst.msk [vmem:[%s5 + $0xcc] sm:$0xf] %vm666, %v1224
  %1289 = vst.msk [vmem:[%s5 + $0xd0] sm:$0xf] %vm666, %v1225
  %1290 = vst.msk [vmem:[%s5 + $0xd4] sm:$0xf] %vm666, %v1226
  %1291 = vst.msk [vmem:[%s5 + $0xd8] sm:$0xf] %vm666, %v1227
  %1292 = vst.msk [vmem:[%s5 + $0xdc] sm:$0xf] %vm666, %v1228
  %1293 = vst.msk [vmem:[%s5 + $0xe0] sm:$0xf] %vm666, %v1229
  %1294 = vst.msk [vmem:[%s5 + $0xe4] sm:$0xf] %vm666, %v1230
  %1295 = vst.msk [vmem:[%s5 + $0xe8] sm:$0xf] %vm666, %v1231
  %1296 = vst.msk [vmem:[%s5 + $0xec] sm:$0xf] %vm666, %v1232
  %1297 = vst.msk [vmem:[%s5 + $0xf0] sm:$0xf] %vm666, %v1233
  %1298 = vst.msk [vmem:[%s5 + $0xf4] sm:$0xf] %vm666, %v1234
  %1299 = vst.msk [vmem:[%s5 + $0xf8] sm:$0xf] %vm666, %v1235
  %1300 = vst.msk [vmem:[%s5 + $0xfc] sm:$0xf] %vm666, %v1236
  // Predicated region
  $region18: #{cnn_to_rnn_forward.4} parent=0 // pred_check
    _
  $region19: #{cnn_to_rnn_forward.4} parent=0 // pred_check_branch
    %1302 = sbr.rel (0) target = $region21
  $region20: #{cnn_to_rnn_forward.4} parent=0 // pred_region
    _
  $region21: #{cnn_to_rnn_forward.4} parent=0 // pred_fallthru
    _
  // Predicated region
  $region22: #{cnn_to_rnn_forward.4} parent=0 // pred_check
    _
  $region23: #{cnn_to_rnn_forward.4} parent=0 // pred_check_branch
    %1304 = sbr.rel (0) target = $region25
  $region24: #{cnn_to_rnn_forward.4} parent=0 // pred_region
    _
  $region25: #{cnn_to_rnn_forward.4} parent=0 // pred_fallthru
    _
  // Predicated region
  $region26: #{cnn_to_rnn_forward.4} parent=0 // pred_check
    _
  $region27: #{cnn_to_rnn_forward.4} parent=0 // pred_check_branch
    %1306 = sbr.rel (0) target = $region29
  $region28: #{cnn_to_rnn_forward.4} parent=0 // pred_region
    _
  $region29: #{cnn_to_rnn_forward.4} parent=0 // pred_fallthru
    _
  // Predicated region
  $region30: #{cnn_to_rnn_forward.4} parent=0 // pred_check
    _
  $region31: #{cnn_to_rnn_forward.4} parent=0 // pred_check_branch
    %1308 = sbr.rel (0) target = $region33
  $region32: #{cnn_to_rnn_forward.4} parent=0 // pred_region
    _
  $region33: #{cnn_to_rnn_forward.4} parent=0 // pred_fallthru
    _

// kernel: cnn_to_rnn_forward.7
$region0: #{cnn_to_rnn_forward.7}
  #allocation0 [shape = 'u32[]', space=smem, size = 0x4, offset = 0x4, fixed_abs, tag = 'smem constant byte address 0x4 - core index']
  #allocation1 [shape = 'u32[72,128]{1,0:T(1,128)}', space=vmem, size = 0x9000, scoped, tag = 'internal scratch']
  %s0 = inlined_call_operand.vmem [shape: bf16[16,32], index: 0, kind: input, shape index: {}]
  %s1 = inlined_call_operand.vmem [shape: bf16[32,64], index: 1, kind: input, shape index: {}]
  %s2 = inlined_call_operand.vmem [shape: f32[1,64], index: 2, kind: input, shape index: {}]
  %s3 = inlined_call_operand.vmem [shape: f32[16,64], index: 3, kind: output, shape index: {}]
  %s4 = sld [smem:[#allocation0]]
  $region22: #{cnn_to_rnn_forward.7} parent=0
    _
  %s6 = ssub.s32 1, %s4
  %s7 = scalar_select 0, %s6, %s4
  // Predicated region
  $region2: #{cnn_to_rnn_forward.7} parent=0 // pred_check
    _
  $region3: #{cnn_to_rnn_forward.7} parent=0 // pred_check_branch
    %9 = sbr.rel (0) target = $region5
  $region4: #{cnn_to_rnn_forward.7} parent=0 // pred_region
    _
  $region5: #{cnn_to_rnn_forward.7} parent=0 // pred_fallthru
    _
  // Predicated region
  $region6: #{cnn_to_rnn_forward.7} parent=0 // pred_check
    _
  $region7: #{cnn_to_rnn_forward.7} parent=0 // pred_check_branch
    %11 = sbr.rel (0) target = $region9
  $region8: #{cnn_to_rnn_forward.7} parent=0 // pred_region
    _
  $region9: #{cnn_to_rnn_forward.7} parent=0 // pred_fallthru
    _
  // Predicated region
  $region10: #{cnn_to_rnn_forward.7} parent=0 // pred_check
    _
  $region11: #{cnn_to_rnn_forward.7} parent=0 // pred_check_branch
    %13 = sbr.rel (0) target = $region13
  $region12: #{cnn_to_rnn_forward.7} parent=0 // pred_region
    _
  $region13: #{cnn_to_rnn_forward.7} parent=0 // pred_fallthru
    _
  %v15 = vld [vmem:[%s0] sm:$0xf]
  %v16 = vld [vmem:[%s0 + $0x4] sm:$0xf]
  %v17 = vld [vmem:[%s1] sm:$0xf]
  %v18 = vld [vmem:[%s1 + $0x4] sm:$0xf]
  %v19 = vld [vmem:[%s1 + $0x8] sm:$0xf]
  %v20 = vld [vmem:[%s1 + $0xc] sm:$0xf]
  %v21 = vld [vmem:[%s2] sm:$0x1]
  %v23 = vperm.slane %v21, 0
  %v27 = vunpack.c.l.b16 %v15
  %v28 = vunpack.c.l.b16 %v16
  %v29 = vpack.c.b16 %v28, %v27
  %v34 = vunpack.c.l.b16 %v17
  %v35 = vunpack.c.l.b16 %v18
  %v36 = vunpack.c.l.b16 %v19
  %v37 = vunpack.c.l.b16 %v20
  %v38 = vpack.c.b16 %v35, %v34
  %v39 = vpack.c.b16 %v37, %v36
  %vm42 = vcmask 261120
  %v44 = vsel %vm42, %v29, 0
  %46 = vmatpush.bf16.msra.mxu0 0
  %47 = vmatpush.bf16.msra.mxu0 0
  %48 = vmatpush.bf16.msra.mxu0 0
  %49 = vmatpush.bf16.msra.mxu0 0
  %50 = vmatpush.bf16.msra.mxu0 0
  %51 = vmatpush.bf16.msra.mxu0 0
  %52 = vmatpush.bf16.msra.mxu0 %v39
  %53 = vmatpush.bf16.msra.mxu0 %v38
  %54 = vmatmul.bf16.gmra.mxu0 %v44
  %v55 = vpop.f32.mrf.mxu0
  %v56 = vadd.f32 %v23, %v55
  %v57 = vpop.f32.mrf.mxu0
  %v58 = vadd.f32 %v23, %v57
  %59 = vdwg.mxu0
  %vm60 = vcmask 523264
  %61 = vst.msk [vmem:[%s3] sm:$0xff] %vm60, %v56
  %62 = vst.msk [vmem:[%s3 + $0x8] sm:$0xff] %vm60, %v58
  // Predicated region
  $region14: #{cnn_to_rnn_forward.7} parent=0 // pred_check
    _
  $region15: #{cnn_to_rnn_forward.7} parent=0 // pred_check_branch
    %64 = sbr.rel (0) target = $region17
  $region16: #{cnn_to_rnn_forward.7} parent=0 // pred_region
    _
  $region17: #{cnn_to_rnn_forward.7} parent=0 // pred_fallthru
    _
  // Predicated region
  $region18: #{cnn_to_rnn_forward.7} parent=0 // pred_check
    _
  $region19: #{cnn_to_rnn_forward.7} parent=0 // pred_check_branch
    %66 = sbr.rel (0) target = $region21
  $region20: #{cnn_to_rnn_forward.7} parent=0 // pred_region
    _
  $region21: #{cnn_to_rnn_forward.7} parent=0 // pred_fallthru
    _

// kernel: cnn_to_rnn_forward.6
$region0: #{cnn_to_rnn_forward.6}
  #allocation0 [shape = 'u32[]', space=smem, size = 0x4, offset = 0x4, fixed_abs, tag = 'smem constant byte address 0x4 - core index']
  #allocation1 [shape = 'u32[72,128]{1,0:T(1,128)}', space=vmem, size = 0x9000, scoped, tag = 'internal scratch']
  #allocation2 [shape = 'f32[2,32]{1,0:T(2,128)}', space=vmem, size = 0x400, scoped, tag = 'scratch operand']
  %s0 = inlined_call_operand.vmem [shape: f32[7,2,96], index: 0, kind: input, shape index: {}]
  %s1 = inlined_call_operand.vmem [shape: f32[2,32], index: 1, kind: input, shape index: {}]
  %s2 = inlined_call_operand.vmem [shape: bf16[2,256,32], index: 2, kind: input, shape index: {}]
  %s3 = inlined_call_operand.vmem [shape: bf16[2,256,32], index: 3, kind: input, shape index: {}]
  %s4 = inlined_call_operand.vmem [shape: bf16[32,32], index: 4, kind: input, shape index: {}]
  %s5 = inlined_call_operand.vmem [shape: f32[1,32], index: 5, kind: input, shape index: {}]
  %s6 = inlined_call_operand.vmem [shape: bf16[32,96], index: 6, kind: input, shape index: {}]
  %s7 = inlined_call_operand.vmem [shape: bf16[32,96], index: 7, kind: input, shape index: {}]
  %s8 = inlined_call_operand.vmem [shape: f32[1,96], index: 8, kind: input, shape index: {}]
  %s9 = inlined_call_operand.vmem [shape: bf16[7,2,32], index: 9, kind: output, shape index: {}]
  %s10 = sld [smem:[#allocation0]]
  $region73: #{cnn_to_rnn_forward.6} parent=0
    _
  %s12 = ssub.s32 1, %s10
  %s13 = scalar_select 0, %s12, %s10
  loop: start=0, step=1, limit=9
  $region2: #{cnn_to_rnn_forward.6} parent=0 // loop_pre_header
    _
  $region3: #{cnn_to_rnn_forward.6} parent=0 // loop_header
    %s15 = sphi 0, %s19
    %p16 = scmp.ge.s32.totalorder %s15, 9
    %s22 = sphi 0, %s34
    %s23 = sphi 0, %s30
    %s24 = sphi 0, %s22
    %s25 = sphi 0, %s23
    %s26 = sphi 0, %s24
    %s27 = sphi 0, %s25
    %s39 = sphi 0, %s41
    %s42 = sphi 0, %s39
    %s43 = sphi 0, %s42
    %s59 = sphi 0, %s43
    %s65 = sphi 0, %s67
    %s68 = sphi 0, %s65
    %s69 = sphi 0, %s68
    %s85 = sphi 0, %s69
    %s91 = sphi 0, %s93
    %s94 = sphi 0, %s91
    %s95 = sphi 0, %s94
    %s111 = sphi 0, %s95
    %s117 = sphi 0, %s119
    %s120 = sphi 0, %s117
    %s121 = sphi 0, %s120
    %s137 = sphi 0, %s121
    %s141 = sphi 0, %s141
    %s143 = sphi 0, %s141
    %s144 = sphi 0, %s143
    %s158 = sphi 0, %s144
    %s162 = sphi 0, %s162
    %s164 = sphi 0, %s162
    %s165 = sphi 0, %s164
    %s179 = sphi 0, %s165
    %s183 = sphi 0, %s183
    %s185 = sphi 0, %s183
    %s186 = sphi 0, %s185
    %s200 = sphi 0, %s186
    %s204 = sphi 0, %s204
    %s206 = sphi 0, %s204
    %s207 = sphi 0, %s206
    %s221 = sphi 0, %s207
    %s225 = sphi 0, %s225
    %s227 = sphi 0, %s225
    %s228 = sphi 0, %s227
    %s242 = sphi 0, %s228
    %s250 = sphi 0, %s252
    %s253 = sphi 0, %s250
    %s254 = sphi 0, %s253
    %s270 = sphi 0, %s254
  $region4: #{cnn_to_rnn_forward.6} parent=0 // loop_header_branch
    %18 = sbr.rel (%p16) target = $region8
  $region5: #{cnn_to_rnn_forward.6} parent=0 // loop_body
    %s20 = ssub.s32 %s15, 1
    %s21 = ssub.s32 %s15, 2
    %s28 = sadd.s32 1, %s23
    %p29 = scmp.ge.s32.totalorder %s28, 7
    %s30 = scalar_select %p29, 0, %s28
    %s31 = sadd.s32 1, %s22
    %s32 = scalar_select %p29, %s31, %s22
    %p33 = scmp.ge.s32.totalorder %s32, 1
    %s34 = scalar_select %p33, 0, %s32
    %s35 = ssub.s32 %s23, %s30
    %s36 = ssub.s32 %s22, %s34
    %s37 = sor.u32 %s35, %s36
    %p38 = scmp.eq.s32.totalorder %s37, 0
    %s40 = sadd.s32 %s39, 1
    %s41 = scalar_select %p38, %s39, %s40
    %p44 = pneg %p38
    %p45 = scmp.eq.s32.totalorder %s15, 6
    %p46 = por %p44, %p45
    %p47 = scmp.ne.s32.totalorder %s39, %s42
    %p48 = scmp.eq.s32.totalorder %s15, 0
    %p49 = por %p47, %p48
    %p50 = scmp.ne.s32.totalorder %s39, %s42
    %p51 = scmp.eq.s32.totalorder %s20, 6
    %p52 = por %p50, %p51
    %p53 = scmp.ne.s32.totalorder %s42, %s43
    %p54 = scmp.eq.s32.totalorder %s20, 0
    %p55 = por %p53, %p54
    %p56 = scmp.ne.s32.totalorder %s42, %s43
    %p57 = scmp.eq.s32.totalorder %s21, 6
    %p58 = por %p56, %p57
    %p60 = scmp.ne.s32.totalorder %s43, %s59
    %p61 = scmp.eq.s32.totalorder %s21, 0
    %p62 = por %p60, %p61
    %s63 = ssub.s32 %s22, %s34
    %p64 = scmp.eq.s32.totalorder %s63, 0
    %s66 = sadd.s32 %s65, 1
    %s67 = scalar_select %p64, %s65, %s66
    %p70 = pneg %p64
    %p71 = scmp.eq.s32.totalorder %s15, 6
    %p72 = por %p70, %p71
    %p73 = scmp.ne.s32.totalorder %s65, %s68
    %p74 = scmp.eq.s32.totalorder %s15, 0
    %p75 = por %p73, %p74
    %p76 = scmp.ne.s32.totalorder %s65, %s68
    %p77 = scmp.eq.s32.totalorder %s20, 6
    %p78 = por %p76, %p77
    %p79 = scmp.ne.s32.totalorder %s68, %s69
    %p80 = scmp.eq.s32.totalorder %s20, 0
    %p81 = por %p79, %p80
    %p82 = scmp.ne.s32.totalorder %s68, %s69
    %p83 = scmp.eq.s32.totalorder %s21, 6
    %p84 = por %p82, %p83
    %p86 = scmp.ne.s32.totalorder %s69, %s85
    %p87 = scmp.eq.s32.totalorder %s21, 0
    %p88 = por %p86, %p87
    %s89 = ssub.s32 %s22, %s34
    %p90 = scmp.eq.s32.totalorder %s89, 0
    %s92 = sadd.s32 %s91, 1
    %s93 = scalar_select %p90, %s91, %s92
    %p96 = pneg %p90
    %p97 = scmp.eq.s32.totalorder %s15, 6
    %p98 = por %p96, %p97
    %p99 = scmp.ne.s32.totalorder %s91, %s94
    %p100 = scmp.eq.s32.totalorder %s15, 0
    %p101 = por %p99, %p100
    %p102 = scmp.ne.s32.totalorder %s91, %s94
    %p103 = scmp.eq.s32.totalorder %s20, 6
    %p104 = por %p102, %p103
    %p105 = scmp.ne.s32.totalorder %s94, %s95
    %p106 = scmp.eq.s32.totalorder %s20, 0
    %p107 = por %p105, %p106
    %p108 = scmp.ne.s32.totalorder %s94, %s95
    %p109 = scmp.eq.s32.totalorder %s21, 6
    %p110 = por %p108, %p109
    %p112 = scmp.ne.s32.totalorder %s95, %s111
    %p113 = scmp.eq.s32.totalorder %s21, 0
    %p114 = por %p112, %p113
    %s115 = ssub.s32 %s22, %s34
    %p116 = scmp.eq.s32.totalorder %s115, 0
    %s118 = sadd.s32 %s117, 1
    %s119 = scalar_select %p116, %s117, %s118
    %p122 = pneg %p116
    %p123 = scmp.eq.s32.totalorder %s15, 6
    %p124 = por %p122, %p123
    %p125 = scmp.ne.s32.totalorder %s117, %s120
    %p126 = scmp.eq.s32.totalorder %s15, 0
    %p127 = por %p125, %p126
    %p128 = scmp.ne.s32.totalorder %s117, %s120
    %p129 = scmp.eq.s32.totalorder %s20, 6
    %p130 = por %p128, %p129
    %p131 = scmp.ne.s32.totalorder %s120, %s121
    %p132 = scmp.eq.s32.totalorder %s20, 0
    %p133 = por %p131, %p132
    %p134 = scmp.ne.s32.totalorder %s120, %s121
    %p135 = scmp.eq.s32.totalorder %s21, 6
    %p136 = por %p134, %p135
    %p138 = scmp.ne.s32.totalorder %s121, %s137
    %p139 = scmp.eq.s32.totalorder %s21, 0
    %p140 = por %p138, %p139
    %s142 = sadd.s32 %s141, 1
    %p145 = scmp.eq.s32.totalorder %s15, 6
    %p146 = scmp.ne.s32.totalorder %s141, %s143
    %p147 = scmp.eq.s32.totalorder %s15, 0
    %p148 = por %p146, %p147
    %p149 = scmp.ne.s32.totalorder %s141, %s143
    %p150 = scmp.eq.s32.totalorder %s20, 6
    %p151 = por %p149, %p150
    %p152 = scmp.ne.s32.totalorder %s143, %s144
    %p153 = scmp.eq.s32.totalorder %s20, 0
    %p154 = por %p152, %p153
    %p155 = scmp.ne.s32.totalorder %s143, %s144
    %p156 = scmp.eq.s32.totalorder %s21, 6
    %p157 = por %p155, %p156
    %p159 = scmp.ne.s32.totalorder %s144, %s158
    %p160 = scmp.eq.s32.totalorder %s21, 0
    %p161 = por %p159, %p160
    %s163 = sadd.s32 %s162, 1
    %p166 = scmp.eq.s32.totalorder %s15, 6
    %p167 = scmp.ne.s32.totalorder %s162, %s164
    %p168 = scmp.eq.s32.totalorder %s15, 0
    %p169 = por %p167, %p168
    %p170 = scmp.ne.s32.totalorder %s162, %s164
    %p171 = scmp.eq.s32.totalorder %s20, 6
    %p172 = por %p170, %p171
    %p173 = scmp.ne.s32.totalorder %s164, %s165
    %p174 = scmp.eq.s32.totalorder %s20, 0
    %p175 = por %p173, %p174
    %p176 = scmp.ne.s32.totalorder %s164, %s165
    %p177 = scmp.eq.s32.totalorder %s21, 6
    %p178 = por %p176, %p177
    %p180 = scmp.ne.s32.totalorder %s165, %s179
    %p181 = scmp.eq.s32.totalorder %s21, 0
    %p182 = por %p180, %p181
    %s184 = sadd.s32 %s183, 1
    %p187 = scmp.eq.s32.totalorder %s15, 6
    %p188 = scmp.ne.s32.totalorder %s183, %s185
    %p189 = scmp.eq.s32.totalorder %s15, 0
    %p190 = por %p188, %p189
    %p191 = scmp.ne.s32.totalorder %s183, %s185
    %p192 = scmp.eq.s32.totalorder %s20, 6
    %p193 = por %p191, %p192
    %p194 = scmp.ne.s32.totalorder %s185, %s186
    %p195 = scmp.eq.s32.totalorder %s20, 0
    %p196 = por %p194, %p195
    %p197 = scmp.ne.s32.totalorder %s185, %s186
    %p198 = scmp.eq.s32.totalorder %s21, 6
    %p199 = por %p197, %p198
    %p201 = scmp.ne.s32.totalorder %s186, %s200
    %p202 = scmp.eq.s32.totalorder %s21, 0
    %p203 = por %p201, %p202
    %s205 = sadd.s32 %s204, 1
    %p208 = scmp.eq.s32.totalorder %s15, 6
    %p209 = scmp.ne.s32.totalorder %s204, %s206
    %p210 = scmp.eq.s32.totalorder %s15, 0
    %p211 = por %p209, %p210
    %p212 = scmp.ne.s32.totalorder %s204, %s206
    %p213 = scmp.eq.s32.totalorder %s20, 6
    %p214 = por %p212, %p213
    %p215 = scmp.ne.s32.totalorder %s206, %s207
    %p216 = scmp.eq.s32.totalorder %s20, 0
    %p217 = por %p215, %p216
    %p218 = scmp.ne.s32.totalorder %s206, %s207
    %p219 = scmp.eq.s32.totalorder %s21, 6
    %p220 = por %p218, %p219
    %p222 = scmp.ne.s32.totalorder %s207, %s221
    %p223 = scmp.eq.s32.totalorder %s21, 0
    %p224 = por %p222, %p223
    %s226 = sadd.s32 %s225, 1
    %p229 = scmp.eq.s32.totalorder %s15, 6
    %p230 = scmp.ne.s32.totalorder %s225, %s227
    %p231 = scmp.eq.s32.totalorder %s15, 0
    %p232 = por %p230, %p231
    %p233 = scmp.ne.s32.totalorder %s225, %s227
    %p234 = scmp.eq.s32.totalorder %s20, 6
    %p235 = por %p233, %p234
    %p236 = scmp.ne.s32.totalorder %s227, %s228
    %p237 = scmp.eq.s32.totalorder %s20, 0
    %p238 = por %p236, %p237
    %p239 = scmp.ne.s32.totalorder %s227, %s228
    %p240 = scmp.eq.s32.totalorder %s21, 6
    %p241 = por %p239, %p240
    %p243 = scmp.ne.s32.totalorder %s228, %s242
    %p244 = scmp.eq.s32.totalorder %s21, 0
    %p245 = por %p243, %p244
    %s246 = ssub.s32 %s23, %s30
    %s247 = ssub.s32 %s22, %s34
    %s248 = sor.u32 %s246, %s247
    %p249 = scmp.eq.s32.totalorder %s248, 0
    %s251 = sadd.s32 %s250, 1
    %s252 = scalar_select %p249, %s250, %s251
    %p255 = pneg %p249
    %p256 = scmp.eq.s32.totalorder %s15, 6
    %p257 = por %p255, %p256
    %p258 = scmp.ne.s32.totalorder %s250, %s253
    %p259 = scmp.eq.s32.totalorder %s15, 0
    %p260 = por %p258, %p259
    %p261 = scmp.ne.s32.totalorder %s250, %s253
    %p262 = scmp.eq.s32.totalorder %s20, 6
    %p263 = por %p261, %p262
    %p264 = scmp.ne.s32.totalorder %s253, %s254
    %p265 = scmp.eq.s32.totalorder %s20, 0
    %p266 = por %p264, %p265
    %p267 = scmp.ne.s32.totalorder %s253, %s254
    %p268 = scmp.eq.s32.totalorder %s21, 6
    %p269 = por %p267, %p268
    %p271 = scmp.ne.s32.totalorder %s254, %s270
    %p272 = scmp.eq.s32.totalorder %s21, 0
    %p273 = por %p271, %p272
    %p274 = scmp.le.s32.totalorder 1, %s15
    %p275 = scmp.lt.s32.totalorder %s15, 8
    %p276 = pnand %p274, %p275
    %p277 = pneg %p276
    // Predicated region
    $region9: #{cnn_to_rnn_forward.6} parent=5 // pred_check
      _
    $region10: #{cnn_to_rnn_forward.6} parent=5 // pred_check_branch
      %279 = sbr.rel (%p276) target = $region12
    $region11: #{cnn_to_rnn_forward.6} parent=5 // pred_region
      %s280 = ssub.s32 %s15, 1
      // Predicated region
      $region13: #{cnn_to_rnn_forward.6} parent=11 // pred_check
        %p281 = pneg %p81
      $region14: #{cnn_to_rnn_forward.6} parent=11 // pred_check_branch
        %283 = sbr.rel (%p281) target = $region16
      $region15: #{cnn_to_rnn_forward.6} parent=11 // pred_region
        %p284 = scmp.lt.s32.totalorder %s24, 0
        %s285 = scalar_select %p284, %s24, 0
        %s286 = smul.addr %s285, 2
        %s287 = scalar_lea.vmem %s1, %s286
      $region16: #{cnn_to_rnn_forward.6} parent=11 // pred_fallthru
        _
      // Predicated region
      $region17: #{cnn_to_rnn_forward.6} parent=11 // pred_check
        %p288 = pneg %p107
      $region18: #{cnn_to_rnn_forward.6} parent=11 // pred_check_branch
        %290 = sbr.rel (%p288) target = $region20
      $region19: #{cnn_to_rnn_forward.6} parent=11 // pred_region
        %s291 = smul.u32 2, %s24
        %p292 = scmp.lt.s32.totalorder %s291, 1
        %s293 = scalar_select %p292, %s291, 1
        %s294 = smul.addr %s293, 32
        %s295 = smul.addr %s294, 4
        %s296 = scalar_lea.vmem %s2, %s295
        %s297 = smul.u32 2, %s24
      $region20: #{cnn_to_rnn_forward.6} parent=11 // pred_fallthru
        _
      // Predicated region
      $region21: #{cnn_to_rnn_forward.6} parent=11 // pred_check
        %p298 = pneg %p133
      $region22: #{cnn_to_rnn_forward.6} parent=11 // pred_check_branch
        %300 = sbr.rel (%p298) target = $region24
      $region23: #{cnn_to_rnn_forward.6} parent=11 // pred_region
        %s301 = smul.u32 2, %s24
        %p302 = scmp.lt.s32.totalorder %s301, 1
        %s303 = scalar_select %p302, %s301, 1
        %s304 = smul.addr %s303, 32
        %s305 = smul.addr %s304, 4
        %s306 = scalar_lea.vmem %s3, %s305
        %s307 = smul.u32 2, %s24
      $region24: #{cnn_to_rnn_forward.6} parent=11 // pred_fallthru
        _
      // Predicated region
      $region25: #{cnn_to_rnn_forward.6} parent=11 // pred_check
        %p308 = pneg %p154
      $region26: #{cnn_to_rnn_forward.6} parent=11 // pred_check_branch
        %310 = sbr.rel (%p308) target = $region28
      $region27: #{cnn_to_rnn_forward.6} parent=11 // pred_region
        _
      $region28: #{cnn_to_rnn_forward.6} parent=11 // pred_fallthru
        _
      // Predicated region
      $region29: #{cnn_to_rnn_forward.6} parent=11 // pred_check
        %p311 = pneg %p175
      $region30: #{cnn_to_rnn_forward.6} parent=11 // pred_check_branch
        %313 = sbr.rel (%p311) target = $region32
      $region31: #{cnn_to_rnn_forward.6} parent=11 // pred_region
        _
      $region32: #{cnn_to_rnn_forward.6} parent=11 // pred_fallthru
        _
      // Predicated region
      $region33: #{cnn_to_rnn_forward.6} parent=11 // pred_check
        %p314 = pneg %p196
      $region34: #{cnn_to_rnn_forward.6} parent=11 // pred_check_branch
        %316 = sbr.rel (%p314) target = $region36
      $region35: #{cnn_to_rnn_forward.6} parent=11 // pred_region
        _
      $region36: #{cnn_to_rnn_forward.6} parent=11 // pred_fallthru
        _
      // Predicated region
      $region37: #{cnn_to_rnn_forward.6} parent=11 // pred_check
        %p317 = pneg %p217
      $region38: #{cnn_to_rnn_forward.6} parent=11 // pred_check_branch
        %319 = sbr.rel (%p317) target = $region40
      $region39: #{cnn_to_rnn_forward.6} parent=11 // pred_region
        _
      $region40: #{cnn_to_rnn_forward.6} parent=11 // pred_fallthru
        _
      // Predicated region
      $region41: #{cnn_to_rnn_forward.6} parent=11 // pred_check
        %p320 = pneg %p238
      $region42: #{cnn_to_rnn_forward.6} parent=11 // pred_check_branch
        %322 = sbr.rel (%p320) target = $region44
      $region43: #{cnn_to_rnn_forward.6} parent=11 // pred_region
        _
      $region44: #{cnn_to_rnn_forward.6} parent=11 // pred_fallthru
        _
    $region12: #{cnn_to_rnn_forward.6} parent=5 // pred_fallthru
      _
    %p323 = scmp.lt.s32.totalorder %s15, 7
    // Predicated region
    $region45: #{cnn_to_rnn_forward.6} parent=5 // pred_check
      %p324 = pneg %p323
    $region46: #{cnn_to_rnn_forward.6} parent=5 // pred_check_branch
      %326 = sbr.rel (%p324) target = $region48
    $region47: #{cnn_to_rnn_forward.6} parent=5 // pred_region
      // Predicated region
      $region49: #{cnn_to_rnn_forward.6} parent=47 // pred_check
        %p327 = pneg %p49
      $region50: #{cnn_to_rnn_forward.6} parent=47 // pred_check_branch
        %329 = sbr.rel (%p327) target = $region52
      $region51: #{cnn_to_rnn_forward.6} parent=47 // pred_region
        %p330 = scmp.lt.s32.totalorder %s23, 6
        %s331 = scalar_select %p330, %s23, 6
        %p332 = scmp.lt.s32.totalorder %s22, 0
        %s333 = scalar_select %p332, %s22, 0
        %s334 = sadd.s32 %s333, %s331
        %s335 = smul.addr %s334, 2
        %s336 = scalar_lea.vmem %s0, %s335
      $region52: #{cnn_to_rnn_forward.6} parent=47 // pred_fallthru
        _
    $region48: #{cnn_to_rnn_forward.6} parent=5 // pred_fallthru
      _
    %p337 = scmp.le.s32.totalorder 1, %s15
    %p338 = scmp.lt.s32.totalorder %s15, 8
    %p339 = pnand %p337, %p338
    %p340 = pneg %p339
    // Predicated region
    $region53: #{cnn_to_rnn_forward.6} parent=5 // pred_check
      _
    $region54: #{cnn_to_rnn_forward.6} parent=5 // pred_check_branch
      %342 = sbr.rel (%p339) target = $region56
    $region55: #{cnn_to_rnn_forward.6} parent=5 // pred_region
      %s343 = ssub.s32 %s15, 1
      %p344 = scmp.lt.s32.totalorder %s25, 6
      %s345 = scalar_select %p344, %s25, 6
      %p346 = scmp.lt.s32.totalorder %s24, 0
      %s347 = scalar_select %p346, %s24, 0
      %s348 = sadd.s32 %s347, %s345
      %s349 = smul.addr %s348, 2
      %s350 = scalar_lea.vmem %s0, %s349
      %p351 = pneg %p55
      %p352 = pneg %p52
      %p353 = scmp.lt.s32.totalorder %s24, 0
      %s354 = scalar_select %p353, %s24, 0
      %s355 = smul.addr %s354, 2
      %s356 = scalar_lea.vmem %s1, %s355
      %p357 = pneg %p81
      %p358 = pneg %p78
      %s359 = smul.u32 2, %s24
      %p360 = scmp.lt.s32.totalorder %s359, 1
      %s361 = scalar_select %p360, %s359, 1
      %s362 = smul.addr %s361, 32
      %s363 = smul.addr %s362, 4
      %s364 = scalar_lea.vmem %s2, %s363
      %p365 = pneg %p107
      %p366 = pneg %p104
      %s367 = smul.u32 2, %s24
      %p368 = scmp.lt.s32.totalorder %s367, 1
      %s369 = scalar_select %p368, %s367, 1
      %s370 = smul.addr %s369, 32
      %s371 = smul.addr %s370, 4
      %s372 = scalar_lea.vmem %s3, %s371
      %p373 = pneg %p133
      %p374 = pneg %p130
      %p375 = pneg %p154
      %p376 = pneg %p151
      %p377 = pneg %p175
      %p378 = pneg %p172
      %p379 = pneg %p196
      %p380 = pneg %p193
      %p381 = pneg %p217
      %p382 = pneg %p214
      %p383 = pneg %p238
      %p384 = pneg %p235
      %p385 = pneg %p266
      %p386 = pneg %p263
      %p387 = scmp.lt.s32.totalorder %s25, 6
      %s388 = scalar_select %p387, %s25, 6
      %p389 = scmp.lt.s32.totalorder %s24, 0
      %s390 = scalar_select %p389, %s24, 0
      %s391 = sadd.s32 %s390, %s388
      %s392 = scalar_lea.vmem %s9, %s391
      %p393 = scmp.lt.s32.totalorder %s25, 6
      %s394 = scalar_select %p393, %s25, 6
      %p395 = scmp.lt.s32.totalorder %s24, 0
      %s396 = scalar_select %p395, %s24, 0
      %s397 = sadd.s32 %s396, %s394
      %s398 = smul.addr %s397, 2
      %s399 = scalar_lea.vmem %s0, %s398
      %p400 = scmp.lt.s32.totalorder %s24, 0
      %s401 = scalar_select %p400, %s24, 0
      %s402 = smul.addr %s401, 2
      %s403 = scalar_lea.vmem %s1, %s402
      %s404 = smul.u32 2, %s24
      %p405 = scmp.lt.s32.totalorder %s404, 1
      %s406 = scalar_select %p405, %s404, 1
      %s407 = smul.addr %s406, 32
      %s408 = smul.addr %s407, 4
      %s409 = scalar_lea.vmem %s2, %s408
      %s410 = smul.u32 2, %s24
      %s411 = smul.u32 2, %s24
      %p412 = scmp.lt.s32.totalorder %s411, 1
      %s413 = scalar_select %p412, %s411, 1
      %s414 = smul.addr %s413, 32
      %s415 = smul.addr %s414, 4
      %s416 = scalar_lea.vmem %s3, %s415
      %s417 = smul.u32 2, %s24
      %p418 = scmp.lt.s32.totalorder %s25, 6
      %s419 = scalar_select %p418, %s25, 6
      %p420 = scmp.lt.s32.totalorder %s24, 0
      %s421 = scalar_select %p420, %s24, 0
      %s422 = sadd.s32 %s421, %s419
      %s423 = scalar_lea.vmem %s9, %s422
      %p425 = scmp.eq.s32.totalorder %s25, 0
      // Predicated region
      $region57: #{cnn_to_rnn_forward.6} parent=55 // pred_check
        %p426 = pneg %p425
      $region58: #{cnn_to_rnn_forward.6} parent=55 // pred_check_branch
        %428 = sbr.rel (%p426) target = $region60
      $region59: #{cnn_to_rnn_forward.6} parent=55 // pred_region
        %v429 = vld [vmem:[%s403] sm:$0x3]
        %vm430 = vcmask 254976
        %431 = vst.msk [vmem:[#allocation2] sm:$0x3] %vm430, %v429
      $region60: #{cnn_to_rnn_forward.6} parent=55 // pred_fallthru
        _
      %v432 = vld [vmem:[#allocation2] sm:$0x3]
      %v433 = vpack.c.bf16 %v432, %v432
      %v434 = vld [vmem:[%s4] sm:$0xf]
      %v435 = vld [vmem:[%s4 + $0x4] sm:$0xf]
      %v436 = vld [vmem:[%s4 + $0x8] sm:$0xf]
      %v437 = vld [vmem:[%s4 + $0xc] sm:$0xf]
      %v442 = vunpack.c.l.b16 %v434
      %v443 = vunpack.c.l.b16 %v435
      %v444 = vunpack.c.l.b16 %v436
      %v445 = vunpack.c.l.b16 %v437
      %v446 = vpack.c.b16 %v443, %v442
      %v447 = vpack.c.b16 %v445, %v444
      %vm450 = vcmask 261120
      %v452 = vsel %vm450, %v433, 0
      %454 = vmatpush.bf16.msra.mxu0 0
      %455 = vmatpush.bf16.msra.mxu0 0
      %456 = vmatpush.bf16.msra.mxu0 0
      %457 = vmatpush.bf16.msra.mxu0 0
      %458 = vmatpush.bf16.msra.mxu0 0
      %459 = vmatpush.bf16.msra.mxu0 0
      %460 = vmatpush.bf16.msra.mxu0 %v447
      %461 = vmatpush.bf16.msra.mxu0 %v446
      %462 = vmatmul.bf16.gmra.mxu0 %v452
      %v463 = vpop.f32.mrf.mxu0
      %v464 = vadd.f32 0.0, %v463
      %v465 = vpop.f32.mrf.mxu0
      %466 = vdwg.mxu0
      %v467 = vld [vmem:[%s416] sm:$0xf]
      %v468 = vld [vmem:[%s416 + $0x4] sm:$0xf]
      %v469 = vld [vmem:[%s416 + $0x8] sm:$0xf]
      %v470 = vld [vmem:[%s416 + $0xc] sm:$0xf]
      %v471 = vld [vmem:[%s416 + $0x10] sm:$0xf]
      %v472 = vld [vmem:[%s416 + $0x14] sm:$0xf]
      %v473 = vld [vmem:[%s416 + $0x18] sm:$0xf]
      %v474 = vld [vmem:[%s416 + $0x1c] sm:$0xf]
      %v475 = vld [vmem:[%s416 + $0x20] sm:$0xf]
      %v476 = vld [vmem:[%s416 + $0x24] sm:$0xf]
      %v477 = vld [vmem:[%s416 + $0x28] sm:$0xf]
      %v478 = vld [vmem:[%s416 + $0x2c] sm:$0xf]
      %v479 = vld [vmem:[%s416 + $0x30] sm:$0xf]
      %v480 = vld [vmem:[%s416 + $0x34] sm:$0xf]
      %v481 = vld [vmem:[%s416 + $0x38] sm:$0xf]
      %v482 = vld [vmem:[%s416 + $0x3c] sm:$0xf]
      %v483 = vld [vmem:[%s416 + $0x40] sm:$0xf]
      %v484 = vld [vmem:[%s416 + $0x44] sm:$0xf]
      %v485 = vld [vmem:[%s416 + $0x48] sm:$0xf]
      %v486 = vld [vmem:[%s416 + $0x4c] sm:$0xf]
      %v487 = vld [vmem:[%s416 + $0x50] sm:$0xf]
      %v488 = vld [vmem:[%s416 + $0x54] sm:$0xf]
      %v489 = vld [vmem:[%s416 + $0x58] sm:$0xf]
      %v490 = vld [vmem:[%s416 + $0x5c] sm:$0xf]
      %v491 = vld [vmem:[%s416 + $0x60] sm:$0xf]
      %v492 = vld [vmem:[%s416 + $0x64] sm:$0xf]
      %v493 = vld [vmem:[%s416 + $0x68] sm:$0xf]
      %v494 = vld [vmem:[%s416 + $0x6c] sm:$0xf]
      %v495 = vld [vmem:[%s416 + $0x70] sm:$0xf]
      %v496 = vld [vmem:[%s416 + $0x74] sm:$0xf]
      %v497 = vld [vmem:[%s416 + $0x78] sm:$0xf]
      %v498 = vld [vmem:[%s416 + $0x7c] sm:$0xf]
      %v499 = vld [vmem:[%s416 + $0x80] sm:$0xf]
      %v500 = vld [vmem:[%s416 + $0x84] sm:$0xf]
      %v501 = vld [vmem:[%s416 + $0x88] sm:$0xf]
      %v502 = vld [vmem:[%s416 + $0x8c] sm:$0xf]
      %v503 = vld [vmem:[%s416 + $0x90] sm:$0xf]
      %v504 = vld [vmem:[%s416 + $0x94] sm:$0xf]
      %v505 = vld [vmem:[%s416 + $0x98] sm:$0xf]
      %v506 = vld [vmem:[%s416 + $0x9c] sm:$0xf]
      %v507 = vld [vmem:[%s416 + $0xa0] sm:$0xf]
      %v508 = vld [vmem:[%s416 + $0xa4] sm:$0xf]
      %v509 = vld [vmem:[%s416 + $0xa8] sm:$0xf]
      %v510 = vld [vmem:[%s416 + $0xac] sm:$0xf]
      %v511 = vld [vmem:[%s416 + $0xb0] sm:$0xf]
      %v512 = vld [vmem:[%s416 + $0xb4] sm:$0xf]
      %v513 = vld [vmem:[%s416 + $0xb8] sm:$0xf]
      %v514 = vld [vmem:[%s416 + $0xbc] sm:$0xf]
      %v515 = vld [vmem:[%s416 + $0xc0] sm:$0xf]
      %v516 = vld [vmem:[%s416 + $0xc4] sm:$0xf]
      %v517 = vld [vmem:[%s416 + $0xc8] sm:$0xf]
      %v518 = vld [vmem:[%s416 + $0xcc] sm:$0xf]
      %v519 = vld [vmem:[%s416 + $0xd0] sm:$0xf]
      %v520 = vld [vmem:[%s416 + $0xd4] sm:$0xf]
      %v521 = vld [vmem:[%s416 + $0xd8] sm:$0xf]
      %v522 = vld [vmem:[%s416 + $0xdc] sm:$0xf]
      %v523 = vld [vmem:[%s416 + $0xe0] sm:$0xf]
      %v524 = vld [vmem:[%s416 + $0xe4] sm:$0xf]
      %v525 = vld [vmem:[%s416 + $0xe8] sm:$0xf]
      %v526 = vld [vmem:[%s416 + $0xec] sm:$0xf]
      %v527 = vld [vmem:[%s416 + $0xf0] sm:$0xf]
      %v528 = vld [vmem:[%s416 + $0xf4] sm:$0xf]
      %v529 = vld [vmem:[%s416 + $0xf8] sm:$0xf]
      %v530 = vld [vmem:[%s416 + $0xfc] sm:$0xf]
      %v531 = vunpack.c.l.bf16 %v467
      %v532 = vunpack.c.l.bf16 %v468
      %v533 = vunpack.c.l.bf16 %v469
      %v534 = vunpack.c.l.bf16 %v470
      %v535 = vunpack.c.l.bf16 %v471
      %v536 = vunpack.c.l.bf16 %v472
      %v537 = vunpack.c.l.bf16 %v473
      %v538 = vunpack.c.l.bf16 %v474
      %v539 = vunpack.c.l.bf16 %v475
      %v540 = vunpack.c.l.bf16 %v476
      %v541 = vunpack.c.l.bf16 %v477
      %v542 = vunpack.c.l.bf16 %v478
      %v543 = vunpack.c.l.bf16 %v479
      %v544 = vunpack.c.l.bf16 %v480
      %v545 = vunpack.c.l.bf16 %v481
      %v546 = vunpack.c.l.bf16 %v482
      %v547 = vunpack.c.l.bf16 %v483
      %v548 = vunpack.c.l.bf16 %v484
      %v549 = vunpack.c.l.bf16 %v485
      %v550 = vunpack.c.l.bf16 %v486
      %v551 = vunpack.c.l.bf16 %v487
      %v552 = vunpack.c.l.bf16 %v488
      %v553 = vunpack.c.l.bf16 %v489
      %v554 = vunpack.c.l.bf16 %v490
      %v555 = vunpack.c.l.bf16 %v491
      %v556 = vunpack.c.l.bf16 %v492
      %v557 = vunpack.c.l.bf16 %v493
      %v558 = vunpack.c.l.bf16 %v494
      %v559 = vunpack.c.l.bf16 %v495
      %v560 = vunpack.c.l.bf16 %v496
      %v561 = vunpack.c.l.bf16 %v497
      %v562 = vunpack.c.l.bf16 %v498
      %v563 = vunpack.c.l.bf16 %v499
      %v564 = vunpack.c.l.bf16 %v500
      %v565 = vunpack.c.l.bf16 %v501
      %v566 = vunpack.c.l.bf16 %v502
      %v567 = vunpack.c.l.bf16 %v503
      %v568 = vunpack.c.l.bf16 %v504
      %v569 = vunpack.c.l.bf16 %v505
      %v570 = vunpack.c.l.bf16 %v506
      %v571 = vunpack.c.l.bf16 %v507
      %v572 = vunpack.c.l.bf16 %v508
      %v573 = vunpack.c.l.bf16 %v509
      %v574 = vunpack.c.l.bf16 %v510
      %v575 = vunpack.c.l.bf16 %v511
      %v576 = vunpack.c.l.bf16 %v512
      %v577 = vunpack.c.l.bf16 %v513
      %v578 = vunpack.c.l.bf16 %v514
      %v579 = vunpack.c.l.bf16 %v515
      %v580 = vunpack.c.l.bf16 %v516
      %v581 = vunpack.c.l.bf16 %v517
      %v582 = vunpack.c.l.bf16 %v518
      %v583 = vunpack.c.l.bf16 %v519
      %v584 = vunpack.c.l.bf16 %v520
      %v585 = vunpack.c.l.bf16 %v521
      %v586 = vunpack.c.l.bf16 %v522
      %v587 = vunpack.c.l.bf16 %v523
      %v588 = vunpack.c.l.bf16 %v524
      %v589 = vunpack.c.l.bf16 %v525
      %v590 = vunpack.c.l.bf16 %v526
      %v591 = vunpack.c.l.bf16 %v527
      %v592 = vunpack.c.l.bf16 %v528
      %v593 = vunpack.c.l.bf16 %v529
      %v594 = vunpack.c.l.bf16 %v530
      %v596 = vrot.slane %v464, 1
      %v597 = vperm.slane %v464, 0
      %v598 = vperm.slane %v596, 0
      %v601 = vadd.f32 %v531, %v597
      %v602 = vadd.f32 %v532, %v597
      %v603 = vadd.f32 %v533, %v597
      %v604 = vadd.f32 %v534, %v597
      %v605 = vadd.f32 %v535, %v597
      %v606 = vadd.f32 %v536, %v597
      %v607 = vadd.f32 %v537, %v597
      %v608 = vadd.f32 %v538, %v597
      %v609 = vadd.f32 %v539, %v597
      %v610 = vadd.f32 %v540, %v597
      %v611 = vadd.f32 %v541, %v597
      %v612 = vadd.f32 %v542, %v597
      %v613 = vadd.f32 %v543, %v597
      %v614 = vadd.f32 %v544, %v597
      %v615 = vadd.f32 %v545, %v597
      %v616 = vadd.f32 %v546, %v597
      %v617 = vadd.f32 %v547, %v597
      %v618 = vadd.f32 %v548, %v597
      %v619 = vadd.f32 %v549, %v597
      %v620 = vadd.f32 %v550, %v597
      %v621 = vadd.f32 %v551, %v597
      %v622 = vadd.f32 %v552, %v597
      %v623 = vadd.f32 %v553, %v597
      %v624 = vadd.f32 %v554, %v597
      %v625 = vadd.f32 %v555, %v597
      %v626 = vadd.f32 %v556, %v597
      %v627 = vadd.f32 %v557, %v597
      %v628 = vadd.f32 %v558, %v597
      %v629 = vadd.f32 %v559, %v597
      %v630 = vadd.f32 %v560, %v597
      %v631 = vadd.f32 %v561, %v597
      %v632 = vadd.f32 %v562, %v597
      %v633 = vadd.f32 %v563, %v598
      %v634 = vadd.f32 %v564, %v598
      %v635 = vadd.f32 %v565, %v598
      %v636 = vadd.f32 %v566, %v598
      %v637 = vadd.f32 %v567, %v598
      %v638 = vadd.f32 %v568, %v598
      %v639 = vadd.f32 %v569, %v598
      %v640 = vadd.f32 %v570, %v598
      %v641 = vadd.f32 %v571, %v598
      %v642 = vadd.f32 %v572, %v598
      %v643 = vadd.f32 %v573, %v598
      %v644 = vadd.f32 %v574, %v598
      %v645 = vadd.f32 %v575, %v598
      %v646 = vadd.f32 %v576, %v598
      %v647 = vadd.f32 %v577, %v598
      %v648 = vadd.f32 %v578, %v598
      %v649 = vadd.f32 %v579, %v598
      %v650 = vadd.f32 %v580, %v598
      %v651 = vadd.f32 %v581, %v598
      %v652 = vadd.f32 %v582, %v598
      %v653 = vadd.f32 %v583, %v598
      %v654 = vadd.f32 %v584, %v598
      %v655 = vadd.f32 %v585, %v598
      %v656 = vadd.f32 %v586, %v598
      %v657 = vadd.f32 %v587, %v598
      %v658 = vadd.f32 %v588, %v598
      %v659 = vadd.f32 %v589, %v598
      %v660 = vadd.f32 %v590, %v598
      %v661 = vadd.f32 %v591, %v598
      %v662 = vadd.f32 %v592, %v598
      %v663 = vadd.f32 %v593, %v598
      %v664 = vadd.f32 %v594, %v598
      %v665 = vtanh.pop %v601
      %v666 = vtanh.pop %v602
      %v667 = vtanh.pop %v603
      %v668 = vtanh.pop %v604
      %v669 = vtanh.pop %v605
      %v670 = vtanh.pop %v606
      %v671 = vtanh.pop %v607
      %v672 = vtanh.pop %v608
      %v673 = vtanh.pop %v609
      %v674 = vtanh.pop %v610
      %v675 = vtanh.pop %v611
      %v676 = vtanh.pop %v612
      %v677 = vtanh.pop %v613
      %v678 = vtanh.pop %v614
      %v679 = vtanh.pop %v615
      %v680 = vtanh.pop %v616
      %v681 = vtanh.pop %v617
      %v682 = vtanh.pop %v618
      %v683 = vtanh.pop %v619
      %v684 = vtanh.pop %v620
      %v685 = vtanh.pop %v621
      %v686 = vtanh.pop %v622
      %v687 = vtanh.pop %v623
      %v688 = vtanh.pop %v624
      %v689 = vtanh.pop %v625
      %v690 = vtanh.pop %v626
      %v691 = vtanh.pop %v627
      %v692 = vtanh.pop %v628
      %v693 = vtanh.pop %v629
      %v694 = vtanh.pop %v630
      %v695 = vtanh.pop %v631
      %v696 = vtanh.pop %v632
      %v697 = vtanh.pop %v633
      %v698 = vtanh.pop %v634
      %v699 = vtanh.pop %v635
      %v700 = vtanh.pop %v636
      %v701 = vtanh.pop %v637
      %v702 = vtanh.pop %v638
      %v703 = vtanh.pop %v639
      %v704 = vtanh.pop %v640
      %v705 = vtanh.pop %v641
      %v706 = vtanh.pop %v642
      %v707 = vtanh.pop %v643
      %v708 = vtanh.pop %v644
      %v709 = vtanh.pop %v645
      %v710 = vtanh.pop %v646
      %v711 = vtanh.pop %v647
      %v712 = vtanh.pop %v648
      %v713 = vtanh.pop %v649
      %v714 = vtanh.pop %v650
      %v715 = vtanh.pop %v651
      %v716 = vtanh.pop %v652
      %v717 = vtanh.pop %v653
      %v718 = vtanh.pop %v654
      %v719 = vtanh.pop %v655
      %v720 = vtanh.pop %v656
      %v721 = vtanh.pop %v657
      %v722 = vtanh.pop %v658
      %v723 = vtanh.pop %v659
      %v724 = vtanh.pop %v660
      %v725 = vtanh.pop %v661
      %v726 = vtanh.pop %v662
      %v727 = vtanh.pop %v663
      %v728 = vtanh.pop %v664
      %v729 = vld [vmem:[%s5] sm:$0x1]
      %v731 = vperm.slane %v729, 0
      %v733 = vmul.f32 %v665, %v731
      %v734 = vmul.f32 %v666, %v731
      %v735 = vmul.f32 %v667, %v731
      %v736 = vmul.f32 %v668, %v731
      %v737 = vmul.f32 %v669, %v731
      %v738 = vmul.f32 %v670, %v731
      %v739 = vmul.f32 %v671, %v731
      %v740 = vmul.f32 %v672, %v731
      %v741 = vmul.f32 %v673, %v731
      %v742 = vmul.f32 %v674, %v731
      %v743 = vmul.f32 %v675, %v731
      %v744 = vmul.f32 %v676, %v731
      %v745 = vmul.f32 %v677, %v731
      %v746 = vmul.f32 %v678, %v731
      %v747 = vmul.f32 %v679, %v731
      %v748 = vmul.f32 %v680, %v731
      %v749 = vmul.f32 %v681, %v731
      %v750 = vmul.f32 %v682, %v731
      %v751 = vmul.f32 %v683, %v731
      %v752 = vmul.f32 %v684, %v731
      %v753 = vmul.f32 %v685, %v731
      %v754 = vmul.f32 %v686, %v731
      %v755 = vmul.f32 %v687, %v731
      %v756 = vmul.f32 %v688, %v731
      %v757 = vmul.f32 %v689, %v731
      %v758 = vmul.f32 %v690, %v731
      %v759 = vmul.f32 %v691, %v731
      %v760 = vmul.f32 %v692, %v731
      %v761 = vmul.f32 %v693, %v731
      %v762 = vmul.f32 %v694, %v731
      %v763 = vmul.f32 %v695, %v731
      %v764 = vmul.f32 %v696, %v731
      %v765 = vmul.f32 %v697, %v731
      %v766 = vmul.f32 %v698, %v731
      %v767 = vmul.f32 %v699, %v731
      %v768 = vmul.f32 %v700, %v731
      %v769 = vmul.f32 %v701, %v731
      %v770 = vmul.f32 %v702, %v731
      %v771 = vmul.f32 %v703, %v731
      %v772 = vmul.f32 %v704, %v731
      %v773 = vmul.f32 %v705, %v731
      %v774 = vmul.f32 %v706, %v731
      %v775 = vmul.f32 %v707, %v731
      %v776 = vmul.f32 %v708, %v731
      %v777 = vmul.f32 %v709, %v731
      %v778 = vmul.f32 %v710, %v731
      %v779 = vmul.f32 %v711, %v731
      %v780 = vmul.f32 %v712, %v731
      %v781 = vmul.f32 %v713, %v731
      %v782 = vmul.f32 %v714, %v731
      %v783 = vmul.f32 %v715, %v731
      %v784 = vmul.f32 %v716, %v731
      %v785 = vmul.f32 %v717, %v731
      %v786 = vmul.f32 %v718, %v731
      %v787 = vmul.f32 %v719, %v731
      %v788 = vmul.f32 %v720, %v731
      %v789 = vmul.f32 %v721, %v731
      %v790 = vmul.f32 %v722, %v731
      %v791 = vmul.f32 %v723, %v731
      %v792 = vmul.f32 %v724, %v731
      %v793 = vmul.f32 %v725, %v731
      %v794 = vmul.f32 %v726, %v731
      %v795 = vmul.f32 %v727, %v731
      %v796 = vmul.f32 %v728, %v731
      %v797 = vsel %vm450, %v733, 0.0
      %798 = vadd.xlane.f32.xlu0 %v797
      %v799 = vpop.xlane.xlu0 %798
      %v800 = vsel %vm450, %v734, 0.0
      %801 = vadd.xlane.f32.xlu0 %v800
      %v802 = vpop.xlane.xlu0 %801
      %v803 = vsel %vm450, %v735, 0.0
      %804 = vadd.xlane.f32.xlu0 %v803
      %v805 = vpop.xlane.xlu0 %804
      %v806 = vsel %vm450, %v736, 0.0
      %807 = vadd.xlane.f32.xlu0 %v806
      %v808 = vpop.xlane.xlu0 %807
      %v809 = vsel %vm450, %v737, 0.0
      %810 = vadd.xlane.f32.xlu0 %v809
      %v811 = vpop.xlane.xlu0 %810
      %v812 = vsel %vm450, %v738, 0.0
      %813 = vadd.xlane.f32.xlu0 %v812
      %v814 = vpop.xlane.xlu0 %813
      %v815 = vsel %vm450, %v739, 0.0
      %816 = vadd.xlane.f32.xlu0 %v815
      %v817 = vpop.xlane.xlu0 %816
      %v818 = vsel %vm450, %v740, 0.0
      %819 = vadd.xlane.f32.xlu0 %v818
      %v820 = vpop.xlane.xlu0 %819
      %v821 = vsel %vm450, %v741, 0.0
      %822 = vadd.xlane.f32.xlu0 %v821
      %v823 = vpop.xlane.xlu0 %822
      %v824 = vsel %vm450, %v742, 0.0
      %825 = vadd.xlane.f32.xlu0 %v824
      %v826 = vpop.xlane.xlu0 %825
      %v827 = vsel %vm450, %v743, 0.0
      %828 = vadd.xlane.f32.xlu0 %v827
      %v829 = vpop.xlane.xlu0 %828
      %v830 = vsel %vm450, %v744, 0.0
      %831 = vadd.xlane.f32.xlu0 %v830
      %v832 = vpop.xlane.xlu0 %831
      %v833 = vsel %vm450, %v745, 0.0
      %834 = vadd.xlane.f32.xlu0 %v833
      %v835 = vpop.xlane.xlu0 %834
      %v836 = vsel %vm450, %v746, 0.0
      %837 = vadd.xlane.f32.xlu0 %v836
      %v838 = vpop.xlane.xlu0 %837
      %v839 = vsel %vm450, %v747, 0.0
      %840 = vadd.xlane.f32.xlu0 %v839
      %v841 = vpop.xlane.xlu0 %840
      %v842 = vsel %vm450, %v748, 0.0
      %843 = vadd.xlane.f32.xlu0 %v842
      %v844 = vpop.xlane.xlu0 %843
      %v845 = vsel %vm450, %v749, 0.0
      %846 = vadd.xlane.f32.xlu0 %v845
      %v847 = vpop.xlane.xlu0 %846
      %v848 = vsel %vm450, %v750, 0.0
      %849 = vadd.xlane.f32.xlu0 %v848
      %v850 = vpop.xlane.xlu0 %849
      %v851 = vsel %vm450, %v751, 0.0
      %852 = vadd.xlane.f32.xlu0 %v851
      %v853 = vpop.xlane.xlu0 %852
      %v854 = vsel %vm450, %v752, 0.0
      %855 = vadd.xlane.f32.xlu0 %v854
      %v856 = vpop.xlane.xlu0 %855
      %v857 = vsel %vm450, %v753, 0.0
      %858 = vadd.xlane.f32.xlu0 %v857
      %v859 = vpop.xlane.xlu0 %858
      %v860 = vsel %vm450, %v754, 0.0
      %861 = vadd.xlane.f32.xlu0 %v860
      %v862 = vpop.xlane.xlu0 %861
      %v863 = vsel %vm450, %v755, 0.0
      %864 = vadd.xlane.f32.xlu0 %v863
      %v865 = vpop.xlane.xlu0 %864
      %v866 = vsel %vm450, %v756, 0.0
      %867 = vadd.xlane.f32.xlu0 %v866
      %v868 = vpop.xlane.xlu0 %867
      %v869 = vsel %vm450, %v757, 0.0
      %870 = vadd.xlane.f32.xlu0 %v869
      %v871 = vpop.xlane.xlu0 %870
      %v872 = vsel %vm450, %v758, 0.0
      %873 = vadd.xlane.f32.xlu0 %v872
      %v874 = vpop.xlane.xlu0 %873
      %v875 = vsel %vm450, %v759, 0.0
      %876 = vadd.xlane.f32.xlu0 %v875
      %v877 = vpop.xlane.xlu0 %876
      %v878 = vsel %vm450, %v760, 0.0
      %879 = vadd.xlane.f32.xlu0 %v878
      %v880 = vpop.xlane.xlu0 %879
      %v881 = vsel %vm450, %v761, 0.0
      %882 = vadd.xlane.f32.xlu0 %v881
      %v883 = vpop.xlane.xlu0 %882
      %v884 = vsel %vm450, %v762, 0.0
      %885 = vadd.xlane.f32.xlu0 %v884
      %v886 = vpop.xlane.xlu0 %885
      %v887 = vsel %vm450, %v763, 0.0
      %888 = vadd.xlane.f32.xlu0 %v887
      %v889 = vpop.xlane.xlu0 %888
      %v890 = vsel %vm450, %v764, 0.0
      %891 = vadd.xlane.f32.xlu0 %v890
      %v892 = vpop.xlane.xlu0 %891
      %v893 = vsel %vm450, %v765, 0.0
      %894 = vadd.xlane.f32.xlu0 %v893
      %v895 = vpop.xlane.xlu0 %894
      %v896 = vsel %vm450, %v766, 0.0
      %897 = vadd.xlane.f32.xlu0 %v896
      %v898 = vpop.xlane.xlu0 %897
      %v899 = vsel %vm450, %v767, 0.0
      %900 = vadd.xlane.f32.xlu0 %v899
      %v901 = vpop.xlane.xlu0 %900
      %v902 = vsel %vm450, %v768, 0.0
      %903 = vadd.xlane.f32.xlu0 %v902
      %v904 = vpop.xlane.xlu0 %903
      %v905 = vsel %vm450, %v769, 0.0
      %906 = vadd.xlane.f32.xlu0 %v905
      %v907 = vpop.xlane.xlu0 %906
      %v908 = vsel %vm450, %v770, 0.0
      %909 = vadd.xlane.f32.xlu0 %v908
      %v910 = vpop.xlane.xlu0 %909
      %v911 = vsel %vm450, %v771, 0.0
      %912 = vadd.xlane.f32.xlu0 %v911
      %v913 = vpop.xlane.xlu0 %912
      %v914 = vsel %vm450, %v772, 0.0
      %915 = vadd.xlane.f32.xlu0 %v914
      %v916 = vpop.xlane.xlu0 %915
      %v917 = vsel %vm450, %v773, 0.0
      %918 = vadd.xlane.f32.xlu0 %v917
      %v919 = vpop.xlane.xlu0 %918
      %v920 = vsel %vm450, %v774, 0.0
      %921 = vadd.xlane.f32.xlu0 %v920
      %v922 = vpop.xlane.xlu0 %921
      %v923 = vsel %vm450, %v775, 0.0
      %924 = vadd.xlane.f32.xlu0 %v923
      %v925 = vpop.xlane.xlu0 %924
      %v926 = vsel %vm450, %v776, 0.0
      %927 = vadd.xlane.f32.xlu0 %v926
      %v928 = vpop.xlane.xlu0 %927
      %v929 = vsel %vm450, %v777, 0.0
      %930 = vadd.xlane.f32.xlu0 %v929
      %v931 = vpop.xlane.xlu0 %930
      %v932 = vsel %vm450, %v778, 0.0
      %933 = vadd.xlane.f32.xlu0 %v932
      %v934 = vpop.xlane.xlu0 %933
      %v935 = vsel %vm450, %v779, 0.0
      %936 = vadd.xlane.f32.xlu0 %v935
      %v937 = vpop.xlane.xlu0 %936
      %v938 = vsel %vm450, %v780, 0.0
      %939 = vadd.xlane.f32.xlu0 %v938
      %v940 = vpop.xlane.xlu0 %939
      %v941 = vsel %vm450, %v781, 0.0
      %942 = vadd.xlane.f32.xlu0 %v941
      %v943 = vpop.xlane.xlu0 %942
      %v944 = vsel %vm450, %v782, 0.0
      %945 = vadd.xlane.f32.xlu0 %v944
      %v946 = vpop.xlane.xlu0 %945
      %v947 = vsel %vm450, %v783, 0.0
      %948 = vadd.xlane.f32.xlu0 %v947
      %v949 = vpop.xlane.xlu0 %948
      %v950 = vsel %vm450, %v784, 0.0
      %951 = vadd.xlane.f32.xlu0 %v950
      %v952 = vpop.xlane.xlu0 %951
      %v953 = vsel %vm450, %v785, 0.0
      %954 = vadd.xlane.f32.xlu0 %v953
      %v955 = vpop.xlane.xlu0 %954
      %v956 = vsel %vm450, %v786, 0.0
      %957 = vadd.xlane.f32.xlu0 %v956
      %v958 = vpop.xlane.xlu0 %957
      %v959 = vsel %vm450, %v787, 0.0
      %960 = vadd.xlane.f32.xlu0 %v959
      %v961 = vpop.xlane.xlu0 %960
      %v962 = vsel %vm450, %v788, 0.0
      %963 = vadd.xlane.f32.xlu0 %v962
      %v964 = vpop.xlane.xlu0 %963
      %v965 = vsel %vm450, %v789, 0.0
      %966 = vadd.xlane.f32.xlu0 %v965
      %v967 = vpop.xlane.xlu0 %966
      %v968 = vsel %vm450, %v790, 0.0
      %969 = vadd.xlane.f32.xlu0 %v968
      %v970 = vpop.xlane.xlu0 %969
      %v971 = vsel %vm450, %v791, 0.0
      %972 = vadd.xlane.f32.xlu0 %v971
      %v973 = vpop.xlane.xlu0 %972
      %v974 = vsel %vm450, %v792, 0.0
      %975 = vadd.xlane.f32.xlu0 %v974
      %v976 = vpop.xlane.xlu0 %975
      %v977 = vsel %vm450, %v793, 0.0
      %978 = vadd.xlane.f32.xlu0 %v977
      %v979 = vpop.xlane.xlu0 %978
      %v980 = vsel %vm450, %v794, 0.0
      %981 = vadd.xlane.f32.xlu0 %v980
      %v982 = vpop.xlane.xlu0 %981
      %v983 = vsel %vm450, %v795, 0.0
      %984 = vadd.xlane.f32.xlu0 %v983
      %v985 = vpop.xlane.xlu0 %984
      %v986 = vsel %vm450, %v796, 0.0
      %987 = vadd.xlane.f32.xlu0 %v986
      %v988 = vpop.xlane.xlu0 %987
      %v1053 = vlaneseq
      %v1054 = vand.u32 %v1053, 127
      %v1055 = vperm.slane %v799, %v1054
      %v1056 = vadd.s32 %v1054, 4294967288
      %v1057 = vperm.slane %v802, %v1056
      %vm1058 = vcmask 130112
      %v1059 = vsel %vm1058, %v1057, %v1055
      %v1060 = vadd.s32 %v1054, 4294967280
      %v1061 = vperm.slane %v805, %v1060
      %vm1062 = vcmask 195712
      %v1063 = vsel %vm1062, %v1061, %v1059
      %v1064 = vadd.s32 %v1054, 4294967272
      %v1065 = vperm.slane %v808, %v1064
      %vm1066 = vcmask 261312
      %v1067 = vsel %vm1066, %v1065, %v1063
      %v1068 = vadd.s32 %v1054, 4294967264
      %v1069 = vperm.slane %v811, %v1068
      %vm1070 = vcmask 326912
      %v1071 = vsel %vm1070, %v1069, %v1067
      %v1072 = vadd.s32 %v1054, 4294967256
      %v1073 = vperm.slane %v814, %v1072
      %vm1074 = vcmask 392512
      %v1075 = vsel %vm1074, %v1073, %v1071
      %v1076 = vadd.s32 %v1054, 4294967248
      %v1077 = vperm.slane %v817, %v1076
      %vm1078 = vcmask 458112
      %v1079 = vsel %vm1078, %v1077, %v1075
      %v1080 = vadd.s32 %v1054, 4294967240
      %v1081 = vperm.slane %v820, %v1080
      %vm1082 = vcmask 523712
      %v1083 = vsel %vm1082, %v1081, %v1079
      %v1084 = vadd.s32 %v1054, 4294967232
      %v1085 = vperm.slane %v823, %v1084
      %vm1086 = vcmask 589312
      %v1087 = vsel %vm1086, %v1085, %v1083
      %v1088 = vadd.s32 %v1054, 4294967224
      %v1089 = vperm.slane %v826, %v1088
      %vm1090 = vcmask 654912
      %v1091 = vsel %vm1090, %v1089, %v1087
      %v1092 = vadd.s32 %v1054, 4294967216
      %v1093 = vperm.slane %v829, %v1092
      %vm1094 = vcmask 720512
      %v1095 = vsel %vm1094, %v1093, %v1091
      %v1096 = vadd.s32 %v1054, 4294967208
      %v1097 = vperm.slane %v832, %v1096
      %vm1098 = vcmask 786112
      %v1099 = vsel %vm1098, %v1097, %v1095
      %v1100 = vadd.s32 %v1054, 4294967200
      %v1101 = vperm.slane %v835, %v1100
      %vm1102 = vcmask 851712
      %v1103 = vsel %vm1102, %v1101, %v1099
      %v1104 = vadd.s32 %v1054, 4294967192
      %v1105 = vperm.slane %v838, %v1104
      %vm1106 = vcmask 917312
      %v1107 = vsel %vm1106, %v1105, %v1103
      %v1108 = vadd.s32 %v1054, 4294967184
      %v1109 = vperm.slane %v841, %v1108
      %vm1110 = vcmask 982912
      %v1111 = vsel %vm1110, %v1109, %v1107
      %v1112 = vadd.s32 %v1054, 4294967176
      %v1113 = vperm.slane %v844, %v1112
      %vm1114 = vcmask 1048512
      %v1115 = vsel %vm1114, %v1113, %v1111
      %v1116 = vperm.slane %v847, %v1054
      %v1117 = vperm.slane %v850, %v1056
      %v1118 = vsel %vm1058, %v1117, %v1116
      %v1119 = vperm.slane %v853, %v1060
      %v1120 = vsel %vm1062, %v1119, %v1118
      %v1121 = vperm.slane %v856, %v1064
      %v1122 = vsel %vm1066, %v1121, %v1120
      %v1123 = vperm.slane %v859, %v1068
      %v1124 = vsel %vm1070, %v1123, %v1122
      %v1125 = vperm.slane %v862, %v1072
      %v1126 = vsel %vm1074, %v1125, %v1124
      %v1127 = vperm.slane %v865, %v1076
      %v1128 = vsel %vm1078, %v1127, %v1126
      %v1129 = vperm.slane %v868, %v1080
      %v1130 = vsel %vm1082, %v1129, %v1128
      %v1131 = vperm.slane %v871, %v1084
      %v1132 = vsel %vm1086, %v1131, %v1130
      %v1133 = vperm.slane %v874, %v1088
      %v1134 = vsel %vm1090, %v1133, %v1132
      %v1135 = vperm.slane %v877, %v1092
      %v1136 = vsel %vm1094, %v1135, %v1134
      %v1137 = vperm.slane %v880, %v1096
      %v1138 = vsel %vm1098, %v1137, %v1136
      %v1139 = vperm.slane %v883, %v1100
      %v1140 = vsel %vm1102, %v1139, %v1138
      %v1141 = vperm.slane %v886, %v1104
      %v1142 = vsel %vm1106, %v1141, %v1140
      %v1143 = vperm.slane %v889, %v1108
      %v1144 = vsel %vm1110, %v1143, %v1142
      %v1145 = vperm.slane %v892, %v1112
      %v1146 = vsel %vm1114, %v1145, %v1144
      %v1147 = vperm.slane %v895, %v1054
      %v1148 = vperm.slane %v898, %v1056
      %v1149 = vsel %vm1058, %v1148, %v1147
      %v1150 = vperm.slane %v901, %v1060
      %v1151 = vsel %vm1062, %v1150, %v1149
      %v1152 = vperm.slane %v904, %v1064
      %v1153 = vsel %vm1066, %v1152, %v1151
      %v1154 = vperm.slane %v907, %v1068
      %v1155 = vsel %vm1070, %v1154, %v1153
      %v1156 = vperm.slane %v910, %v1072
      %v1157 = vsel %vm1074, %v1156, %v1155
      %v1158 = vperm.slane %v913, %v1076
      %v1159 = vsel %vm1078, %v1158, %v1157
      %v1160 = vperm.slane %v916, %v1080
      %v1161 = vsel %vm1082, %v1160, %v1159
      %v1162 = vperm.slane %v919, %v1084
      %v1163 = vsel %vm1086, %v1162, %v1161
      %v1164 = vperm.slane %v922, %v1088
      %v1165 = vsel %vm1090, %v1164, %v1163
      %v1166 = vperm.slane %v925, %v1092
      %v1167 = vsel %vm1094, %v1166, %v1165
      %v1168 = vperm.slane %v928, %v1096
      %v1169 = vsel %vm1098, %v1168, %v1167
      %v1170 = vperm.slane %v931, %v1100
      %v1171 = vsel %vm1102, %v1170, %v1169
      %v1172 = vperm.slane %v934, %v1104
      %v1173 = vsel %vm1106, %v1172, %v1171
      %v1174 = vperm.slane %v937, %v1108
      %v1175 = vsel %vm1110, %v1174, %v1173
      %v1176 = vperm.slane %v940, %v1112
      %v1177 = vsel %vm1114, %v1176, %v1175
      %v1178 = vperm.slane %v943, %v1054
      %v1179 = vperm.slane %v946, %v1056
      %v1180 = vsel %vm1058, %v1179, %v1178
      %v1181 = vperm.slane %v949, %v1060
      %v1182 = vsel %vm1062, %v1181, %v1180
      %v1183 = vperm.slane %v952, %v1064
      %v1184 = vsel %vm1066, %v1183, %v1182
      %v1185 = vperm.slane %v955, %v1068
      %v1186 = vsel %vm1070, %v1185, %v1184
      %v1187 = vperm.slane %v958, %v1072
      %v1188 = vsel %vm1074, %v1187, %v1186
      %v1189 = vperm.slane %v961, %v1076
      %v1190 = vsel %vm1078, %v1189, %v1188
      %v1191 = vperm.slane %v964, %v1080
      %v1192 = vsel %vm1082, %v1191, %v1190
      %v1193 = vperm.slane %v967, %v1084
      %v1194 = vsel %vm1086, %v1193, %v1192
      %v1195 = vperm.slane %v970, %v1088
      %v1196 = vsel %vm1090, %v1195, %v1194
      %v1197 = vperm.slane %v973, %v1092
      %v1198 = vsel %vm1094, %v1197, %v1196
      %v1199 = vperm.slane %v976, %v1096
      %v1200 = vsel %vm1098, %v1199, %v1198
      %v1201 = vperm.slane %v979, %v1100
      %v1202 = vsel %vm1102, %v1201, %v1200
      %v1203 = vperm.slane %v982, %v1104
      %v1204 = vsel %vm1106, %v1203, %v1202
      %v1205 = vperm.slane %v985, %v1108
      %v1206 = vsel %vm1110, %v1205, %v1204
      %v1207 = vperm.slane %v988, %v1112
      %v1208 = vsel %vm1114, %v1207, %v1206
      %vm1209 = vcmask 1041409
      %v1210 = vsel %vm1209, %v1177, %v1115
      %v1211 = vsel %vm1209, %v1208, %v1146
      %vm1214 = vcmask 1041408
      %v1215 = vsel %vm1214, %v1210, -inf
      %v1216 = vsel %vm1214, %v1211, -inf
      %v1217 = vmax.f32 %v1215, %v1216
      %1218 = vmax.xlane.f32.xlu0 %v1217
      %v1219 = vpop.xlane.xlu0 %1218
      %v1221 = vperm.slane %v1219, 0
      %v1222 = vperm.slane %v1219, 1
      %v1225 = vsub.f32 %v799, %v1221
      %v1226 = vsub.f32 %v802, %v1221
      %v1227 = vsub.f32 %v805, %v1221
      %v1228 = vsub.f32 %v808, %v1221
      %v1229 = vsub.f32 %v811, %v1221
      %v1230 = vsub.f32 %v814, %v1221
      %v1231 = vsub.f32 %v817, %v1221
      %v1232 = vsub.f32 %v820, %v1221
      %v1233 = vsub.f32 %v823, %v1221
      %v1234 = vsub.f32 %v826, %v1221
      %v1235 = vsub.f32 %v829, %v1221
      %v1236 = vsub.f32 %v832, %v1221
      %v1237 = vsub.f32 %v835, %v1221
      %v1238 = vsub.f32 %v838, %v1221
      %v1239 = vsub.f32 %v841, %v1221
      %v1240 = vsub.f32 %v844, %v1221
      %v1241 = vsub.f32 %v847, %v1221
      %v1242 = vsub.f32 %v850, %v1221
      %v1243 = vsub.f32 %v853, %v1221
      %v1244 = vsub.f32 %v856, %v1221
      %v1245 = vsub.f32 %v859, %v1221
      %v1246 = vsub.f32 %v862, %v1221
      %v1247 = vsub.f32 %v865, %v1221
      %v1248 = vsub.f32 %v868, %v1221
      %v1249 = vsub.f32 %v871, %v1221
      %v1250 = vsub.f32 %v874, %v1221
      %v1251 = vsub.f32 %v877, %v1221
      %v1252 = vsub.f32 %v880, %v1221
      %v1253 = vsub.f32 %v883, %v1221
      %v1254 = vsub.f32 %v886, %v1221
      %v1255 = vsub.f32 %v889, %v1221
      %v1256 = vsub.f32 %v892, %v1221
      %v1257 = vsub.f32 %v895, %v1222
      %v1258 = vsub.f32 %v898, %v1222
      %v1259 = vsub.f32 %v901, %v1222
      %v1260 = vsub.f32 %v904, %v1222
      %v1261 = vsub.f32 %v907, %v1222
      %v1262 = vsub.f32 %v910, %v1222
      %v1263 = vsub.f32 %v913, %v1222
      %v1264 = vsub.f32 %v916, %v1222
      %v1265 = vsub.f32 %v919, %v1222
      %v1266 = vsub.f32 %v922, %v1222
      %v1267 = vsub.f32 %v925, %v1222
      %v1268 = vsub.f32 %v928, %v1222
      %v1269 = vsub.f32 %v931, %v1222
      %v1270 = vsub.f32 %v934, %v1222
      %v1271 = vsub.f32 %v937, %v1222
      %v1272 = vsub.f32 %v940, %v1222
      %v1273 = vsub.f32 %v943, %v1222
      %v1274 = vsub.f32 %v946, %v1222
      %v1275 = vsub.f32 %v949, %v1222
      %v1276 = vsub.f32 %v952, %v1222
      %v1277 = vsub.f32 %v955, %v1222
      %v1278 = vsub.f32 %v958, %v1222
      %v1279 = vsub.f32 %v961, %v1222
      %v1280 = vsub.f32 %v964, %v1222
      %v1281 = vsub.f32 %v967, %v1222
      %v1282 = vsub.f32 %v970, %v1222
      %v1283 = vsub.f32 %v973, %v1222
      %v1284 = vsub.f32 %v976, %v1222
      %v1285 = vsub.f32 %v979, %v1222
      %v1286 = vsub.f32 %v982, %v1222
      %v1287 = vsub.f32 %v985, %v1222
      %v1288 = vsub.f32 %v988, %v1222
      %v1289 = vmul.f32 %v1225, 1.442695
      %v1290 = vpow.pop %v1289
      %v1291 = vmul.f32 %v1226, 1.442695
      %v1292 = vpow.pop %v1291
      %v1293 = vmul.f32 %v1227, 1.442695
      %v1294 = vpow.pop %v1293
      %v1295 = vmul.f32 %v1228, 1.442695
      %v1296 = vpow.pop %v1295
      %v1297 = vmul.f32 %v1229, 1.442695
      %v1298 = vpow.pop %v1297
      %v1299 = vmul.f32 %v1230, 1.442695
      %v1300 = vpow.pop %v1299
      %v1301 = vmul.f32 %v1231, 1.442695
      %v1302 = vpow.pop %v1301
      %v1303 = vmul.f32 %v1232, 1.442695
      %v1304 = vpow.pop %v1303
      %v1305 = vmul.f32 %v1233, 1.442695
      %v1306 = vpow.pop %v1305
      %v1307 = vmul.f32 %v1234, 1.442695
      %v1308 = vpow.pop %v1307
      %v1309 = vmul.f32 %v1235, 1.442695
      %v1310 = vpow.pop %v1309
      %v1311 = vmul.f32 %v1236, 1.442695
      %v1312 = vpow.pop %v1311
      %v1313 = vmul.f32 %v1237, 1.442695
      %v1314 = vpow.pop %v1313
      %v1315 = vmul.f32 %v1238, 1.442695
      %v1316 = vpow.pop %v1315
      %v1317 = vmul.f32 %v1239, 1.442695
      %v1318 = vpow.pop %v1317
      %v1319 = vmul.f32 %v1240, 1.442695
      %v1320 = vpow.pop %v1319
      %v1321 = vmul.f32 %v1241, 1.442695
      %v1322 = vpow.pop %v1321
      %v1323 = vmul.f32 %v1242, 1.442695
      %v1324 = vpow.pop %v1323
      %v1325 = vmul.f32 %v1243, 1.442695
      %v1326 = vpow.pop %v1325
      %v1327 = vmul.f32 %v1244, 1.442695
      %v1328 = vpow.pop %v1327
      %v1329 = vmul.f32 %v1245, 1.442695
      %v1330 = vpow.pop %v1329
      %v1331 = vmul.f32 %v1246, 1.442695
      %v1332 = vpow.pop %v1331
      %v1333 = vmul.f32 %v1247, 1.442695
      %v1334 = vpow.pop %v1333
      %v1335 = vmul.f32 %v1248, 1.442695
      %v1336 = vpow.pop %v1335
      %v1337 = vmul.f32 %v1249, 1.442695
      %v1338 = vpow.pop %v1337
      %v1339 = vmul.f32 %v1250, 1.442695
      %v1340 = vpow.pop %v1339
      %v1341 = vmul.f32 %v1251, 1.442695
      %v1342 = vpow.pop %v1341
      %v1343 = vmul.f32 %v1252, 1.442695
      %v1344 = vpow.pop %v1343
      %v1345 = vmul.f32 %v1253, 1.442695
      %v1346 = vpow.pop %v1345
      %v1347 = vmul.f32 %v1254, 1.442695
      %v1348 = vpow.pop %v1347
      %v1349 = vmul.f32 %v1255, 1.442695
      %v1350 = vpow.pop %v1349
      %v1351 = vmul.f32 %v1256, 1.442695
      %v1352 = vpow.pop %v1351
      %v1353 = vmul.f32 %v1257, 1.442695
      %v1354 = vpow.pop %v1353
      %v1355 = vmul.f32 %v1258, 1.442695
      %v1356 = vpow.pop %v1355
      %v1357 = vmul.f32 %v1259, 1.442695
      %v1358 = vpow.pop %v1357
      %v1359 = vmul.f32 %v1260, 1.442695
      %v1360 = vpow.pop %v1359
      %v1361 = vmul.f32 %v1261, 1.442695
      %v1362 = vpow.pop %v1361
      %v1363 = vmul.f32 %v1262, 1.442695
      %v1364 = vpow.pop %v1363
      %v1365 = vmul.f32 %v1263, 1.442695
      %v1366 = vpow.pop %v1365
      %v1367 = vmul.f32 %v1264, 1.442695
      %v1368 = vpow.pop %v1367
      %v1369 = vmul.f32 %v1265, 1.442695
      %v1370 = vpow.pop %v1369
      %v1371 = vmul.f32 %v1266, 1.442695
      %v1372 = vpow.pop %v1371
      %v1373 = vmul.f32 %v1267, 1.442695
      %v1374 = vpow.pop %v1373
      %v1375 = vmul.f32 %v1268, 1.442695
      %v1376 = vpow.pop %v1375
      %v1377 = vmul.f32 %v1269, 1.442695
      %v1378 = vpow.pop %v1377
      %v1379 = vmul.f32 %v1270, 1.442695
      %v1380 = vpow.pop %v1379
      %v1381 = vmul.f32 %v1271, 1.442695
      %v1382 = vpow.pop %v1381
      %v1383 = vmul.f32 %v1272, 1.442695
      %v1384 = vpow.pop %v1383
      %v1385 = vmul.f32 %v1273, 1.442695
      %v1386 = vpow.pop %v1385
      %v1387 = vmul.f32 %v1274, 1.442695
      %v1388 = vpow.pop %v1387
      %v1389 = vmul.f32 %v1275, 1.442695
      %v1390 = vpow.pop %v1389
      %v1391 = vmul.f32 %v1276, 1.442695
      %v1392 = vpow.pop %v1391
      %v1393 = vmul.f32 %v1277, 1.442695
      %v1394 = vpow.pop %v1393
      %v1395 = vmul.f32 %v1278, 1.442695
      %v1396 = vpow.pop %v1395
      %v1397 = vmul.f32 %v1279, 1.442695
      %v1398 = vpow.pop %v1397
      %v1399 = vmul.f32 %v1280, 1.442695
      %v1400 = vpow.pop %v1399
      %v1401 = vmul.f32 %v1281, 1.442695
      %v1402 = vpow.pop %v1401
      %v1403 = vmul.f32 %v1282, 1.442695
      %v1404 = vpow.pop %v1403
      %v1405 = vmul.f32 %v1283, 1.442695
      %v1406 = vpow.pop %v1405
      %v1407 = vmul.f32 %v1284, 1.442695
      %v1408 = vpow.pop %v1407
      %v1409 = vmul.f32 %v1285, 1.442695
      %v1410 = vpow.pop %v1409
      %v1411 = vmul.f32 %v1286, 1.442695
      %v1412 = vpow.pop %v1411
      %v1413 = vmul.f32 %v1287, 1.442695
      %v1414 = vpow.pop %v1413
      %v1415 = vmul.f32 %v1288, 1.442695
      %v1416 = vpow.pop %v1415
      %1481 = vset.pattern.permute.xlu0 0
      %1482 = vperm.xlu0 %1481, %v1290
      %v1483 = vpop.permute.xlu0 %1482
      %1484 = vset.pattern.permute.xlu0 0
      %1485 = vperm.xlu0 %1484, %v1292
      %v1486 = vpop.permute.xlu0 %1485
      %1487 = vset.pattern.permute.xlu0 0
      %1488 = vperm.xlu0 %1487, %v1294
      %v1489 = vpop.permute.xlu0 %1488
      %1490 = vset.pattern.permute.xlu0 0
      %1491 = vperm.xlu0 %1490, %v1296
      %v1492 = vpop.permute.xlu0 %1491
      %1493 = vset.pattern.permute.xlu0 0
      %1494 = vperm.xlu0 %1493, %v1298
      %v1495 = vpop.permute.xlu0 %1494
      %1496 = vset.pattern.permute.xlu0 0
      %1497 = vperm.xlu0 %1496, %v1300
      %v1498 = vpop.permute.xlu0 %1497
      %1499 = vset.pattern.permute.xlu0 0
      %1500 = vperm.xlu0 %1499, %v1302
      %v1501 = vpop.permute.xlu0 %1500
      %1502 = vset.pattern.permute.xlu0 0
      %1503 = vperm.xlu0 %1502, %v1304
      %v1504 = vpop.permute.xlu0 %1503
      %1505 = vset.pattern.permute.xlu0 0
      %1506 = vperm.xlu0 %1505, %v1306
      %v1507 = vpop.permute.xlu0 %1506
      %1508 = vset.pattern.permute.xlu0 0
      %1509 = vperm.xlu0 %1508, %v1308
      %v1510 = vpop.permute.xlu0 %1509
      %1511 = vset.pattern.permute.xlu0 0
      %1512 = vperm.xlu0 %1511, %v1310
      %v1513 = vpop.permute.xlu0 %1512
      %1514 = vset.pattern.permute.xlu0 0
      %1515 = vperm.xlu0 %1514, %v1312
      %v1516 = vpop.permute.xlu0 %1515
      %1517 = vset.pattern.permute.xlu0 0
      %1518 = vperm.xlu0 %1517, %v1314
      %v1519 = vpop.permute.xlu0 %1518
      %1520 = vset.pattern.permute.xlu0 0
      %1521 = vperm.xlu0 %1520, %v1316
      %v1522 = vpop.permute.xlu0 %1521
      %1523 = vset.pattern.permute.xlu0 0
      %1524 = vperm.xlu0 %1523, %v1318
      %v1525 = vpop.permute.xlu0 %1524
      %1526 = vset.pattern.permute.xlu0 0
      %1527 = vperm.xlu0 %1526, %v1320
      %v1528 = vpop.permute.xlu0 %1527
      %1529 = vset.pattern.permute.xlu0 0
      %1530 = vperm.xlu0 %1529, %v1322
      %v1531 = vpop.permute.xlu0 %1530
      %1532 = vset.pattern.permute.xlu0 0
      %1533 = vperm.xlu0 %1532, %v1324
      %v1534 = vpop.permute.xlu0 %1533
      %1535 = vset.pattern.permute.xlu0 0
      %1536 = vperm.xlu0 %1535, %v1326
      %v1537 = vpop.permute.xlu0 %1536
      %1538 = vset.pattern.permute.xlu0 0
      %1539 = vperm.xlu0 %1538, %v1328
      %v1540 = vpop.permute.xlu0 %1539
      %1541 = vset.pattern.permute.xlu0 0
      %1542 = vperm.xlu0 %1541, %v1330
      %v1543 = vpop.permute.xlu0 %1542
      %1544 = vset.pattern.permute.xlu0 0
      %1545 = vperm.xlu0 %1544, %v1332
      %v1546 = vpop.permute.xlu0 %1545
      %1547 = vset.pattern.permute.xlu0 0
      %1548 = vperm.xlu0 %1547, %v1334
      %v1549 = vpop.permute.xlu0 %1548
      %1550 = vset.pattern.permute.xlu0 0
      %1551 = vperm.xlu0 %1550, %v1336
      %v1552 = vpop.permute.xlu0 %1551
      %1553 = vset.pattern.permute.xlu0 0
      %1554 = vperm.xlu0 %1553, %v1338
      %v1555 = vpop.permute.xlu0 %1554
      %1556 = vset.pattern.permute.xlu0 0
      %1557 = vperm.xlu0 %1556, %v1340
      %v1558 = vpop.permute.xlu0 %1557
      %1559 = vset.pattern.permute.xlu0 0
      %1560 = vperm.xlu0 %1559, %v1342
      %v1561 = vpop.permute.xlu0 %1560
      %1562 = vset.pattern.permute.xlu0 0
      %1563 = vperm.xlu0 %1562, %v1344
      %v1564 = vpop.permute.xlu0 %1563
      %1565 = vset.pattern.permute.xlu0 0
      %1566 = vperm.xlu0 %1565, %v1346
      %v1567 = vpop.permute.xlu0 %1566
      %1568 = vset.pattern.permute.xlu0 0
      %1569 = vperm.xlu0 %1568, %v1348
      %v1570 = vpop.permute.xlu0 %1569
      %1571 = vset.pattern.permute.xlu0 0
      %1572 = vperm.xlu0 %1571, %v1350
      %v1573 = vpop.permute.xlu0 %1572
      %1574 = vset.pattern.permute.xlu0 0
      %1575 = vperm.xlu0 %1574, %v1352
      %v1576 = vpop.permute.xlu0 %1575
      %1577 = vset.pattern.permute.xlu0 0
      %1578 = vperm.xlu0 %1577, %v1354
      %v1579 = vpop.permute.xlu0 %1578
      %1580 = vset.pattern.permute.xlu0 0
      %1581 = vperm.xlu0 %1580, %v1356
      %v1582 = vpop.permute.xlu0 %1581
      %1583 = vset.pattern.permute.xlu0 0
      %1584 = vperm.xlu0 %1583, %v1358
      %v1585 = vpop.permute.xlu0 %1584
      %1586 = vset.pattern.permute.xlu0 0
      %1587 = vperm.xlu0 %1586, %v1360
      %v1588 = vpop.permute.xlu0 %1587
      %1589 = vset.pattern.permute.xlu0 0
      %1590 = vperm.xlu0 %1589, %v1362
      %v1591 = vpop.permute.xlu0 %1590
      %1592 = vset.pattern.permute.xlu0 0
      %1593 = vperm.xlu0 %1592, %v1364
      %v1594 = vpop.permute.xlu0 %1593
      %1595 = vset.pattern.permute.xlu0 0
      %1596 = vperm.xlu0 %1595, %v1366
      %v1597 = vpop.permute.xlu0 %1596
      %1598 = vset.pattern.permute.xlu0 0
      %1599 = vperm.xlu0 %1598, %v1368
      %v1600 = vpop.permute.xlu0 %1599
      %1601 = vset.pattern.permute.xlu0 0
      %1602 = vperm.xlu0 %1601, %v1370
      %v1603 = vpop.permute.xlu0 %1602
      %1604 = vset.pattern.permute.xlu0 0
      %1605 = vperm.xlu0 %1604, %v1372
      %v1606 = vpop.permute.xlu0 %1605
      %1607 = vset.pattern.permute.xlu0 0
      %1608 = vperm.xlu0 %1607, %v1374
      %v1609 = vpop.permute.xlu0 %1608
      %1610 = vset.pattern.permute.xlu0 0
      %1611 = vperm.xlu0 %1610, %v1376
      %v1612 = vpop.permute.xlu0 %1611
      %1613 = vset.pattern.permute.xlu0 0
      %1614 = vperm.xlu0 %1613, %v1378
      %v1615 = vpop.permute.xlu0 %1614
      %1616 = vset.pattern.permute.xlu0 0
      %1617 = vperm.xlu0 %1616, %v1380
      %v1618 = vpop.permute.xlu0 %1617
      %1619 = vset.pattern.permute.xlu0 0
      %1620 = vperm.xlu0 %1619, %v1382
      %v1621 = vpop.permute.xlu0 %1620
      %1622 = vset.pattern.permute.xlu0 0
      %1623 = vperm.xlu0 %1622, %v1384
      %v1624 = vpop.permute.xlu0 %1623
      %1625 = vset.pattern.permute.xlu0 0
      %1626 = vperm.xlu0 %1625, %v1386
      %v1627 = vpop.permute.xlu0 %1626
      %1628 = vset.pattern.permute.xlu0 0
      %1629 = vperm.xlu0 %1628, %v1388
      %v1630 = vpop.permute.xlu0 %1629
      %1631 = vset.pattern.permute.xlu0 0
      %1632 = vperm.xlu0 %1631, %v1390
      %v1633 = vpop.permute.xlu0 %1632
      %1634 = vset.pattern.permute.xlu0 0
      %1635 = vperm.xlu0 %1634, %v1392
      %v1636 = vpop.permute.xlu0 %1635
      %1637 = vset.pattern.permute.xlu0 0
      %1638 = vperm.xlu0 %1637, %v1394
      %v1639 = vpop.permute.xlu0 %1638
      %1640 = vset.pattern.permute.xlu0 0
      %1641 = vperm.xlu0 %1640, %v1396
      %v1642 = vpop.permute.xlu0 %1641
      %1643 = vset.pattern.permute.xlu0 0
      %1644 = vperm.xlu0 %1643, %v1398
      %v1645 = vpop.permute.xlu0 %1644
      %1646 = vset.pattern.permute.xlu0 0
      %1647 = vperm.xlu0 %1646, %v1400
      %v1648 = vpop.permute.xlu0 %1647
      %1649 = vset.pattern.permute.xlu0 0
      %1650 = vperm.xlu0 %1649, %v1402
      %v1651 = vpop.permute.xlu0 %1650
      %1652 = vset.pattern.permute.xlu0 0
      %1653 = vperm.xlu0 %1652, %v1404
      %v1654 = vpop.permute.xlu0 %1653
      %1655 = vset.pattern.permute.xlu0 0
      %1656 = vperm.xlu0 %1655, %v1406
      %v1657 = vpop.permute.xlu0 %1656
      %1658 = vset.pattern.permute.xlu0 0
      %1659 = vperm.xlu0 %1658, %v1408
      %v1660 = vpop.permute.xlu0 %1659
      %1661 = vset.pattern.permute.xlu0 0
      %1662 = vperm.xlu0 %1661, %v1410
      %v1663 = vpop.permute.xlu0 %1662
      %1664 = vset.pattern.permute.xlu0 0
      %1665 = vperm.xlu0 %1664, %v1412
      %v1666 = vpop.permute.xlu0 %1665
      %1667 = vset.pattern.permute.xlu0 0
      %1668 = vperm.xlu0 %1667, %v1414
      %v1669 = vpop.permute.xlu0 %1668
      %1670 = vset.pattern.permute.xlu0 0
      %1671 = vperm.xlu0 %1670, %v1416
      %v1672 = vpop.permute.xlu0 %1671
      %v1673 = vperm.slane %v1483, %v1054
      %v1674 = vperm.slane %v1486, %v1056
      %v1675 = vsel %vm1058, %v1674, %v1673
      %v1676 = vperm.slane %v1489, %v1060
      %v1677 = vsel %vm1062, %v1676, %v1675
      %v1678 = vperm.slane %v1492, %v1064
      %v1679 = vsel %vm1066, %v1678, %v1677
      %v1680 = vperm.slane %v1495, %v1068
      %v1681 = vsel %vm1070, %v1680, %v1679
      %v1682 = vperm.slane %v1498, %v1072
      %v1683 = vsel %vm1074, %v1682, %v1681
      %v1684 = vperm.slane %v1501, %v1076
      %v1685 = vsel %vm1078, %v1684, %v1683
      %v1686 = vperm.slane %v1504, %v1080
      %v1687 = vsel %vm1082, %v1686, %v1685
      %v1688 = vperm.slane %v1507, %v1084
      %v1689 = vsel %vm1086, %v1688, %v1687
      %v1690 = vperm.slane %v1510, %v1088
      %v1691 = vsel %vm1090, %v1690, %v1689
      %v1692 = vperm.slane %v1513, %v1092
      %v1693 = vsel %vm1094, %v1692, %v1691
      %v1694 = vperm.slane %v1516, %v1096
      %v1695 = vsel %vm1098, %v1694, %v1693
      %v1696 = vperm.slane %v1519, %v1100
      %v1697 = vsel %vm1102, %v1696, %v1695
      %v1698 = vperm.slane %v1522, %v1104
      %v1699 = vsel %vm1106, %v1698, %v1697
      %v1700 = vperm.slane %v1525, %v1108
      %v1701 = vsel %vm1110, %v1700, %v1699
      %v1702 = vperm.slane %v1528, %v1112
      %v1703 = vsel %vm1114, %v1702, %v1701
      %v1704 = vperm.slane %v1531, %v1054
      %v1705 = vperm.slane %v1534, %v1056
      %v1706 = vsel %vm1058, %v1705, %v1704
      %v1707 = vperm.slane %v1537, %v1060
      %v1708 = vsel %vm1062, %v1707, %v1706
      %v1709 = vperm.slane %v1540, %v1064
      %v1710 = vsel %vm1066, %v1709, %v1708
      %v1711 = vperm.slane %v1543, %v1068
      %v1712 = vsel %vm1070, %v1711, %v1710
      %v1713 = vperm.slane %v1546, %v1072
      %v1714 = vsel %vm1074, %v1713, %v1712
      %v1715 = vperm.slane %v1549, %v1076
      %v1716 = vsel %vm1078, %v1715, %v1714
      %v1717 = vperm.slane %v1552, %v1080
      %v1718 = vsel %vm1082, %v1717, %v1716
      %v1719 = vperm.slane %v1555, %v1084
      %v1720 = vsel %vm1086, %v1719, %v1718
      %v1721 = vperm.slane %v1558, %v1088
      %v1722 = vsel %vm1090, %v1721, %v1720
      %v1723 = vperm.slane %v1561, %v1092
      %v1724 = vsel %vm1094, %v1723, %v1722
      %v1725 = vperm.slane %v1564, %v1096
      %v1726 = vsel %vm1098, %v1725, %v1724
      %v1727 = vperm.slane %v1567, %v1100
      %v1728 = vsel %vm1102, %v1727, %v1726
      %v1729 = vperm.slane %v1570, %v1104
      %v1730 = vsel %vm1106, %v1729, %v1728
      %v1731 = vperm.slane %v1573, %v1108
      %v1732 = vsel %vm1110, %v1731, %v1730
      %v1733 = vperm.slane %v1576, %v1112
      %v1734 = vsel %vm1114, %v1733, %v1732
      %v1735 = vperm.slane %v1579, %v1054
      %v1736 = vperm.slane %v1582, %v1056
      %v1737 = vsel %vm1058, %v1736, %v1735
      %v1738 = vperm.slane %v1585, %v1060
      %v1739 = vsel %vm1062, %v1738, %v1737
      %v1740 = vperm.slane %v1588, %v1064
      %v1741 = vsel %vm1066, %v1740, %v1739
      %v1742 = vperm.slane %v1591, %v1068
      %v1743 = vsel %vm1070, %v1742, %v1741
      %v1744 = vperm.slane %v1594, %v1072
      %v1745 = vsel %vm1074, %v1744, %v1743
      %v1746 = vperm.slane %v1597, %v1076
      %v1747 = vsel %vm1078, %v1746, %v1745
      %v1748 = vperm.slane %v1600, %v1080
      %v1749 = vsel %vm1082, %v1748, %v1747
      %v1750 = vperm.slane %v1603, %v1084
      %v1751 = vsel %vm1086, %v1750, %v1749
      %v1752 = vperm.slane %v1606, %v1088
      %v1753 = vsel %vm1090, %v1752, %v1751
      %v1754 = vperm.slane %v1609, %v1092
      %v1755 = vsel %vm1094, %v1754, %v1753
      %v1756 = vperm.slane %v1612, %v1096
      %v1757 = vsel %vm1098, %v1756, %v1755
      %v1758 = vperm.slane %v1615, %v1100
      %v1759 = vsel %vm1102, %v1758, %v1757
      %v1760 = vperm.slane %v1618, %v1104
      %v1761 = vsel %vm1106, %v1760, %v1759
      %v1762 = vperm.slane %v1621, %v1108
      %v1763 = vsel %vm1110, %v1762, %v1761
      %v1764 = vperm.slane %v1624, %v1112
      %v1765 = vsel %vm1114, %v1764, %v1763
      %v1766 = vperm.slane %v1627, %v1054
      %v1767 = vperm.slane %v1630, %v1056
      %v1768 = vsel %vm1058, %v1767, %v1766
      %v1769 = vperm.slane %v1633, %v1060
      %v1770 = vsel %vm1062, %v1769, %v1768
      %v1771 = vperm.slane %v1636, %v1064
      %v1772 = vsel %vm1066, %v1771, %v1770
      %v1773 = vperm.slane %v1639, %v1068
      %v1774 = vsel %vm1070, %v1773, %v1772
      %v1775 = vperm.slane %v1642, %v1072
      %v1776 = vsel %vm1074, %v1775, %v1774
      %v1777 = vperm.slane %v1645, %v1076
      %v1778 = vsel %vm1078, %v1777, %v1776
      %v1779 = vperm.slane %v1648, %v1080
      %v1780 = vsel %vm1082, %v1779, %v1778
      %v1781 = vperm.slane %v1651, %v1084
      %v1782 = vsel %vm1086, %v1781, %v1780
      %v1783 = vperm.slane %v1654, %v1088
      %v1784 = vsel %vm1090, %v1783, %v1782
      %v1785 = vperm.slane %v1657, %v1092
      %v1786 = vsel %vm1094, %v1785, %v1784
      %v1787 = vperm.slane %v1660, %v1096
      %v1788 = vsel %vm1098, %v1787, %v1786
      %v1789 = vperm.slane %v1663, %v1100
      %v1790 = vsel %vm1102, %v1789, %v1788
      %v1791 = vperm.slane %v1666, %v1104
      %v1792 = vsel %vm1106, %v1791, %v1790
      %v1793 = vperm.slane %v1669, %v1108
      %v1794 = vsel %vm1110, %v1793, %v1792
      %v1795 = vperm.slane %v1672, %v1112
      %v1796 = vsel %vm1114, %v1795, %v1794
      %v1797 = vsel %vm1209, %v1765, %v1703
      %v1798 = vsel %vm1209, %v1796, %v1734
      %v1801 = vsel %vm1214, %v1797, 0.0
      %v1802 = vsel %vm1214, %v1798, 0.0
      %v1803 = vadd.f32 %v1801, %v1802
      %1804 = vadd.xlane.f32.xlu0 %v1803
      %v1805 = vpop.xlane.xlu0 %1804
      %v1806 = vrcp.pop %v1805
      %v1808 = vperm.slane %v1806, 0
      %v1809 = vperm.slane %v1806, 1
      %v1812 = vmul.f32 %v1290, %v1808
      %v1813 = vmul.f32 %v1292, %v1808
      %v1814 = vmul.f32 %v1294, %v1808
      %v1815 = vmul.f32 %v1296, %v1808
      %v1816 = vmul.f32 %v1298, %v1808
      %v1817 = vmul.f32 %v1300, %v1808
      %v1818 = vmul.f32 %v1302, %v1808
      %v1819 = vmul.f32 %v1304, %v1808
      %v1820 = vmul.f32 %v1306, %v1808
      %v1821 = vmul.f32 %v1308, %v1808
      %v1822 = vmul.f32 %v1310, %v1808
      %v1823 = vmul.f32 %v1312, %v1808
      %v1824 = vmul.f32 %v1314, %v1808
      %v1825 = vmul.f32 %v1316, %v1808
      %v1826 = vmul.f32 %v1318, %v1808
      %v1827 = vmul.f32 %v1320, %v1808
      %v1828 = vmul.f32 %v1322, %v1808
      %v1829 = vmul.f32 %v1324, %v1808
      %v1830 = vmul.f32 %v1326, %v1808
      %v1831 = vmul.f32 %v1328, %v1808
      %v1832 = vmul.f32 %v1330, %v1808
      %v1833 = vmul.f32 %v1332, %v1808
      %v1834 = vmul.f32 %v1334, %v1808
      %v1835 = vmul.f32 %v1336, %v1808
      %v1836 = vmul.f32 %v1338, %v1808
      %v1837 = vmul.f32 %v1340, %v1808
      %v1838 = vmul.f32 %v1342, %v1808
      %v1839 = vmul.f32 %v1344, %v1808
      %v1840 = vmul.f32 %v1346, %v1808
      %v1841 = vmul.f32 %v1348, %v1808
      %v1842 = vmul.f32 %v1350, %v1808
      %v1843 = vmul.f32 %v1352, %v1808
      %v1844 = vmul.f32 %v1354, %v1809
      %v1845 = vmul.f32 %v1356, %v1809
      %v1846 = vmul.f32 %v1358, %v1809
      %v1847 = vmul.f32 %v1360, %v1809
      %v1848 = vmul.f32 %v1362, %v1809
      %v1849 = vmul.f32 %v1364, %v1809
      %v1850 = vmul.f32 %v1366, %v1809
      %v1851 = vmul.f32 %v1368, %v1809
      %v1852 = vmul.f32 %v1370, %v1809
      %v1853 = vmul.f32 %v1372, %v1809
      %v1854 = vmul.f32 %v1374, %v1809
      %v1855 = vmul.f32 %v1376, %v1809
      %v1856 = vmul.f32 %v1378, %v1809
      %v1857 = vmul.f32 %v1380, %v1809
      %v1858 = vmul.f32 %v1382, %v1809
      %v1859 = vmul.f32 %v1384, %v1809
      %v1860 = vmul.f32 %v1386, %v1809
      %v1861 = vmul.f32 %v1388, %v1809
      %v1862 = vmul.f32 %v1390, %v1809
      %v1863 = vmul.f32 %v1392, %v1809
      %v1864 = vmul.f32 %v1394, %v1809
      %v1865 = vmul.f32 %v1396, %v1809
      %v1866 = vmul.f32 %v1398, %v1809
      %v1867 = vmul.f32 %v1400, %v1809
      %v1868 = vmul.f32 %v1402, %v1809
      %v1869 = vmul.f32 %v1404, %v1809
      %v1870 = vmul.f32 %v1406, %v1809
      %v1871 = vmul.f32 %v1408, %v1809
      %v1872 = vmul.f32 %v1410, %v1809
      %v1873 = vmul.f32 %v1412, %v1809
      %v1874 = vmul.f32 %v1414, %v1809
      %v1875 = vmul.f32 %v1416, %v1809
      %v1876 = vpack.c.bf16 %v1812, %v1812
      %v1877 = vpack.c.bf16 %v1813, %v1813
      %v1878 = vpack.c.bf16 %v1814, %v1814
      %v1879 = vpack.c.bf16 %v1815, %v1815
      %v1880 = vpack.c.bf16 %v1816, %v1816
      %v1881 = vpack.c.bf16 %v1817, %v1817
      %v1882 = vpack.c.bf16 %v1818, %v1818
      %v1883 = vpack.c.bf16 %v1819, %v1819
      %v1884 = vpack.c.bf16 %v1820, %v1820
      %v1885 = vpack.c.bf16 %v1821, %v1821
      %v1886 = vpack.c.bf16 %v1822, %v1822
      %v1887 = vpack.c.bf16 %v1823, %v1823
      %v1888 = vpack.c.bf16 %v1824, %v1824
      %v1889 = vpack.c.bf16 %v1825, %v1825
      %v1890 = vpack.c.bf16 %v1826, %v1826
      %v1891 = vpack.c.bf16 %v1827, %v1827
      %v1892 = vpack.c.bf16 %v1828, %v1828
      %v1893 = vpack.c.bf16 %v1829, %v1829
      %v1894 = vpack.c.bf16 %v1830, %v1830
      %v1895 = vpack.c.bf16 %v1831, %v1831
      %v1896 = vpack.c.bf16 %v1832, %v1832
      %v1897 = vpack.c.bf16 %v1833, %v1833
      %v1898 = vpack.c.bf16 %v1834, %v1834
      %v1899 = vpack.c.bf16 %v1835, %v1835
      %v1900 = vpack.c.bf16 %v1836, %v1836
      %v1901 = vpack.c.bf16 %v1837, %v1837
      %v1902 = vpack.c.bf16 %v1838, %v1838
      %v1903 = vpack.c.bf16 %v1839, %v1839
      %v1904 = vpack.c.bf16 %v1840, %v1840
      %v1905 = vpack.c.bf16 %v1841, %v1841
      %v1906 = vpack.c.bf16 %v1842, %v1842
      %v1907 = vpack.c.bf16 %v1843, %v1843
      %v1908 = vpack.c.bf16 %v1844, %v1844
      %v1909 = vpack.c.bf16 %v1845, %v1845
      %v1910 = vpack.c.bf16 %v1846, %v1846
      %v1911 = vpack.c.bf16 %v1847, %v1847
      %v1912 = vpack.c.bf16 %v1848, %v1848
      %v1913 = vpack.c.bf16 %v1849, %v1849
      %v1914 = vpack.c.bf16 %v1850, %v1850
      %v1915 = vpack.c.bf16 %v1851, %v1851
      %v1916 = vpack.c.bf16 %v1852, %v1852
      %v1917 = vpack.c.bf16 %v1853, %v1853
      %v1918 = vpack.c.bf16 %v1854, %v1854
      %v1919 = vpack.c.bf16 %v1855, %v1855
      %v1920 = vpack.c.bf16 %v1856, %v1856
      %v1921 = vpack.c.bf16 %v1857, %v1857
      %v1922 = vpack.c.bf16 %v1858, %v1858
      %v1923 = vpack.c.bf16 %v1859, %v1859
      %v1924 = vpack.c.bf16 %v1860, %v1860
      %v1925 = vpack.c.bf16 %v1861, %v1861
      %v1926 = vpack.c.bf16 %v1862, %v1862
      %v1927 = vpack.c.bf16 %v1863, %v1863
      %v1928 = vpack.c.bf16 %v1864, %v1864
      %v1929 = vpack.c.bf16 %v1865, %v1865
      %v1930 = vpack.c.bf16 %v1866, %v1866
      %v1931 = vpack.c.bf16 %v1867, %v1867
      %v1932 = vpack.c.bf16 %v1868, %v1868
      %v1933 = vpack.c.bf16 %v1869, %v1869
      %v1934 = vpack.c.bf16 %v1870, %v1870
      %v1935 = vpack.c.bf16 %v1871, %v1871
      %v1936 = vpack.c.bf16 %v1872, %v1872
      %v1937 = vpack.c.bf16 %v1873, %v1873
      %v1938 = vpack.c.bf16 %v1874, %v1874
      %v1939 = vpack.c.bf16 %v1875, %v1875
      %v1940 = vld [vmem:[%s409] sm:$0xf]
      %v1941 = vld [vmem:[%s409 + $0x4] sm:$0xf]
      %v1942 = vld [vmem:[%s409 + $0x8] sm:$0xf]
      %v1943 = vld [vmem:[%s409 + $0xc] sm:$0xf]
      %v1944 = vld [vmem:[%s409 + $0x10] sm:$0xf]
      %v1945 = vld [vmem:[%s409 + $0x14] sm:$0xf]
      %v1946 = vld [vmem:[%s409 + $0x18] sm:$0xf]
      %v1947 = vld [vmem:[%s409 + $0x1c] sm:$0xf]
      %v1948 = vld [vmem:[%s409 + $0x20] sm:$0xf]
      %v1949 = vld [vmem:[%s409 + $0x24] sm:$0xf]
      %v1950 = vld [vmem:[%s409 + $0x28] sm:$0xf]
      %v1951 = vld [vmem:[%s409 + $0x2c] sm:$0xf]
      %v1952 = vld [vmem:[%s409 + $0x30] sm:$0xf]
      %v1953 = vld [vmem:[%s409 + $0x34] sm:$0xf]
      %v1954 = vld [vmem:[%s409 + $0x38] sm:$0xf]
      %v1955 = vld [vmem:[%s409 + $0x3c] sm:$0xf]
      %v1956 = vld [vmem:[%s409 + $0x40] sm:$0xf]
      %v1957 = vld [vmem:[%s409 + $0x44] sm:$0xf]
      %v1958 = vld [vmem:[%s409 + $0x48] sm:$0xf]
      %v1959 = vld [vmem:[%s409 + $0x4c] sm:$0xf]
      %v1960 = vld [vmem:[%s409 + $0x50] sm:$0xf]
      %v1961 = vld [vmem:[%s409 + $0x54] sm:$0xf]
      %v1962 = vld [vmem:[%s409 + $0x58] sm:$0xf]
      %v1963 = vld [vmem:[%s409 + $0x5c] sm:$0xf]
      %v1964 = vld [vmem:[%s409 + $0x60] sm:$0xf]
      %v1965 = vld [vmem:[%s409 + $0x64] sm:$0xf]
      %v1966 = vld [vmem:[%s409 + $0x68] sm:$0xf]
      %v1967 = vld [vmem:[%s409 + $0x6c] sm:$0xf]
      %v1968 = vld [vmem:[%s409 + $0x70] sm:$0xf]
      %v1969 = vld [vmem:[%s409 + $0x74] sm:$0xf]
      %v1970 = vld [vmem:[%s409 + $0x78] sm:$0xf]
      %v1971 = vld [vmem:[%s409 + $0x7c] sm:$0xf]
      %v1972 = vld [vmem:[%s409 + $0x80] sm:$0xf]
      %v1973 = vld [vmem:[%s409 + $0x84] sm:$0xf]
      %v1974 = vld [vmem:[%s409 + $0x88] sm:$0xf]
      %v1975 = vld [vmem:[%s409 + $0x8c] sm:$0xf]
      %v1976 = vld [vmem:[%s409 + $0x90] sm:$0xf]
      %v1977 = vld [vmem:[%s409 + $0x94] sm:$0xf]
      %v1978 = vld [vmem:[%s409 + $0x98] sm:$0xf]
      %v1979 = vld [vmem:[%s409 + $0x9c] sm:$0xf]
      %v1980 = vld [vmem:[%s409 + $0xa0] sm:$0xf]
      %v1981 = vld [vmem:[%s409 + $0xa4] sm:$0xf]
      %v1982 = vld [vmem:[%s409 + $0xa8] sm:$0xf]
      %v1983 = vld [vmem:[%s409 + $0xac] sm:$0xf]
      %v1984 = vld [vmem:[%s409 + $0xb0] sm:$0xf]
      %v1985 = vld [vmem:[%s409 + $0xb4] sm:$0xf]
      %v1986 = vld [vmem:[%s409 + $0xb8] sm:$0xf]
      %v1987 = vld [vmem:[%s409 + $0xbc] sm:$0xf]
      %v1988 = vld [vmem:[%s409 + $0xc0] sm:$0xf]
      %v1989 = vld [vmem:[%s409 + $0xc4] sm:$0xf]
      %v1990 = vld [vmem:[%s409 + $0xc8] sm:$0xf]
      %v1991 = vld [vmem:[%s409 + $0xcc] sm:$0xf]
      %v1992 = vld [vmem:[%s409 + $0xd0] sm:$0xf]
      %v1993 = vld [vmem:[%s409 + $0xd4] sm:$0xf]
      %v1994 = vld [vmem:[%s409 + $0xd8] sm:$0xf]
      %v1995 = vld [vmem:[%s409 + $0xdc] sm:$0xf]
      %v1996 = vld [vmem:[%s409 + $0xe0] sm:$0xf]
      %v1997 = vld [vmem:[%s409 + $0xe4] sm:$0xf]
      %v1998 = vld [vmem:[%s409 + $0xe8] sm:$0xf]
      %v1999 = vld [vmem:[%s409 + $0xec] sm:$0xf]
      %v2000 = vld [vmem:[%s409 + $0xf0] sm:$0xf]
      %v2001 = vld [vmem:[%s409 + $0xf4] sm:$0xf]
      %v2002 = vld [vmem:[%s409 + $0xf8] sm:$0xf]
      %v2003 = vld [vmem:[%s409 + $0xfc] sm:$0xf]
      %v2036 = vunpack.c.l.b16 %v1876
      %v2037 = vunpack.c.l.b16 %v1877
      %v2038 = vunpack.c.l.b16 %v1878
      %v2039 = vunpack.c.l.b16 %v1879
      %v2040 = vunpack.c.l.b16 %v1880
      %v2041 = vunpack.c.l.b16 %v1881
      %v2042 = vunpack.c.l.b16 %v1882
      %v2043 = vunpack.c.l.b16 %v1883
      %v2044 = vunpack.c.l.b16 %v1884
      %v2045 = vunpack.c.l.b16 %v1885
      %v2046 = vunpack.c.l.b16 %v1886
      %v2047 = vunpack.c.l.b16 %v1887
      %v2048 = vunpack.c.l.b16 %v1888
      %v2049 = vunpack.c.l.b16 %v1889
      %v2050 = vunpack.c.l.b16 %v1890
      %v2051 = vunpack.c.l.b16 %v1891
      %v2052 = vunpack.c.l.b16 %v1892
      %v2053 = vunpack.c.l.b16 %v1893
      %v2054 = vunpack.c.l.b16 %v1894
      %v2055 = vunpack.c.l.b16 %v1895
      %v2056 = vunpack.c.l.b16 %v1896
      %v2057 = vunpack.c.l.b16 %v1897
      %v2058 = vunpack.c.l.b16 %v1898
      %v2059 = vunpack.c.l.b16 %v1899
      %v2060 = vunpack.c.l.b16 %v1900
      %v2061 = vunpack.c.l.b16 %v1901
      %v2062 = vunpack.c.l.b16 %v1902
      %v2063 = vunpack.c.l.b16 %v1903
      %v2064 = vunpack.c.l.b16 %v1904
      %v2065 = vunpack.c.l.b16 %v1905
      %v2066 = vunpack.c.l.b16 %v1906
      %v2067 = vunpack.c.l.b16 %v1907
      %v2068 = vpack.c.b16 %v2037, %v2036
      %v2069 = vpack.c.b16 %v2039, %v2038
      %v2070 = vpack.c.b16 %v2041, %v2040
      %v2071 = vpack.c.b16 %v2043, %v2042
      %v2072 = vpack.c.b16 %v2045, %v2044
      %v2073 = vpack.c.b16 %v2047, %v2046
      %v2074 = vpack.c.b16 %v2049, %v2048
      %v2075 = vpack.c.b16 %v2051, %v2050
      %v2076 = vpack.c.b16 %v2053, %v2052
      %v2077 = vpack.c.b16 %v2055, %v2054
      %v2078 = vpack.c.b16 %v2057, %v2056
      %v2079 = vpack.c.b16 %v2059, %v2058
      %v2080 = vpack.c.b16 %v2061, %v2060
      %v2081 = vpack.c.b16 %v2063, %v2062
      %v2082 = vpack.c.b16 %v2065, %v2064
      %v2083 = vpack.c.b16 %v2067, %v2066
      %v2084 = vunpack.c.l.b16 %v2068
      %v2085 = vunpack.c.h.b16 %v2068
      %v2086 = vunpack.c.l.b16 %v2069
      %v2087 = vunpack.c.h.b16 %v2069
      %v2088 = vunpack.c.l.b16 %v2070
      %v2089 = vunpack.c.h.b16 %v2070
      %v2090 = vunpack.c.l.b16 %v2071
      %v2091 = vunpack.c.h.b16 %v2071
      %v2092 = vunpack.c.l.b16 %v2072
      %v2093 = vunpack.c.h.b16 %v2072
      %v2094 = vunpack.c.l.b16 %v2073
      %v2095 = vunpack.c.h.b16 %v2073
      %v2096 = vunpack.c.l.b16 %v2074
      %v2097 = vunpack.c.h.b16 %v2074
      %v2098 = vunpack.c.l.b16 %v2075
      %v2099 = vunpack.c.h.b16 %v2075
      %v2100 = vunpack.c.l.b16 %v2076
      %v2101 = vunpack.c.h.b16 %v2076
      %v2102 = vunpack.c.l.b16 %v2077
      %v2103 = vunpack.c.h.b16 %v2077
      %v2104 = vunpack.c.l.b16 %v2078
      %v2105 = vunpack.c.h.b16 %v2078
      %v2106 = vunpack.c.l.b16 %v2079
      %v2107 = vunpack.c.h.b16 %v2079
      %v2108 = vunpack.c.l.b16 %v2080
      %v2109 = vunpack.c.h.b16 %v2080
      %v2110 = vunpack.c.l.b16 %v2081
      %v2111 = vunpack.c.h.b16 %v2081
      %v2112 = vunpack.c.l.b16 %v2082
      %v2113 = vunpack.c.h.b16 %v2082
      %v2114 = vunpack.c.l.b16 %v2083
      %v2115 = vunpack.c.h.b16 %v2083
      %2116 = vset.pattern.permute.xlu0 0
      %2117 = vperm.xlu0 %2116, %v2084
      %v2118 = vpop.permute.xlu0 %2117
      %2119 = vset.pattern.permute.xlu0 0
      %2120 = vperm.xlu0 %2119, %v2085
      %v2121 = vpop.permute.xlu0 %2120
      %2122 = vset.pattern.permute.xlu0 0
      %2123 = vperm.xlu0 %2122, %v2086
      %v2124 = vpop.permute.xlu0 %2123
      %2125 = vset.pattern.permute.xlu0 0
      %2126 = vperm.xlu0 %2125, %v2087
      %v2127 = vpop.permute.xlu0 %2126
      %2128 = vset.pattern.permute.xlu0 0
      %2129 = vperm.xlu0 %2128, %v2088
      %v2130 = vpop.permute.xlu0 %2129
      %2131 = vset.pattern.permute.xlu0 0
      %2132 = vperm.xlu0 %2131, %v2089
      %v2133 = vpop.permute.xlu0 %2132
      %2134 = vset.pattern.permute.xlu0 0
      %2135 = vperm.xlu0 %2134, %v2090
      %v2136 = vpop.permute.xlu0 %2135
      %2137 = vset.pattern.permute.xlu0 0
      %2138 = vperm.xlu0 %2137, %v2091
      %v2139 = vpop.permute.xlu0 %2138
      %2140 = vset.pattern.permute.xlu0 0
      %2141 = vperm.xlu0 %2140, %v2092
      %v2142 = vpop.permute.xlu0 %2141
      %2143 = vset.pattern.permute.xlu0 0
      %2144 = vperm.xlu0 %2143, %v2093
      %v2145 = vpop.permute.xlu0 %2144
      %2146 = vset.pattern.permute.xlu0 0
      %2147 = vperm.xlu0 %2146, %v2094
      %v2148 = vpop.permute.xlu0 %2147
      %2149 = vset.pattern.permute.xlu0 0
      %2150 = vperm.xlu0 %2149, %v2095
      %v2151 = vpop.permute.xlu0 %2150
      %2152 = vset.pattern.permute.xlu0 0
      %2153 = vperm.xlu0 %2152, %v2096
      %v2154 = vpop.permute.xlu0 %2153
      %2155 = vset.pattern.permute.xlu0 0
      %2156 = vperm.xlu0 %2155, %v2097
      %v2157 = vpop.permute.xlu0 %2156
      %2158 = vset.pattern.permute.xlu0 0
      %2159 = vperm.xlu0 %2158, %v2098
      %v2160 = vpop.permute.xlu0 %2159
      %2161 = vset.pattern.permute.xlu0 0
      %2162 = vperm.xlu0 %2161, %v2099
      %v2163 = vpop.permute.xlu0 %2162
      %2164 = vset.pattern.permute.xlu0 0
      %2165 = vperm.xlu0 %2164, %v2100
      %v2166 = vpop.permute.xlu0 %2165
      %2167 = vset.pattern.permute.xlu0 0
      %2168 = vperm.xlu0 %2167, %v2101
      %v2169 = vpop.permute.xlu0 %2168
      %2170 = vset.pattern.permute.xlu0 0
      %2171 = vperm.xlu0 %2170, %v2102
      %v2172 = vpop.permute.xlu0 %2171
      %2173 = vset.pattern.permute.xlu0 0
      %2174 = vperm.xlu0 %2173, %v2103
      %v2175 = vpop.permute.xlu0 %2174
      %2176 = vset.pattern.permute.xlu0 0
      %2177 = vperm.xlu0 %2176, %v2104
      %v2178 = vpop.permute.xlu0 %2177
      %2179 = vset.pattern.permute.xlu0 0
      %2180 = vperm.xlu0 %2179, %v2105
      %v2181 = vpop.permute.xlu0 %2180
      %2182 = vset.pattern.permute.xlu0 0
      %2183 = vperm.xlu0 %2182, %v2106
      %v2184 = vpop.permute.xlu0 %2183
      %2185 = vset.pattern.permute.xlu0 0
      %2186 = vperm.xlu0 %2185, %v2107
      %v2187 = vpop.permute.xlu0 %2186
      %2188 = vset.pattern.permute.xlu0 0
      %2189 = vperm.xlu0 %2188, %v2108
      %v2190 = vpop.permute.xlu0 %2189
      %2191 = vset.pattern.permute.xlu0 0
      %2192 = vperm.xlu0 %2191, %v2109
      %v2193 = vpop.permute.xlu0 %2192
      %2194 = vset.pattern.permute.xlu0 0
      %2195 = vperm.xlu0 %2194, %v2110
      %v2196 = vpop.permute.xlu0 %2195
      %2197 = vset.pattern.permute.xlu0 0
      %2198 = vperm.xlu0 %2197, %v2111
      %v2199 = vpop.permute.xlu0 %2198
      %2200 = vset.pattern.permute.xlu0 0
      %2201 = vperm.xlu0 %2200, %v2112
      %v2202 = vpop.permute.xlu0 %2201
      %2203 = vset.pattern.permute.xlu0 0
      %2204 = vperm.xlu0 %2203, %v2113
      %v2205 = vpop.permute.xlu0 %2204
      %2206 = vset.pattern.permute.xlu0 0
      %2207 = vperm.xlu0 %2206, %v2114
      %v2208 = vpop.permute.xlu0 %2207
      %2209 = vset.pattern.permute.xlu0 0
      %2210 = vperm.xlu0 %2209, %v2115
      %v2211 = vpop.permute.xlu0 %2210
      %v2212 = vperm.slane %v2118, %v1054
      %v2213 = vperm.slane %v2121, %v1056
      %v2214 = vsel %vm1058, %v2213, %v2212
      %v2215 = vperm.slane %v2124, %v1060
      %v2216 = vsel %vm1062, %v2215, %v2214
      %v2217 = vperm.slane %v2127, %v1064
      %v2218 = vsel %vm1066, %v2217, %v2216
      %v2219 = vperm.slane %v2130, %v1068
      %v2220 = vsel %vm1070, %v2219, %v2218
      %v2221 = vperm.slane %v2133, %v1072
      %v2222 = vsel %vm1074, %v2221, %v2220
      %v2223 = vperm.slane %v2136, %v1076
      %v2224 = vsel %vm1078, %v2223, %v2222
      %v2225 = vperm.slane %v2139, %v1080
      %v2226 = vsel %vm1082, %v2225, %v2224
      %v2227 = vperm.slane %v2142, %v1084
      %v2228 = vsel %vm1086, %v2227, %v2226
      %v2229 = vperm.slane %v2145, %v1088
      %v2230 = vsel %vm1090, %v2229, %v2228
      %v2231 = vperm.slane %v2148, %v1092
      %v2232 = vsel %vm1094, %v2231, %v2230
      %v2233 = vperm.slane %v2151, %v1096
      %v2234 = vsel %vm1098, %v2233, %v2232
      %v2235 = vperm.slane %v2154, %v1100
      %v2236 = vsel %vm1102, %v2235, %v2234
      %v2237 = vperm.slane %v2157, %v1104
      %v2238 = vsel %vm1106, %v2237, %v2236
      %v2239 = vperm.slane %v2160, %v1108
      %v2240 = vsel %vm1110, %v2239, %v2238
      %v2241 = vperm.slane %v2163, %v1112
      %v2242 = vsel %vm1114, %v2241, %v2240
      %v2243 = vperm.slane %v2166, %v1054
      %v2244 = vperm.slane %v2169, %v1056
      %v2245 = vsel %vm1058, %v2244, %v2243
      %v2246 = vperm.slane %v2172, %v1060
      %v2247 = vsel %vm1062, %v2246, %v2245
      %v2248 = vperm.slane %v2175, %v1064
      %v2249 = vsel %vm1066, %v2248, %v2247
      %v2250 = vperm.slane %v2178, %v1068
      %v2251 = vsel %vm1070, %v2250, %v2249
      %v2252 = vperm.slane %v2181, %v1072
      %v2253 = vsel %vm1074, %v2252, %v2251
      %v2254 = vperm.slane %v2184, %v1076
      %v2255 = vsel %vm1078, %v2254, %v2253
      %v2256 = vperm.slane %v2187, %v1080
      %v2257 = vsel %vm1082, %v2256, %v2255
      %v2258 = vperm.slane %v2190, %v1084
      %v2259 = vsel %vm1086, %v2258, %v2257
      %v2260 = vperm.slane %v2193, %v1088
      %v2261 = vsel %vm1090, %v2260, %v2259
      %v2262 = vperm.slane %v2196, %v1092
      %v2263 = vsel %vm1094, %v2262, %v2261
      %v2264 = vperm.slane %v2199, %v1096
      %v2265 = vsel %vm1098, %v2264, %v2263
      %v2266 = vperm.slane %v2202, %v1100
      %v2267 = vsel %vm1102, %v2266, %v2265
      %v2268 = vperm.slane %v2205, %v1104
      %v2269 = vsel %vm1106, %v2268, %v2267
      %v2270 = vperm.slane %v2208, %v1108
      %v2271 = vsel %vm1110, %v2270, %v2269
      %v2272 = vperm.slane %v2211, %v1112
      %v2273 = vsel %vm1114, %v2272, %v2271
      %v2274 = vpack.c.b16 %v2242, %v2242
      %v2275 = vpack.c.b16 %v2273, %v2273
      %v2310 = vunpack.c.l.b16 %v1940
      %v2311 = vunpack.c.l.b16 %v1941
      %v2312 = vunpack.c.l.b16 %v1942
      %v2313 = vunpack.c.l.b16 %v1943
      %v2314 = vunpack.c.l.b16 %v1944
      %v2315 = vunpack.c.l.b16 %v1945
      %v2316 = vunpack.c.l.b16 %v1946
      %v2317 = vunpack.c.l.b16 %v1947
      %v2318 = vunpack.c.l.b16 %v1948
      %v2319 = vunpack.c.l.b16 %v1949
      %v2320 = vunpack.c.l.b16 %v1950
      %v2321 = vunpack.c.l.b16 %v1951
      %v2322 = vunpack.c.l.b16 %v1952
      %v2323 = vunpack.c.l.b16 %v1953
      %v2324 = vunpack.c.l.b16 %v1954
      %v2325 = vunpack.c.l.b16 %v1955
      %v2326 = vunpack.c.l.b16 %v1956
      %v2327 = vunpack.c.l.b16 %v1957
      %v2328 = vunpack.c.l.b16 %v1958
      %v2329 = vunpack.c.l.b16 %v1959
      %v2330 = vunpack.c.l.b16 %v1960
      %v2331 = vunpack.c.l.b16 %v1961
      %v2332 = vunpack.c.l.b16 %v1962
      %v2333 = vunpack.c.l.b16 %v1963
      %v2334 = vunpack.c.l.b16 %v1964
      %v2335 = vunpack.c.l.b16 %v1965
      %v2336 = vunpack.c.l.b16 %v1966
      %v2337 = vunpack.c.l.b16 %v1967
      %v2338 = vunpack.c.l.b16 %v1968
      %v2339 = vunpack.c.l.b16 %v1969
      %v2340 = vunpack.c.l.b16 %v1970
      %v2341 = vunpack.c.l.b16 %v1971
      %v2342 = vpack.c.b16 %v2311, %v2310
      %v2343 = vpack.c.b16 %v2313, %v2312
      %v2344 = vpack.c.b16 %v2315, %v2314
      %v2345 = vpack.c.b16 %v2317, %v2316
      %v2346 = vpack.c.b16 %v2319, %v2318
      %v2347 = vpack.c.b16 %v2321, %v2320
      %v2348 = vpack.c.b16 %v2323, %v2322
      %v2349 = vpack.c.b16 %v2325, %v2324
      %v2350 = vpack.c.b16 %v2327, %v2326
      %v2351 = vpack.c.b16 %v2329, %v2328
      %v2352 = vpack.c.b16 %v2331, %v2330
      %v2353 = vpack.c.b16 %v2333, %v2332
      %v2354 = vpack.c.b16 %v2335, %v2334
      %v2355 = vpack.c.b16 %v2337, %v2336
      %v2356 = vpack.c.b16 %v2339, %v2338
      %v2357 = vpack.c.b16 %v2341, %v2340
      %2374 = vmatpush.bf16.msra.mxu0 %v2349
      %2375 = vmatpush.bf16.msra.mxu0 %v2348
      %2376 = vmatpush.bf16.msra.mxu0 %v2347
      %2377 = vmatpush.bf16.msra.mxu0 %v2346
      %2378 = vmatpush.bf16.msra.mxu0 %v2345
      %2379 = vmatpush.bf16.msra.mxu0 %v2344
      %2380 = vmatpush.bf16.msra.mxu0 %v2343
      %2381 = vmatpush.bf16.msra.mxu0 %v2342
      %2382 = vmatmul.bf16.gmra.mxu0 %v2274
      %v2383 = vpop.f32.mrf.mxu0
      %v2384 = vadd.f32 0.0, %v2383
      %v2385 = vpop.f32.mrf.mxu0
      %2386 = vdwg.mxu0
      %2387 = vmatpush.bf16.msra.mxu0 %v2357
      %2388 = vmatpush.bf16.msra.mxu0 %v2356
      %2389 = vmatpush.bf16.msra.mxu0 %v2355
      %2390 = vmatpush.bf16.msra.mxu0 %v2354
      %2391 = vmatpush.bf16.msra.mxu0 %v2353
      %2392 = vmatpush.bf16.msra.mxu0 %v2352
      %2393 = vmatpush.bf16.msra.mxu0 %v2351
      %2394 = vmatpush.bf16.msra.mxu0 %v2350
      %2395 = vmatmul.bf16.gmra.mxu0 %v2275
      %v2396 = vpop.f32.mrf.mxu0
      %v2397 = vadd.f32 %v2384, %v2396
      %v2398 = vpop.f32.mrf.mxu0
      %2399 = vdwg.mxu0
      %v2432 = vunpack.c.l.b16 %v1908
      %v2433 = vunpack.c.l.b16 %v1909
      %v2434 = vunpack.c.l.b16 %v1910
      %v2435 = vunpack.c.l.b16 %v1911
      %v2436 = vunpack.c.l.b16 %v1912
      %v2437 = vunpack.c.l.b16 %v1913
      %v2438 = vunpack.c.l.b16 %v1914
      %v2439 = vunpack.c.l.b16 %v1915
      %v2440 = vunpack.c.l.b16 %v1916
      %v2441 = vunpack.c.l.b16 %v1917
      %v2442 = vunpack.c.l.b16 %v1918
      %v2443 = vunpack.c.l.b16 %v1919
      %v2444 = vunpack.c.l.b16 %v1920
      %v2445 = vunpack.c.l.b16 %v1921
      %v2446 = vunpack.c.l.b16 %v1922
      %v2447 = vunpack.c.l.b16 %v1923
      %v2448 = vunpack.c.l.b16 %v1924
      %v2449 = vunpack.c.l.b16 %v1925
      %v2450 = vunpack.c.l.b16 %v1926
      %v2451 = vunpack.c.l.b16 %v1927
      %v2452 = vunpack.c.l.b16 %v1928
      %v2453 = vunpack.c.l.b16 %v1929
      %v2454 = vunpack.c.l.b16 %v1930
      %v2455 = vunpack.c.l.b16 %v1931
      %v2456 = vunpack.c.l.b16 %v1932
      %v2457 = vunpack.c.l.b16 %v1933
      %v2458 = vunpack.c.l.b16 %v1934
      %v2459 = vunpack.c.l.b16 %v1935
      %v2460 = vunpack.c.l.b16 %v1936
      %v2461 = vunpack.c.l.b16 %v1937
      %v2462 = vunpack.c.l.b16 %v1938
      %v2463 = vunpack.c.l.b16 %v1939
      %v2464 = vpack.c.b16 %v2433, %v2432
      %v2465 = vpack.c.b16 %v2435, %v2434
      %v2466 = vpack.c.b16 %v2437, %v2436
      %v2467 = vpack.c.b16 %v2439, %v2438
      %v2468 = vpack.c.b16 %v2441, %v2440
      %v2469 = vpack.c.b16 %v2443, %v2442
      %v2470 = vpack.c.b16 %v2445, %v2444
      %v2471 = vpack.c.b16 %v2447, %v2446
      %v2472 = vpack.c.b16 %v2449, %v2448
      %v2473 = vpack.c.b16 %v2451, %v2450
      %v2474 = vpack.c.b16 %v2453, %v2452
      %v2475 = vpack.c.b16 %v2455, %v2454
      %v2476 = vpack.c.b16 %v2457, %v2456
      %v2477 = vpack.c.b16 %v2459, %v2458
      %v2478 = vpack.c.b16 %v2461, %v2460
      %v2479 = vpack.c.b16 %v2463, %v2462
      %v2480 = vunpack.c.l.b16 %v2464
      %v2481 = vunpack.c.h.b16 %v2464
      %v2482 = vunpack.c.l.b16 %v2465
      %v2483 = vunpack.c.h.b16 %v2465
      %v2484 = vunpack.c.l.b16 %v2466
      %v2485 = vunpack.c.h.b16 %v2466
      %v2486 = vunpack.c.l.b16 %v2467
      %v2487 = vunpack.c.h.b16 %v2467
      %v2488 = vunpack.c.l.b16 %v2468
      %v2489 = vunpack.c.h.b16 %v2468
      %v2490 = vunpack.c.l.b16 %v2469
      %v2491 = vunpack.c.h.b16 %v2469
      %v2492 = vunpack.c.l.b16 %v2470
      %v2493 = vunpack.c.h.b16 %v2470
      %v2494 = vunpack.c.l.b16 %v2471
      %v2495 = vunpack.c.h.b16 %v2471
      %v2496 = vunpack.c.l.b16 %v2472
      %v2497 = vunpack.c.h.b16 %v2472
      %v2498 = vunpack.c.l.b16 %v2473
      %v2499 = vunpack.c.h.b16 %v2473
      %v2500 = vunpack.c.l.b16 %v2474
      %v2501 = vunpack.c.h.b16 %v2474
      %v2502 = vunpack.c.l.b16 %v2475
      %v2503 = vunpack.c.h.b16 %v2475
      %v2504 = vunpack.c.l.b16 %v2476
      %v2505 = vunpack.c.h.b16 %v2476
      %v2506 = vunpack.c.l.b16 %v2477
      %v2507 = vunpack.c.h.b16 %v2477
      %v2508 = vunpack.c.l.b16 %v2478
      %v2509 = vunpack.c.h.b16 %v2478
      %v2510 = vunpack.c.l.b16 %v2479
      %v2511 = vunpack.c.h.b16 %v2479
      %2512 = vset.pattern.permute.xlu0 0
      %2513 = vperm.xlu0 %2512, %v2480
      %v2514 = vpop.permute.xlu0 %2513
      %2515 = vset.pattern.permute.xlu0 0
      %2516 = vperm.xlu0 %2515, %v2481
      %v2517 = vpop.permute.xlu0 %2516
      %2518 = vset.pattern.permute.xlu0 0
      %2519 = vperm.xlu0 %2518, %v2482
      %v2520 = vpop.permute.xlu0 %2519
      %2521 = vset.pattern.permute.xlu0 0
      %2522 = vperm.xlu0 %2521, %v2483
      %v2523 = vpop.permute.xlu0 %2522
      %2524 = vset.pattern.permute.xlu0 0
      %2525 = vperm.xlu0 %2524, %v2484
      %v2526 = vpop.permute.xlu0 %2525
      %2527 = vset.pattern.permute.xlu0 0
      %2528 = vperm.xlu0 %2527, %v2485
      %v2529 = vpop.permute.xlu0 %2528
      %2530 = vset.pattern.permute.xlu0 0
      %2531 = vperm.xlu0 %2530, %v2486
      %v2532 = vpop.permute.xlu0 %2531
      %2533 = vset.pattern.permute.xlu0 0
      %2534 = vperm.xlu0 %2533, %v2487
      %v2535 = vpop.permute.xlu0 %2534
      %2536 = vset.pattern.permute.xlu0 0
      %2537 = vperm.xlu0 %2536, %v2488
      %v2538 = vpop.permute.xlu0 %2537
      %2539 = vset.pattern.permute.xlu0 0
      %2540 = vperm.xlu0 %2539, %v2489
      %v2541 = vpop.permute.xlu0 %2540
      %2542 = vset.pattern.permute.xlu0 0
      %2543 = vperm.xlu0 %2542, %v2490
      %v2544 = vpop.permute.xlu0 %2543
      %2545 = vset.pattern.permute.xlu0 0
      %2546 = vperm.xlu0 %2545, %v2491
      %v2547 = vpop.permute.xlu0 %2546
      %2548 = vset.pattern.permute.xlu0 0
      %2549 = vperm.xlu0 %2548, %v2492
      %v2550 = vpop.permute.xlu0 %2549
      %2551 = vset.pattern.permute.xlu0 0
      %2552 = vperm.xlu0 %2551, %v2493
      %v2553 = vpop.permute.xlu0 %2552
      %2554 = vset.pattern.permute.xlu0 0
      %2555 = vperm.xlu0 %2554, %v2494
      %v2556 = vpop.permute.xlu0 %2555
      %2557 = vset.pattern.permute.xlu0 0
      %2558 = vperm.xlu0 %2557, %v2495
      %v2559 = vpop.permute.xlu0 %2558
      %2560 = vset.pattern.permute.xlu0 0
      %2561 = vperm.xlu0 %2560, %v2496
      %v2562 = vpop.permute.xlu0 %2561
      %2563 = vset.pattern.permute.xlu0 0
      %2564 = vperm.xlu0 %2563, %v2497
      %v2565 = vpop.permute.xlu0 %2564
      %2566 = vset.pattern.permute.xlu0 0
      %2567 = vperm.xlu0 %2566, %v2498
      %v2568 = vpop.permute.xlu0 %2567
      %2569 = vset.pattern.permute.xlu0 0
      %2570 = vperm.xlu0 %2569, %v2499
      %v2571 = vpop.permute.xlu0 %2570
      %2572 = vset.pattern.permute.xlu0 0
      %2573 = vperm.xlu0 %2572, %v2500
      %v2574 = vpop.permute.xlu0 %2573
      %2575 = vset.pattern.permute.xlu0 0
      %2576 = vperm.xlu0 %2575, %v2501
      %v2577 = vpop.permute.xlu0 %2576
      %2578 = vset.pattern.permute.xlu0 0
      %2579 = vperm.xlu0 %2578, %v2502
      %v2580 = vpop.permute.xlu0 %2579
      %2581 = vset.pattern.permute.xlu0 0
      %2582 = vperm.xlu0 %2581, %v2503
      %v2583 = vpop.permute.xlu0 %2582
      %2584 = vset.pattern.permute.xlu0 0
      %2585 = vperm.xlu0 %2584, %v2504
      %v2586 = vpop.permute.xlu0 %2585
      %2587 = vset.pattern.permute.xlu0 0
      %2588 = vperm.xlu0 %2587, %v2505
      %v2589 = vpop.permute.xlu0 %2588
      %2590 = vset.pattern.permute.xlu0 0
      %2591 = vperm.xlu0 %2590, %v2506
      %v2592 = vpop.permute.xlu0 %2591
      %2593 = vset.pattern.permute.xlu0 0
      %2594 = vperm.xlu0 %2593, %v2507
      %v2595 = vpop.permute.xlu0 %2594
      %2596 = vset.pattern.permute.xlu0 0
      %2597 = vperm.xlu0 %2596, %v2508
      %v2598 = vpop.permute.xlu0 %2597
      %2599 = vset.pattern.permute.xlu0 0
      %2600 = vperm.xlu0 %2599, %v2509
      %v2601 = vpop.permute.xlu0 %2600
      %2602 = vset.pattern.permute.xlu0 0
      %2603 = vperm.xlu0 %2602, %v2510
      %v2604 = vpop.permute.xlu0 %2603
      %2605 = vset.pattern.permute.xlu0 0
      %2606 = vperm.xlu0 %2605, %v2511
      %v2607 = vpop.permute.xlu0 %2606
      %v2608 = vperm.slane %v2514, %v1054
      %v2609 = vperm.slane %v2517, %v1056
      %v2610 = vsel %vm1058, %v2609, %v2608
      %v2611 = vperm.slane %v2520, %v1060
      %v2612 = vsel %vm1062, %v2611, %v2610
      %v2613 = vperm.slane %v2523, %v1064
      %v2614 = vsel %vm1066, %v2613, %v2612
      %v2615 = vperm.slane %v2526, %v1068
      %v2616 = vsel %vm1070, %v2615, %v2614
      %v2617 = vperm.slane %v2529, %v1072
      %v2618 = vsel %vm1074, %v2617, %v2616
      %v2619 = vperm.slane %v2532, %v1076
      %v2620 = vsel %vm1078, %v2619, %v2618
      %v2621 = vperm.slane %v2535, %v1080
      %v2622 = vsel %vm1082, %v2621, %v2620
      %v2623 = vperm.slane %v2538, %v1084
      %v2624 = vsel %vm1086, %v2623, %v2622
      %v2625 = vperm.slane %v2541, %v1088
      %v2626 = vsel %vm1090, %v2625, %v2624
      %v2627 = vperm.slane %v2544, %v1092
      %v2628 = vsel %vm1094, %v2627, %v2626
      %v2629 = vperm.slane %v2547, %v1096
      %v2630 = vsel %vm1098, %v2629, %v2628
      %v2631 = vperm.slane %v2550, %v1100
      %v2632 = vsel %vm1102, %v2631, %v2630
      %v2633 = vperm.slane %v2553, %v1104
      %v2634 = vsel %vm1106, %v2633, %v2632
      %v2635 = vperm.slane %v2556, %v1108
      %v2636 = vsel %vm1110, %v2635, %v2634
      %v2637 = vperm.slane %v2559, %v1112
      %v2638 = vsel %vm1114, %v2637, %v2636
      %v2639 = vperm.slane %v2562, %v1054
      %v2640 = vperm.slane %v2565, %v1056
      %v2641 = vsel %vm1058, %v2640, %v2639
      %v2642 = vperm.slane %v2568, %v1060
      %v2643 = vsel %vm1062, %v2642, %v2641
      %v2644 = vperm.slane %v2571, %v1064
      %v2645 = vsel %vm1066, %v2644, %v2643
      %v2646 = vperm.slane %v2574, %v1068
      %v2647 = vsel %vm1070, %v2646, %v2645
      %v2648 = vperm.slane %v2577, %v1072
      %v2649 = vsel %vm1074, %v2648, %v2647
      %v2650 = vperm.slane %v2580, %v1076
      %v2651 = vsel %vm1078, %v2650, %v2649
      %v2652 = vperm.slane %v2583, %v1080
      %v2653 = vsel %vm1082, %v2652, %v2651
      %v2654 = vperm.slane %v2586, %v1084
      %v2655 = vsel %vm1086, %v2654, %v2653
      %v2656 = vperm.slane %v2589, %v1088
      %v2657 = vsel %vm1090, %v2656, %v2655
      %v2658 = vperm.slane %v2592, %v1092
      %v2659 = vsel %vm1094, %v2658, %v2657
      %v2660 = vperm.slane %v2595, %v1096
      %v2661 = vsel %vm1098, %v2660, %v2659
      %v2662 = vperm.slane %v2598, %v1100
      %v2663 = vsel %vm1102, %v2662, %v2661
      %v2664 = vperm.slane %v2601, %v1104
      %v2665 = vsel %vm1106, %v2664, %v2663
      %v2666 = vperm.slane %v2604, %v1108
      %v2667 = vsel %vm1110, %v2666, %v2665
      %v2668 = vperm.slane %v2607, %v1112
      %v2669 = vsel %vm1114, %v2668, %v2667
      %v2670 = vpack.c.b16 %v2638, %v2638
      %v2671 = vpack.c.b16 %v2669, %v2669
      %v2706 = vunpack.c.l.b16 %v1972
      %v2707 = vunpack.c.l.b16 %v1973
      %v2708 = vunpack.c.l.b16 %v1974
      %v2709 = vunpack.c.l.b16 %v1975
      %v2710 = vunpack.c.l.b16 %v1976
      %v2711 = vunpack.c.l.b16 %v1977
      %v2712 = vunpack.c.l.b16 %v1978
      %v2713 = vunpack.c.l.b16 %v1979
      %v2714 = vunpack.c.l.b16 %v1980
      %v2715 = vunpack.c.l.b16 %v1981
      %v2716 = vunpack.c.l.b16 %v1982
      %v2717 = vunpack.c.l.b16 %v1983
      %v2718 = vunpack.c.l.b16 %v1984
      %v2719 = vunpack.c.l.b16 %v1985
      %v2720 = vunpack.c.l.b16 %v1986
      %v2721 = vunpack.c.l.b16 %v1987
      %v2722 = vunpack.c.l.b16 %v1988
      %v2723 = vunpack.c.l.b16 %v1989
      %v2724 = vunpack.c.l.b16 %v1990
      %v2725 = vunpack.c.l.b16 %v1991
      %v2726 = vunpack.c.l.b16 %v1992
      %v2727 = vunpack.c.l.b16 %v1993
      %v2728 = vunpack.c.l.b16 %v1994
      %v2729 = vunpack.c.l.b16 %v1995
      %v2730 = vunpack.c.l.b16 %v1996
      %v2731 = vunpack.c.l.b16 %v1997
      %v2732 = vunpack.c.l.b16 %v1998
      %v2733 = vunpack.c.l.b16 %v1999
      %v2734 = vunpack.c.l.b16 %v2000
      %v2735 = vunpack.c.l.b16 %v2001
      %v2736 = vunpack.c.l.b16 %v2002
      %v2737 = vunpack.c.l.b16 %v2003
      %v2738 = vpack.c.b16 %v2707, %v2706
      %v2739 = vpack.c.b16 %v2709, %v2708
      %v2740 = vpack.c.b16 %v2711, %v2710
      %v2741 = vpack.c.b16 %v2713, %v2712
      %v2742 = vpack.c.b16 %v2715, %v2714
      %v2743 = vpack.c.b16 %v2717, %v2716
      %v2744 = vpack.c.b16 %v2719, %v2718
      %v2745 = vpack.c.b16 %v2721, %v2720
      %v2746 = vpack.c.b16 %v2723, %v2722
      %v2747 = vpack.c.b16 %v2725, %v2724
      %v2748 = vpack.c.b16 %v2727, %v2726
      %v2749 = vpack.c.b16 %v2729, %v2728
      %v2750 = vpack.c.b16 %v2731, %v2730
      %v2751 = vpack.c.b16 %v2733, %v2732
      %v2752 = vpack.c.b16 %v2735, %v2734
      %v2753 = vpack.c.b16 %v2737, %v2736
      %2770 = vmatpush.bf16.msra.mxu0 %v2745
      %2771 = vmatpush.bf16.msra.mxu0 %v2744
      %2772 = vmatpush.bf16.msra.mxu0 %v2743
      %2773 = vmatpush.bf16.msra.mxu0 %v2742
      %2774 = vmatpush.bf16.msra.mxu0 %v2741
      %2775 = vmatpush.bf16.msra.mxu0 %v2740
      %2776 = vmatpush.bf16.msra.mxu0 %v2739
      %2777 = vmatpush.bf16.msra.mxu0 %v2738
      %2778 = vmatmul.bf16.gmra.mxu0 %v2670
      %v2779 = vpop.f32.mrf.mxu0
      %v2780 = vadd.f32 0.0, %v2779
      %v2781 = vpop.f32.mrf.mxu0
      %2782 = vdwg.mxu0
      %2783 = vmatpush.bf16.msra.mxu0 %v2753
      %2784 = vmatpush.bf16.msra.mxu0 %v2752
      %2785 = vmatpush.bf16.msra.mxu0 %v2751
      %2786 = vmatpush.bf16.msra.mxu0 %v2750
      %2787 = vmatpush.bf16.msra.mxu0 %v2749
      %2788 = vmatpush.bf16.msra.mxu0 %v2748
      %2789 = vmatpush.bf16.msra.mxu0 %v2747
      %2790 = vmatpush.bf16.msra.mxu0 %v2746
      %2791 = vmatmul.bf16.gmra.mxu0 %v2671
      %v2792 = vpop.f32.mrf.mxu0
      %v2793 = vadd.f32 %v2780, %v2792
      %v2794 = vpop.f32.mrf.mxu0
      %2795 = vdwg.mxu0
      %v2796 = vld [vmem:[%s399] sm:$0x3]
      %v2797 = vpack.c.bf16 %v2397, %v2397
      %v2798 = vpack.c.bf16 %v2793, %v2793
      %v2799 = vld [vmem:[%s6] sm:$0xf]
      %v2800 = vld [vmem:[%s6 + $0x4] sm:$0xf]
      %v2801 = vld [vmem:[%s6 + $0x8] sm:$0xf]
      %v2802 = vld [vmem:[%s6 + $0xc] sm:$0xf]
      %v2805 = vunpack.c.l.b16 %v2797
      %v2806 = vunpack.c.l.b16 %v2798
      %v2807 = vrot.slane %v2806, 7
      %v2808 = vsel %vm1209, %v2807, %v2805
      %v2809 = vpack.c.b16 %v2808, %v2808
      %v2814 = vunpack.c.l.b16 %v2799
      %v2815 = vunpack.c.l.b16 %v2800
      %v2816 = vunpack.c.l.b16 %v2801
      %v2817 = vunpack.c.l.b16 %v2802
      %v2818 = vpack.c.b16 %v2815, %v2814
      %v2819 = vpack.c.b16 %v2817, %v2816
      %v2823 = vsel %vm450, %v2809, 0
      %2825 = vmatpush.bf16.msra.mxu0 0
      %2826 = vmatpush.bf16.msra.mxu0 0
      %2827 = vmatpush.bf16.msra.mxu0 0
      %2828 = vmatpush.bf16.msra.mxu0 0
      %2829 = vmatpush.bf16.msra.mxu0 0
      %2830 = vmatpush.bf16.msra.mxu0 0
      %2831 = vmatpush.bf16.msra.mxu0 %v2819
      %2832 = vmatpush.bf16.msra.mxu0 %v2818
      %2833 = vmatmul.bf16.gmra.mxu0 %v2823
      %v2834 = vpop.f32.mrf.mxu0
      %v2835 = vadd.f32 0.0, %v2834
      %v2836 = vpop.f32.mrf.mxu0
      %2837 = vdwg.mxu0
      %v2838 = vadd.f32 %v2796, %v2835
      %v2839 = vld [vmem:[%s8] sm:$0x1]
      %v2841 = vperm.slane %v2839, 0
      %v2843 = vadd.f32 %v2838, %v2841
      %v2844 = vld [vmem:[%s7] sm:$0xf]
      %v2845 = vld [vmem:[%s7 + $0x4] sm:$0xf]
      %v2846 = vld [vmem:[%s7 + $0x8] sm:$0xf]
      %v2847 = vld [vmem:[%s7 + $0xc] sm:$0xf]
      %v2852 = vunpack.c.l.b16 %v2844
      %v2853 = vunpack.c.l.b16 %v2845
      %v2854 = vunpack.c.l.b16 %v2846
      %v2855 = vunpack.c.l.b16 %v2847
      %v2856 = vpack.c.b16 %v2853, %v2852
      %v2857 = vpack.c.b16 %v2855, %v2854
      %2860 = vmatpush.bf16.msra.mxu0 0
      %2861 = vmatpush.bf16.msra.mxu0 0
      %2862 = vmatpush.bf16.msra.mxu0 0
      %2863 = vmatpush.bf16.msra.mxu0 0
      %2864 = vmatpush.bf16.msra.mxu0 0
      %2865 = vmatpush.bf16.msra.mxu0 0
      %2866 = vmatpush.bf16.msra.mxu0 %v2857
      %2867 = vmatpush.bf16.msra.mxu0 %v2856
      %2868 = vmatmul.bf16.gmra.mxu0 %v452
      %v2869 = vpop.f32.mrf.mxu0
      %v2870 = vadd.f32 0.0, %v2869
      %v2871 = vpop.f32.mrf.mxu0
      %2872 = vdwg.mxu0
      %v2873 = vadd.f32 %v2843, %v2870
      %v2874 = vxor.u32 %v2873, 2147483648
      %v2875 = vmul.f32 %v2874, 1.442695
      %v2876 = vpow.pop %v2875
      %v2877 = vadd.f32 %v2876, 1.0
      %v2878 = vrcp.pop %v2877
      %v2879 = vmul.f32 %v2877, %v2878
      %v2880 = vsub.f32 1.0, %v2879
      %v2881 = vmul.f32 %v2878, %v2880
      %v2882 = vadd.f32 %v2878, %v2881
      %vm2883 = vweird.f32 %v2877
      %vm2884 = vweird.f32 %v2878
      %vm2885 = vmor %vm2883, %vm2884
      %v2886 = vsel %vm2885, %v2878, %v2882
      %v2887 = vand.u32 2147483647, %v2877
      %vm2888 = vcmp.eq.f32.partialorder %v2887, 8.507059e+37
      %v2889 = vand.u32 %v2877, 2147483648
      %v2890 = vor.u32 1.1754944e-38, %v2889
      %v2891 = vsel %vm2888, %v2890, %v2886
      %v2892 = vmul.f32 1.0, %v2891
      %2894 = vrot.lane.b32.xlu0 %v2870, 96
      %v2895 = vpop.permute.xlu0 %2894
      %v2897 = vmul.f32 %v2892, %v2895
      %2899 = vrot.lane.b32.xlu0 %v2897, 32
      %v2900 = vpop.permute.xlu0 %2899
      %v2902 = vadd.f32 %v2843, %v2900
      %v2903 = vtanh.pop %v2902
      %v2904 = vsub.f32 1.0, %v2892
      %2906 = vrot.lane.b32.xlu0 %v2903, 64
      %v2907 = vpop.permute.xlu0 %2906
      %v2909 = vmul.f32 %v2904, %v2907
      %v2910 = vmul.f32 %v2892, %v432
      %v2911 = vadd.f32 %v2909, %v2910
      %vm2912 = vcmask 254976
      %2913 = vst.msk [vmem:[#allocation2] sm:$0x3] %vm2912, %v2911
      %v2914 = vpack.c.bf16 %v2911, %v2911
      %vm2915 = vcmask 253952
      %2916 = vst.msk [vmem:[%s423] sm:$0x1] %vm2915, %v2914
      %p2917 = scmp.lt.s32.totalorder %s25, 6
      %s2918 = scalar_select %p2917, %s25, 6
      %p2919 = scmp.lt.s32.totalorder %s24, 0
      %s2920 = scalar_select %p2919, %s24, 0
      %s2921 = sadd.s32 %s2920, %s2918
      %s2922 = scalar_lea.vmem %s9, %s2921
      // Predicated region
      $region61: #{cnn_to_rnn_forward.6} parent=55 // pred_check
        %p2923 = pneg %p263
      $region62: #{cnn_to_rnn_forward.6} parent=55 // pred_check_branch
        %2925 = sbr.rel (%p2923) target = $region64
      $region63: #{cnn_to_rnn_forward.6} parent=55 // pred_region
        _
      $region64: #{cnn_to_rnn_forward.6} parent=55 // pred_fallthru
        _
    $region56: #{cnn_to_rnn_forward.6} parent=5 // pred_fallthru
      _
    %p2926 = scmp.le.s32.totalorder 2, %s15
    // Predicated region
    $region65: #{cnn_to_rnn_forward.6} parent=5 // pred_check
      %p2927 = pneg %p2926
    $region66: #{cnn_to_rnn_forward.6} parent=5 // pred_check_branch
      %2929 = sbr.rel (%p2927) target = $region68
    $region67: #{cnn_to_rnn_forward.6} parent=5 // pred_region
      %s2930 = ssub.s32 %s15, 2
      // Predicated region
      $region69: #{cnn_to_rnn_forward.6} parent=67 // pred_check
        %p2931 = pneg %p269
      $region70: #{cnn_to_rnn_forward.6} parent=67 // pred_check_branch
        %2933 = sbr.rel (%p2931) target = $region72
      $region71: #{cnn_to_rnn_forward.6} parent=67 // pred_region
        %p2934 = scmp.lt.s32.totalorder %s27, 6
        %s2935 = scalar_select %p2934, %s27, 6
        %p2936 = scmp.lt.s32.totalorder %s26, 0
        %s2937 = scalar_select %p2936, %s26, 0
        %s2938 = sadd.s32 %s2937, %s2935
        %s2939 = scalar_lea.vmem %s9, %s2938
      $region72: #{cnn_to_rnn_forward.6} parent=67 // pred_fallthru
        _
    $region68: #{cnn_to_rnn_forward.6} parent=5 // pred_fallthru
      _
  $region6: #{cnn_to_rnn_forward.6} parent=0 // loop_footer
    %s19 = sadd.s32 1, %s15
  $region7: #{cnn_to_rnn_forward.6} parent=0 // loop_footer_branch
    %14 = sbr.rel target = $region3
  $region8: #{cnn_to_rnn_forward.6} parent=0 // loop_exit
    _

</llo_original>
